<compile_context>
chip_gen: v5e
topology: v5e:2x2
jax: 0.10.0
libtpu: 0.0.40
codegen_flags: <defaults>
</compile_context>

<pallas_src>
import math

import numpy as np
import jax
import jax.numpy as jnp
from jax.experimental import pallas as pl
from jax.experimental.pallas import tpu as pltpu


def _sumpool2x2(t):
    """Sum over non-overlapping 2x2 windows of a (H, W, C) array."""
    H, W, C = t.shape
    a = t.reshape(H, W // 2, 2, C)            # split W -> (H, Wp, 2, C)
    a = a[:, :, 0, :] + a[:, :, 1, :]         # (H, Wp, C)
    b = a.reshape(H // 2, 2, W // 2, C)       # split H (leading dim, free)
    return b[:, 0] + b[:, 1]                  # (Hp, Wp, C)


def _conv3x3(pad_ref, w_ref, H, W, Cin):
    """3x3 conv over a zero-padded (H+2, W+2, Cin) scratch.

    w_ref is (3, 3*Cin, Cout) bf16 with rows ordered (dx, ci); the three dx
    taps of each kernel row are fused into one K=3*Cin bf16 matmul
    (better MXU cadence than 9 tiny-K dots), accumulated in f32."""
    padv = pad_ref[...]                                    # (H+2, W+2, Cin) f32
    Cout = w_ref.shape[2]
    acc = jnp.zeros((H * W, Cout), jnp.float32)
    for dy in range(3):                                    # static unroll
        band = padv[dy:dy + H]                             # (H, W+2, Cin)
        patches = jnp.concatenate(
            [band[:, 0:W, :], band[:, 1:W + 1, :], band[:, 2:W + 2, :]],
            axis=-1)                                       # (H, W, 3*Cin)
        patches = patches.reshape(H * W, 3 * Cin).astype(jnp.bfloat16)
        acc = acc + jnp.dot(patches, w_ref[dy],
                            preferred_element_type=jnp.float32)
    return acc                                             # (H*W, Cout) f32


def _disc_block_kernel(x_ref, w1_ref, b1_ref, w2_ref, b2_ref,
                       wres_ref, bres_ref, o_ref, pad_ref):
    H, W, Cin = x_ref.shape[1], x_ref.shape[2], x_ref.shape[3]
    Cout = o_ref.shape[3]
    Hp, Wp = H // 2, W // 2

    x = x_ref[0]                                           # (H, W, Cin) f32

    # ---- residual branch: AvgPool2d(2,2) -> equalized 1x1 conv.
    # (The 0.25 pool factor, 1/sqrt(Cin) and the final 1/sqrt(2) are folded
    #  into wres/bres host-side, so this is a plain sum-pool + bf16 matmul.)
    px = _sumpool2x2(x).reshape(Hp * Wp, Cin).astype(jnp.bfloat16)
    residual = jnp.dot(px, wres_ref[...],
                       preferred_element_type=jnp.float32) + bres_ref[...]

    # ---- shared padded scratch: zero only the 1-pixel border strips.
    # (Done every step rather than under pl.when(program_id==0) so the kernel
    #  stays correct when the "parallel" batch axis is sharded across
    #  TensorCores, each of which gets its own scratch.)
    pad_ref[0:1, :, :] = jnp.zeros((1, W + 2, Cin), jnp.float32)
    pad_ref[H + 1:H + 2, :, :] = jnp.zeros((1, W + 2, Cin), jnp.float32)
    pad_ref[:, 0:1, :] = jnp.zeros((H + 2, 1, Cin), jnp.float32)
    pad_ref[:, W + 1:W + 2, :] = jnp.zeros((H + 2, 1, Cin), jnp.float32)

    # ---- main branch: equalized conv3x3(pad=1) -> LeakyReLU(0.2) ----
    pad_ref[1:H + 1, 1:W + 1, :] = x
    y1 = _conv3x3(pad_ref, w1_ref, H, W, Cin) + b1_ref[...]
    y1 = jnp.where(y1 > 0, y1, 0.2 * y1)                   # (H*W, Cin)

    # ---- conv3x3(pad=1) -> LeakyReLU(0.2); reuse the same pad scratch ----
    pad_ref[1:H + 1, 1:W + 1, :] = y1.reshape(H, W, Cin)
    y2 = _conv3x3(pad_ref, w2_ref, H, W, Cin) + b2_ref[...]
    y2 = jnp.where(y2 > 0, y2, 0.2 * y2)                   # (H*W, Cout)

    # ---- downsample main branch and combine with residual.
    # (0.25 * 1/sqrt(2) was folded into w2/b2 before the LeakyReLU — legal
    #  since LeakyReLU is positively homogeneous — so only adds remain.)
    py = _sumpool2x2(y2.reshape(H, W, Cout))               # (Hp, Wp, Cout)
    o_ref[0] = (py + residual.reshape(Hp, Wp, Cout)).astype(o_ref.dtype)


def discriminator_block(x_nhwc, params):
    """x_nhwc: (B, H, W, Cin) float32 -> (B, H//2, W//2, Cout) float32."""
    B, H, W, Cin = x_nhwc.shape
    assert H % 2 == 0 and W % 2 == 0, "spatial dims must be even"
    w1, b1 = params["w1"], params["b1"]          # (3,3,Cin,Cin) HWIO, (1,Cin)
    w2, b2 = params["w2"], params["b2"]          # (3,3,Cin,Cout),  (1,Cout)
    wres, bres = params["wres"], params["bres"]  # (Cin,Cout),      (1,Cout)
    Cout = w2.shape[-1]
    Hp, Wp = H // 2, W // 2

    c1 = 1.0 / math.sqrt(Cin * 9)      # EqualizedWeight scale, conv1
    c2 = 1.0 / math.sqrt(Cin * 9)      # EqualizedWeight scale, conv2
    cres = 1.0 / math.sqrt(Cin)        # EqualizedWeight scale, 1x1 conv
    scale = 1.0 / math.sqrt(2.0)       # final residual-sum scale
    pool = 0.25                        # AvgPool2d(2,2) normalization

    # Fold every scalar into the (bf16) weights / (f32) biases host-side.
    # Weight rows are reshaped to (ky, kx*Cin + ci, o) so the kernel can do
    # one K=3*Cin matmul per ky row.
    w1r = (w1 * c1).reshape(3, 3 * Cin, Cin).astype(jnp.bfloat16)
    b1f = b1.astype(jnp.float32)
    w2r = (w2 * (c2 * pool * scale)).reshape(3, 3 * Cin, Cout).astype(jnp.bfloat16)
    b2f = (b2 * (pool * scale)).astype(jnp.float32)
    wresr = (wres * (cres * pool * scale)).astype(jnp.bfloat16)
    bresf = (bres * scale).astype(jnp.float32)

    def full(shape):
        n = len(shape)
        return pl.BlockSpec(shape, lambda b, _n=n: (0,) * _n)

    return pl.pallas_call(
        _disc_block_kernel,
        out_shape=jax.ShapeDtypeStruct((B, Hp, Wp, Cout), jnp.float32),
        grid=(B,),
        in_specs=[
            pl.BlockSpec((1, H, W, Cin), lambda b: (b, 0, 0, 0)),   # x
            full((3, 3 * Cin, Cin)),                                # w1
            full((1, Cin)),                                         # b1
            full((3, 3 * Cin, Cout)),                               # w2
            full((1, Cout)),                                        # b2
            full((Cin, Cout)),                                      # wres (1x1, IO)
            full((1, Cout)),                                        # bres
        ],
        out_specs=pl.BlockSpec((1, Hp, Wp, Cout), lambda b: (b, 0, 0, 0)),
        scratch_shapes=[
            pltpu.VMEM((H + 2, W + 2, Cin), jnp.float32),  # shared padded buffer
        ],
        compiler_params=pltpu.CompilerParams(
            dimension_semantics=("parallel",),
            vmem_limit_bytes=64 * 1024 * 1024),
    )(x_nhwc, w1r, b1f, w2r, b2f, wresr, bresf)


def _ref_forward_nchw(x, params):
    """Pure-JAX NCHW reference matching the PyTorch module semantics (f32)."""
    Cin = x.shape[1]

    def conv(x, w_hwio, bias, c, pad):
        w = jnp.transpose(w_hwio, (3, 2, 0, 1)) * c   # OIHW, equalized scale
        y = jax.lax.conv_general_dilated(
            x, w, (1, 1), [(pad, pad), (pad, pad)],
            dimension_numbers=("NCHW", "OIHW", "NCHW"))
        return y + bias.reshape(1, -1, 1, 1)

    def avgpool(x):
        N, C, H, W = x.shape
        return x.reshape(N, C, H // 2, 2, W // 2, 2).mean(axis=(3, 5))

    def lrelu(x):
        return jnp.where(x > 0, x, 0.2 * x)

    wres_hwio = params["wres"].reshape(1, 1, Cin, -1)
    residual = conv(avgpool(x), wres_hwio, params["bres"][0],
                    1.0 / math.sqrt(Cin), 0)
    y = lrelu(conv(x, params["w1"], params["b1"][0],
                   1.0 / math.sqrt(Cin * 9), 1))
    y = lrelu(conv(y, params["w2"], params["b2"][0],
                   1.0 / math.sqrt(Cin * 9), 1))
    y = avgpool(y)
    return (y + residual) * (1.0 / math.sqrt(2.0))


if __name__ == "__main__":
    B, Cin, Cout, H, W = 2, 4, 8, 16, 16

    key = jax.random.PRNGKey(0)
    k1, k2, k3, kx = jax.random.split(key, 4)

    # Deterministic synthetic parameters (weights ~ N(0,1), biases = 1, as in __init__).
    params = dict(
        w1=jax.random.normal(k1, (3, 3, Cin, Cin), jnp.float32),    # HWIO
        b1=jnp.ones((1, Cin), jnp.float32),
        w2=jax.random.normal(k2, (3, 3, Cin, Cout), jnp.float32),   # HWIO
        b2=jnp.ones((1, Cout), jnp.float32),
        wres=jax.random.normal(k3, (Cin, Cout), jnp.float32),       # 1x1 conv, IO
        bres=jnp.ones((1, Cout), jnp.float32),
    )

    x_nchw = jax.random.normal(kx, (B, Cin, H, W), jnp.float32)
    x_nhwc = jnp.transpose(x_nchw, (0, 2, 3, 1))

    out_nhwc = jax.block_until_ready(discriminator_block(x_nhwc, params))
    out_nchw = jnp.transpose(out_nhwc, (0, 3, 1, 2))

    ref = _ref_forward_nchw(x_nchw, params)
    # bf16 MXU matmuls (f32 accumulation) -> relaxed tolerance vs f32 ref.
    np.testing.assert_allclose(np.asarray(out_nchw), np.asarray(ref),
                               rtol=2e-2, atol=5e-2)
    print("KERNEL_OK")
</pallas_src>

<mosaic_0001>
module attributes {stable_mosaic.version = 11 : i64} {
  func.func @_disc_block_kernel(%arg0: i32, %arg1: memref<1x16x16x4xf32, #tpu.memory_space<vmem>>, %arg2: memref<3x12x4xbf16, #tpu.memory_space<vmem>>, %arg3: memref<1x4xf32, #tpu.memory_space<vmem>>, %arg4: memref<3x12x8xbf16, #tpu.memory_space<vmem>>, %arg5: memref<1x8xf32, #tpu.memory_space<vmem>>, %arg6: memref<4x8xbf16, #tpu.memory_space<vmem>>, %arg7: memref<1x8xf32, #tpu.memory_space<vmem>>, %arg8: memref<1x8x8x8xf32, #tpu.memory_space<vmem>>, %arg9: memref<18x18x4xf32, #tpu.memory_space<vmem>>) attributes {dimension_semantics = [#tpu.dimension_semantics<parallel>], iteration_bounds = array<i64: 2>, scalar_prefetch = 0 : i64, scratch_operands = 1 : i64, tpu.core_type = #tpu.core_type<tc>, window_params = [{transform_indices = @transform_0, window_bounds = array<i64: 1, 16, 16, 4>}, {pipeline_mode = #tpu.pipeline_mode<synchronous>, transform_indices = @transform_1, window_bounds = array<i64: 3, 12, 4>}, {pipeline_mode = #tpu.pipeline_mode<synchronous>, transform_indices = @transform_2, window_bounds = array<i64: 1, 4>}, {pipeline_mode = #tpu.pipeline_mode<synchronous>, transform_indices = @transform_3, window_bounds = array<i64: 3, 12, 8>}, {pipeline_mode = #tpu.pipeline_mode<synchronous>, transform_indices = @transform_4, window_bounds = array<i64: 1, 8>}, {pipeline_mode = #tpu.pipeline_mode<synchronous>, transform_indices = @transform_5, window_bounds = array<i64: 4, 8>}, {pipeline_mode = #tpu.pipeline_mode<synchronous>, transform_indices = @transform_6, window_bounds = array<i64: 1, 8>}, {transform_indices = @transform_7, window_bounds = array<i64: 1, 8, 8, 8>}]} {
    %c0 = arith.constant 0 : index
    %c0_0 = arith.constant 0 : index
    %c0_1 = arith.constant 0 : index
    %c0_2 = arith.constant 0 : index
    %0 = vector.load %arg1[%c0, %c0_0, %c0_1, %c0_2] : memref<1x16x16x4xf32, #tpu.memory_space<vmem>>, vector<1x16x16x4xf32>
    %1 = vector.shape_cast %0 : vector<1x16x16x4xf32> to vector<16x16x4xf32>
    %2 = vector.shape_cast %1 : vector<16x16x4xf32> to vector<16x8x2x4xf32>
    %3 = vector.extract_strided_slice %2 {offsets = [0, 0, 0, 0], sizes = [16, 8, 1, 4], strides = [1, 1, 1, 1]} : vector<16x8x2x4xf32> to vector<16x8x1x4xf32>
    %4 = vector.shape_cast %3 : vector<16x8x1x4xf32> to vector<16x8x4xf32>
    %5 = vector.extract_strided_slice %2 {offsets = [0, 0, 1, 0], sizes = [16, 8, 1, 4], strides = [1, 1, 1, 1]} : vector<16x8x2x4xf32> to vector<16x8x1x4xf32>
    %6 = vector.shape_cast %5 : vector<16x8x1x4xf32> to vector<16x8x4xf32>
    %7 = arith.addf %4, %6 : vector<16x8x4xf32>
    %8 = vector.shape_cast %7 : vector<16x8x4xf32> to vector<8x2x8x4xf32>
    %9 = vector.extract_strided_slice %8 {offsets = [0, 0, 0, 0], sizes = [8, 1, 8, 4], strides = [1, 1, 1, 1]} : vector<8x2x8x4xf32> to vector<8x1x8x4xf32>
    %10 = vector.shape_cast %9 : vector<8x1x8x4xf32> to vector<8x8x4xf32>
    %11 = vector.extract_strided_slice %8 {offsets = [0, 1, 0, 0], sizes = [8, 1, 8, 4], strides = [1, 1, 1, 1]} : vector<8x2x8x4xf32> to vector<8x1x8x4xf32>
    %12 = vector.shape_cast %11 : vector<8x1x8x4xf32> to vector<8x8x4xf32>
    %13 = arith.addf %10, %12 : vector<8x8x4xf32>
    %14 = vector.shape_cast %13 : vector<8x8x4xf32> to vector<64x4xf32>
    %15 = arith.truncf %14 : vector<64x4xf32> to vector<64x4xbf16>
    %c0_3 = arith.constant 0 : index
    %c0_4 = arith.constant 0 : index
    %16 = vector.load %arg6[%c0_3, %c0_4] : memref<4x8xbf16, #tpu.memory_space<vmem>>, vector<4x8xbf16>
    %cst = arith.constant dense<0.000000e+00> : vector<64x8xf32>
    %17 = tpu.matmul %15, %16, %cst {dimension_numbers = #tpu.dot_dimension_numbers<[1], [0], [0], [1], [0, 0, 1, 1], [], []>} : vector<64x4xbf16>, vector<4x8xbf16>, vector<64x8xf32> -> vector<64x8xf32>
    %c0_5 = arith.constant 0 : index
    %c0_6 = arith.constant 0 : index
    %18 = vector.load %arg7[%c0_5, %c0_6] : memref<1x8xf32, #tpu.memory_space<vmem>>, vector<1x8xf32>
    %19 = vector.broadcast %18 : vector<1x8xf32> to vector<64x8xf32>
    %20 = arith.addf %17, %19 : vector<64x8xf32>
    %cst_7 = arith.constant 0.000000e+00 : f32
    %21 = vector.broadcast %cst_7 : f32 to vector<1x18x4xf32>
    %c0_8 = arith.constant 0 : index
    %c0_9 = arith.constant 0 : index
    %c0_10 = arith.constant 0 : index
    %22 = vector.load %arg9[%c0_8, %c0_9, %c0_10] : memref<18x18x4xf32, #tpu.memory_space<vmem>>, vector<1x18x4xf32>
    tpu.vector_store %arg9[%c0_8, %c0_9, %c0_10], %21 {strides = array<i32>} : memref<18x18x4xf32, #tpu.memory_space<vmem>>, vector<1x18x4xf32>,
    %cst_11 = arith.constant 0.000000e+00 : f32
    %23 = vector.broadcast %cst_11 : f32 to vector<1x18x4xf32>
    %c17 = arith.constant 17 : index
    %c0_12 = arith.constant 0 : index
    %c0_13 = arith.constant 0 : index
    %24 = vector.load %arg9[%c17, %c0_12, %c0_13] : memref<18x18x4xf32, #tpu.memory_space<vmem>>, vector<1x18x4xf32>
    tpu.vector_store %arg9[%c17, %c0_12, %c0_13], %23 {strides = array<i32>} : memref<18x18x4xf32, #tpu.memory_space<vmem>>, vector<1x18x4xf32>,
    %cst_14 = arith.constant 0.000000e+00 : f32
    %25 = vector.broadcast %cst_14 : f32 to vector<18x1x4xf32>
    %c0_15 = arith.constant 0 : index
    %c0_16 = arith.constant 0 : index
    %c0_17 = arith.constant 0 : index
    %26 = vector.load %arg9[%c0_15, %c0_16, %c0_17] : memref<18x18x4xf32, #tpu.memory_space<vmem>>, vector<18x1x4xf32>
    tpu.vector_store %arg9[%c0_15, %c0_16, %c0_17], %25 {strides = array<i32>} : memref<18x18x4xf32, #tpu.memory_space<vmem>>, vector<18x1x4xf32>,
    %cst_18 = arith.constant 0.000000e+00 : f32
    %27 = vector.broadcast %cst_18 : f32 to vector<18x1x4xf32>
    %c0_19 = arith.constant 0 : index
    %c17_20 = arith.constant 17 : index
    %c0_21 = arith.constant 0 : index
    %28 = vector.load %arg9[%c0_19, %c17_20, %c0_21] : memref<18x18x4xf32, #tpu.memory_space<vmem>>, vector<18x1x4xf32>
    tpu.vector_store %arg9[%c0_19, %c17_20, %c0_21], %27 {strides = array<i32>} : memref<18x18x4xf32, #tpu.memory_space<vmem>>, vector<18x1x4xf32>,
    %c1 = arith.constant 1 : index
    %c1_22 = arith.constant 1 : index
    %c0_23 = arith.constant 0 : index
    %29 = vector.load %arg9[%c1, %c1_22, %c0_23] : memref<18x18x4xf32, #tpu.memory_space<vmem>>, vector<16x16x4xf32>
    tpu.vector_store %arg9[%c1, %c1_22, %c0_23], %1 {strides = array<i32>} : memref<18x18x4xf32, #tpu.memory_space<vmem>>, vector<16x16x4xf32>,
    %c0_24 = arith.constant 0 : index
    %c0_25 = arith.constant 0 : index
    %c0_26 = arith.constant 0 : index
    %30 = vector.load %arg9[%c0_24, %c0_25, %c0_26] : memref<18x18x4xf32, #tpu.memory_space<vmem>>, vector<18x18x4xf32>
    %cst_27 = arith.constant 0.000000e+00 : f32
    %31 = vector.broadcast %cst_27 : f32 to vector<256x4xf32>
    %32 = vector.extract_strided_slice %30 {offsets = [0, 0, 0], sizes = [16, 18, 4], strides = [1, 1, 1]} : vector<18x18x4xf32> to vector<16x18x4xf32>
    %33 = vector.extract_strided_slice %32 {offsets = [0, 0, 0], sizes = [16, 16, 4], strides = [1, 1, 1]} : vector<16x18x4xf32> to vector<16x16x4xf32>
    %34 = vector.extract_strided_slice %32 {offsets = [0, 1, 0], sizes = [16, 16, 4], strides = [1, 1, 1]} : vector<16x18x4xf32> to vector<16x16x4xf32>
    %35 = vector.extract_strided_slice %32 {offsets = [0, 2, 0], sizes = [16, 16, 4], strides = [1, 1, 1]} : vector<16x18x4xf32> to vector<16x16x4xf32>
    %36 = tpu.concatenate %33, %34, %35 in 2 : vector<16x16x4xf32>, vector<16x16x4xf32>, vector<16x16x4xf32> -> vector<16x16x12xf32>
    %37 = vector.shape_cast %36 : vector<16x16x12xf32> to vector<256x12xf32>
    %38 = arith.truncf %37 : vector<256x12xf32> to vector<256x12xbf16>
    %c0_28 = arith.constant 0 : index
    %c0_29 = arith.constant 0 : index
    %c0_30 = arith.constant 0 : index
    %39 = vector.load %arg2[%c0_28, %c0_29, %c0_30] : memref<3x12x4xbf16, #tpu.memory_space<vmem>>, vector<1x12x4xbf16>
    %40 = vector.shape_cast %39 : vector<1x12x4xbf16> to vector<12x4xbf16>
    %cst_31 = arith.constant dense<0.000000e+00> : vector<256x4xf32>
    %41 = tpu.matmul %38, %40, %cst_31 {dimension_numbers = #tpu.dot_dimension_numbers<[1], [0], [0], [1], [0, 0, 1, 1], [], []>} : vector<256x12xbf16>, vector<12x4xbf16>, vector<256x4xf32> -> vector<256x4xf32>
    %42 = arith.addf %31, %41 : vector<256x4xf32>
    %43 = vector.extract_strided_slice %30 {offsets = [1, 0, 0], sizes = [16, 18, 4], strides = [1, 1, 1]} : vector<18x18x4xf32> to vector<16x18x4xf32>
    %44 = vector.extract_strided_slice %43 {offsets = [0, 0, 0], sizes = [16, 16, 4], strides = [1, 1, 1]} : vector<16x18x4xf32> to vector<16x16x4xf32>
    %45 = vector.extract_strided_slice %43 {offsets = [0, 1, 0], sizes = [16, 16, 4], strides = [1, 1, 1]} : vector<16x18x4xf32> to vector<16x16x4xf32>
    %46 = vector.extract_strided_slice %43 {offsets = [0, 2, 0], sizes = [16, 16, 4], strides = [1, 1, 1]} : vector<16x18x4xf32> to vector<16x16x4xf32>
    %47 = tpu.concatenate %44, %45, %46 in 2 : vector<16x16x4xf32>, vector<16x16x4xf32>, vector<16x16x4xf32> -> vector<16x16x12xf32>
    %48 = vector.shape_cast %47 : vector<16x16x12xf32> to vector<256x12xf32>
    %49 = arith.truncf %48 : vector<256x12xf32> to vector<256x12xbf16>
    %c1_32 = arith.constant 1 : index
    %c0_33 = arith.constant 0 : index
    %c0_34 = arith.constant 0 : index
    %50 = vector.load %arg2[%c1_32, %c0_33, %c0_34] : memref<3x12x4xbf16, #tpu.memory_space<vmem>>, vector<1x12x4xbf16>
    %51 = vector.shape_cast %50 : vector<1x12x4xbf16> to vector<12x4xbf16>
    %cst_35 = arith.constant dense<0.000000e+00> : vector<256x4xf32>
    %52 = tpu.matmul %49, %51, %cst_35 {dimension_numbers = #tpu.dot_dimension_numbers<[1], [0], [0], [1], [0, 0, 1, 1], [], []>} : vector<256x12xbf16>, vector<12x4xbf16>, vector<256x4xf32> -> vector<256x4xf32>
    %53 = arith.addf %42, %52 : vector<256x4xf32>
    %54 = vector.extract_strided_slice %30 {offsets = [2, 0, 0], sizes = [16, 18, 4], strides = [1, 1, 1]} : vector<18x18x4xf32> to vector<16x18x4xf32>
    %55 = vector.extract_strided_slice %54 {offsets = [0, 0, 0], sizes = [16, 16, 4], strides = [1, 1, 1]} : vector<16x18x4xf32> to vector<16x16x4xf32>
    %56 = vector.extract_strided_slice %54 {offsets = [0, 1, 0], sizes = [16, 16, 4], strides = [1, 1, 1]} : vector<16x18x4xf32> to vector<16x16x4xf32>
    %57 = vector.extract_strided_slice %54 {offsets = [0, 2, 0], sizes = [16, 16, 4], strides = [1, 1, 1]} : vector<16x18x4xf32> to vector<16x16x4xf32>
    %58 = tpu.concatenate %55, %56, %57 in 2 : vector<16x16x4xf32>, vector<16x16x4xf32>, vector<16x16x4xf32> -> vector<16x16x12xf32>
    %59 = vector.shape_cast %58 : vector<16x16x12xf32> to vector<256x12xf32>
    %60 = arith.truncf %59 : vector<256x12xf32> to vector<256x12xbf16>
    %c2 = arith.constant 2 : index
    %c0_36 = arith.constant 0 : index
    %c0_37 = arith.constant 0 : index
    %61 = vector.load %arg2[%c2, %c0_36, %c0_37] : memref<3x12x4xbf16, #tpu.memory_space<vmem>>, vector<1x12x4xbf16>
    %62 = vector.shape_cast %61 : vector<1x12x4xbf16> to vector<12x4xbf16>
    %cst_38 = arith.constant dense<0.000000e+00> : vector<256x4xf32>
    %63 = tpu.matmul %60, %62, %cst_38 {dimension_numbers = #tpu.dot_dimension_numbers<[1], [0], [0], [1], [0, 0, 1, 1], [], []>} : vector<256x12xbf16>, vector<12x4xbf16>, vector<256x4xf32> -> vector<256x4xf32>
    %64 = arith.addf %53, %63 : vector<256x4xf32>
    %c0_39 = arith.constant 0 : index
    %c0_40 = arith.constant 0 : index
    %65 = vector.load %arg3[%c0_39, %c0_40] : memref<1x4xf32, #tpu.memory_space<vmem>>, vector<1x4xf32>
    %66 = vector.broadcast %65 : vector<1x4xf32> to vector<256x4xf32>
    %67 = arith.addf %64, %66 : vector<256x4xf32>
    %cst_41 = arith.constant 0.000000e+00 : f32
    %68 = vector.broadcast %cst_41 : f32 to vector<256x4xf32>
    %69 = arith.cmpf ogt, %67, %68 : vector<256x4xf32>
    %cst_42 = arith.constant 2.000000e-01 : f32
    %70 = vector.broadcast %cst_42 : f32 to vector<256x4xf32>
    %71 = arith.mulf %70, %67 : vector<256x4xf32>
    %72 = arith.select %69, %67, %71 : vector<256x4xi1>, vector<256x4xf32>
    %73 = vector.shape_cast %72 : vector<256x4xf32> to vector<16x16x4xf32>
    %c1_43 = arith.constant 1 : index
    %c1_44 = arith.constant 1 : index
    %c0_45 = arith.constant 0 : index
    %74 = vector.load %arg9[%c1_43, %c1_44, %c0_45] : memref<18x18x4xf32, #tpu.memory_space<vmem>>, vector<16x16x4xf32>
    tpu.vector_store %arg9[%c1_43, %c1_44, %c0_45], %73 {strides = array<i32>} : memref<18x18x4xf32, #tpu.memory_space<vmem>>, vector<16x16x4xf32>,
    %c0_46 = arith.constant 0 : index
    %c0_47 = arith.constant 0 : index
    %c0_48 = arith.constant 0 : index
    %75 = vector.load %arg9[%c0_46, %c0_47, %c0_48] : memref<18x18x4xf32, #tpu.memory_space<vmem>>, vector<18x18x4xf32>
    %cst_49 = arith.constant 0.000000e+00 : f32
    %76 = vector.broadcast %cst_49 : f32 to vector<256x8xf32>
    %77 = vector.extract_strided_slice %75 {offsets = [0, 0, 0], sizes = [16, 18, 4], strides = [1, 1, 1]} : vector<18x18x4xf32> to vector<16x18x4xf32>
    %78 = vector.extract_strided_slice %77 {offsets = [0, 0, 0], sizes = [16, 16, 4], strides = [1, 1, 1]} : vector<16x18x4xf32> to vector<16x16x4xf32>
    %79 = vector.extract_strided_slice %77 {offsets = [0, 1, 0], sizes = [16, 16, 4], strides = [1, 1, 1]} : vector<16x18x4xf32> to vector<16x16x4xf32>
    %80 = vector.extract_strided_slice %77 {offsets = [0, 2, 0], sizes = [16, 16, 4], strides = [1, 1, 1]} : vector<16x18x4xf32> to vector<16x16x4xf32>
    %81 = tpu.concatenate %78, %79, %80 in 2 : vector<16x16x4xf32>, vector<16x16x4xf32>, vector<16x16x4xf32> -> vector<16x16x12xf32>
    %82 = vector.shape_cast %81 : vector<16x16x12xf32> to vector<256x12xf32>
    %83 = arith.truncf %82 : vector<256x12xf32> to vector<256x12xbf16>
    %c0_50 = arith.constant 0 : index
    %c0_51 = arith.constant 0 : index
    %c0_52 = arith.constant 0 : index
    %84 = vector.load %arg4[%c0_50, %c0_51, %c0_52] : memref<3x12x8xbf16, #tpu.memory_space<vmem>>, vector<1x12x8xbf16>
    %85 = vector.shape_cast %84 : vector<1x12x8xbf16> to vector<12x8xbf16>
    %cst_53 = arith.constant dense<0.000000e+00> : vector<256x8xf32>
    %86 = tpu.matmul %83, %85, %cst_53 {dimension_numbers = #tpu.dot_dimension_numbers<[1], [0], [0], [1], [0, 0, 1, 1], [], []>} : vector<256x12xbf16>, vector<12x8xbf16>, vector<256x8xf32> -> vector<256x8xf32>
    %87 = arith.addf %76, %86 : vector<256x8xf32>
    %88 = vector.extract_strided_slice %75 {offsets = [1, 0, 0], sizes = [16, 18, 4], strides = [1, 1, 1]} : vector<18x18x4xf32> to vector<16x18x4xf32>
    %89 = vector.extract_strided_slice %88 {offsets = [0, 0, 0], sizes = [16, 16, 4], strides = [1, 1, 1]} : vector<16x18x4xf32> to vector<16x16x4xf32>
    %90 = vector.extract_strided_slice %88 {offsets = [0, 1, 0], sizes = [16, 16, 4], strides = [1, 1, 1]} : vector<16x18x4xf32> to vector<16x16x4xf32>
    %91 = vector.extract_strided_slice %88 {offsets = [0, 2, 0], sizes = [16, 16, 4], strides = [1, 1, 1]} : vector<16x18x4xf32> to vector<16x16x4xf32>
    %92 = tpu.concatenate %89, %90, %91 in 2 : vector<16x16x4xf32>, vector<16x16x4xf32>, vector<16x16x4xf32> -> vector<16x16x12xf32>
    %93 = vector.shape_cast %92 : vector<16x16x12xf32> to vector<256x12xf32>
    %94 = arith.truncf %93 : vector<256x12xf32> to vector<256x12xbf16>
    %c1_54 = arith.constant 1 : index
    %c0_55 = arith.constant 0 : index
    %c0_56 = arith.constant 0 : index
    %95 = vector.load %arg4[%c1_54, %c0_55, %c0_56] : memref<3x12x8xbf16, #tpu.memory_space<vmem>>, vector<1x12x8xbf16>
    %96 = vector.shape_cast %95 : vector<1x12x8xbf16> to vector<12x8xbf16>
    %cst_57 = arith.constant dense<0.000000e+00> : vector<256x8xf32>
    %97 = tpu.matmul %94, %96, %cst_57 {dimension_numbers = #tpu.dot_dimension_numbers<[1], [0], [0], [1], [0, 0, 1, 1], [], []>} : vector<256x12xbf16>, vector<12x8xbf16>, vector<256x8xf32> -> vector<256x8xf32>
    %98 = arith.addf %87, %97 : vector<256x8xf32>
    %99 = vector.extract_strided_slice %75 {offsets = [2, 0, 0], sizes = [16, 18, 4], strides = [1, 1, 1]} : vector<18x18x4xf32> to vector<16x18x4xf32>
    %100 = vector.extract_strided_slice %99 {offsets = [0, 0, 0], sizes = [16, 16, 4], strides = [1, 1, 1]} : vector<16x18x4xf32> to vector<16x16x4xf32>
    %101 = vector.extract_strided_slice %99 {offsets = [0, 1, 0], sizes = [16, 16, 4], strides = [1, 1, 1]} : vector<16x18x4xf32> to vector<16x16x4xf32>
    %102 = vector.extract_strided_slice %99 {offsets = [0, 2, 0], sizes = [16, 16, 4], strides = [1, 1, 1]} : vector<16x18x4xf32> to vector<16x16x4xf32>
    %103 = tpu.concatenate %100, %101, %102 in 2 : vector<16x16x4xf32>, vector<16x16x4xf32>, vector<16x16x4xf32> -> vector<16x16x12xf32>
    %104 = vector.shape_cast %103 : vector<16x16x12xf32> to vector<256x12xf32>
    %105 = arith.truncf %104 : vector<256x12xf32> to vector<256x12xbf16>
    %c2_58 = arith.constant 2 : index
    %c0_59 = arith.constant 0 : index
    %c0_60 = arith.constant 0 : index
    %106 = vector.load %arg4[%c2_58, %c0_59, %c0_60] : memref<3x12x8xbf16, #tpu.memory_space<vmem>>, vector<1x12x8xbf16>
    %107 = vector.shape_cast %106 : vector<1x12x8xbf16> to vector<12x8xbf16>
    %cst_61 = arith.constant dense<0.000000e+00> : vector<256x8xf32>
    %108 = tpu.matmul %105, %107, %cst_61 {dimension_numbers = #tpu.dot_dimension_numbers<[1], [0], [0], [1], [0, 0, 1, 1], [], []>} : vector<256x12xbf16>, vector<12x8xbf16>, vector<256x8xf32> -> vector<256x8xf32>
    %109 = arith.addf %98, %108 : vector<256x8xf32>
    %c0_62 = arith.constant 0 : index
    %c0_63 = arith.constant 0 : index
    %110 = vector.load %arg5[%c0_62, %c0_63] : memref<1x8xf32, #tpu.memory_space<vmem>>, vector<1x8xf32>
    %111 = vector.broadcast %110 : vector<1x8xf32> to vector<256x8xf32>
    %112 = arith.addf %109, %111 : vector<256x8xf32>
    %cst_64 = arith.constant 0.000000e+00 : f32
    %113 = vector.broadcast %cst_64 : f32 to vector<256x8xf32>
    %114 = arith.cmpf ogt, %112, %113 : vector<256x8xf32>
    %cst_65 = arith.constant 2.000000e-01 : f32
    %115 = vector.broadcast %cst_65 : f32 to vector<256x8xf32>
    %116 = arith.mulf %115, %112 : vector<256x8xf32>
    %117 = arith.select %114, %112, %116 : vector<256x8xi1>, vector<256x8xf32>
    %118 = vector.shape_cast %117 : vector<256x8xf32> to vector<16x16x8xf32>
    %119 = vector.shape_cast %118 : vector<16x16x8xf32> to vector<16x8x2x8xf32>
    %120 = vector.extract_strided_slice %119 {offsets = [0, 0, 0, 0], sizes = [16, 8, 1, 8], strides = [1, 1, 1, 1]} : vector<16x8x2x8xf32> to vector<16x8x1x8xf32>
    %121 = vector.shape_cast %120 : vector<16x8x1x8xf32> to vector<16x8x8xf32>
    %122 = vector.extract_strided_slice %119 {offsets = [0, 0, 1, 0], sizes = [16, 8, 1, 8], strides = [1, 1, 1, 1]} : vector<16x8x2x8xf32> to vector<16x8x1x8xf32>
    %123 = vector.shape_cast %122 : vector<16x8x1x8xf32> to vector<16x8x8xf32>
    %124 = arith.addf %121, %123 : vector<16x8x8xf32>
    %125 = vector.shape_cast %124 : vector<16x8x8xf32> to vector<8x2x8x8xf32>
    %126 = vector.extract_strided_slice %125 {offsets = [0, 0, 0, 0], sizes = [8, 1, 8, 8], strides = [1, 1, 1, 1]} : vector<8x2x8x8xf32> to vector<8x1x8x8xf32>
    %127 = vector.shape_cast %126 : vector<8x1x8x8xf32> to vector<8x8x8xf32>
    %128 = vector.extract_strided_slice %125 {offsets = [0, 1, 0, 0], sizes = [8, 1, 8, 8], strides = [1, 1, 1, 1]} : vector<8x2x8x8xf32> to vector<8x1x8x8xf32>
    %129 = vector.shape_cast %128 : vector<8x1x8x8xf32> to vector<8x8x8xf32>
    %130 = arith.addf %127, %129 : vector<8x8x8xf32>
    %131 = vector.shape_cast %20 : vector<64x8xf32> to vector<8x8x8xf32>
    %132 = arith.addf %130, %131 : vector<8x8x8xf32>
    %c0_66 = arith.constant 0 : index
    %c0_67 = arith.constant 0 : index
    %c0_68 = arith.constant 0 : index
    %c0_69 = arith.constant 0 : index
    %133 = vector.load %arg8[%c0_66, %c0_67, %c0_68, %c0_69] : memref<1x8x8x8xf32, #tpu.memory_space<vmem>>, vector<1x8x8x8xf32>
    %134 = vector.shape_cast %133 : vector<1x8x8x8xf32> to vector<8x8x8xf32>
    %135 = vector.shape_cast %132 : vector<8x8x8xf32> to vector<1x8x8x8xf32>
    tpu.vector_store %arg8[%c0_66, %c0_67, %c0_68, %c0_69], %135 {strides = array<i32>} : memref<1x8x8x8xf32, #tpu.memory_space<vmem>>, vector<1x8x8x8xf32>,
    return
  }
  func.func @transform_0(%arg0: i32) -> (i32, i32, i32, i32) {
    %c0_i32 = arith.constant 0 : i32
    %c0_i32_0 = arith.constant 0 : i32
    %c0_i32_1 = arith.constant 0 : i32
    %c0_i32_2 = arith.constant 0 : i32
    return %arg0, %c0_i32, %c0_i32_0, %c0_i32_1 : i32, i32, i32, i32
  }
  func.func @transform_1(%arg0: i32) -> (i32, i32, i32) {
    %c0_i32 = arith.constant 0 : i32
    %c0_i32_0 = arith.constant 0 : i32
    %c0_i32_1 = arith.constant 0 : i32
    %c0_i32_2 = arith.constant 0 : i32
    return %c0_i32, %c0_i32_0, %c0_i32_1 : i32, i32, i32
  }
  func.func @transform_2(%arg0: i32) -> (i32, i32) {
    %c0_i32 = arith.constant 0 : i32
    %c0_i32_0 = arith.constant 0 : i32
    %c0_i32_1 = arith.constant 0 : i32
    return %c0_i32, %c0_i32_0 : i32, i32
  }
  func.func @transform_3(%arg0: i32) -> (i32, i32, i32) {
    %c0_i32 = arith.constant 0 : i32
    %c0_i32_0 = arith.constant 0 : i32
    %c0_i32_1 = arith.constant 0 : i32
    %c0_i32_2 = arith.constant 0 : i32
    return %c0_i32, %c0_i32_0, %c0_i32_1 : i32, i32, i32
  }
  func.func @transform_4(%arg0: i32) -> (i32, i32) {
    %c0_i32 = arith.constant 0 : i32
    %c0_i32_0 = arith.constant 0 : i32
    %c0_i32_1 = arith.constant 0 : i32
    return %c0_i32, %c0_i32_0 : i32, i32
  }
  func.func @transform_5(%arg0: i32) -> (i32, i32) {
    %c0_i32 = arith.constant 0 : i32
    %c0_i32_0 = arith.constant 0 : i32
    %c0_i32_1 = arith.constant 0 : i32
    return %c0_i32, %c0_i32_0 : i32, i32
  }
  func.func @transform_6(%arg0: i32) -> (i32, i32) {
    %c0_i32 = arith.constant 0 : i32
    %c0_i32_0 = arith.constant 0 : i32
    %c0_i32_1 = arith.constant 0 : i32
    return %c0_i32, %c0_i32_0 : i32, i32
  }
  func.func @transform_7(%arg0: i32) -> (i32, i32, i32, i32) {
    %c0_i32 = arith.constant 0 : i32
    %c0_i32_0 = arith.constant 0 : i32
    %c0_i32_1 = arith.constant 0 : i32
    %c0_i32_2 = arith.constant 0 : i32
    return %arg0, %c0_i32, %c0_i32_0, %c0_i32_1 : i32, i32, i32, i32
  }
}

</mosaic_0001>

<llo_original>
// kernel: tpu_custom_call.1
$region0: #{tpu_custom_call.1}
  #allocation0 [shape = 'u32[]', space=smem, size = 0x4, offset = 0x4, fixed_abs, tag = 'smem constant byte address 0x4 - core index']
  #allocation1 [shape = 'u32[72,128]{1,0:T(1,128)}', space=vmem, size = 0x9000, scoped, tag = 'internal scratch']
  #allocation2 [shape = 'f32[18,18,4]{2,1,0:T(8,128)}', space=vmem, size = 0x36000, scoped, tag = 'scratch operand']
  %s0 = inlined_call_operand.vmem [shape: f32[2,16,16,4], index: 0, kind: input, shape index: {}]
  %s1 = inlined_call_operand.vmem [shape: bf16[3,12,4], index: 1, kind: input, shape index: {}]
  %s2 = inlined_call_operand.vmem [shape: f32[1,4], index: 2, kind: input, shape index: {}]
  %s3 = inlined_call_operand.vmem [shape: bf16[3,12,8], index: 3, kind: input, shape index: {}]
  %s4 = inlined_call_operand.vmem [shape: f32[1,8], index: 4, kind: input, shape index: {}]
  %s5 = inlined_call_operand.vmem [shape: bf16[4,8], index: 5, kind: input, shape index: {}]
  %s6 = inlined_call_operand.vmem [shape: f32[1,8], index: 6, kind: input, shape index: {}]
  %s7 = inlined_call_operand.hbm [shape: f32[2,8,8,8], index: 7, kind: output, shape index: {}]
  %s8 = sld [smem:[#allocation0]]
  $region61: #{tpu_custom_call.1} parent=0
    _
  %s10 = ssub.s32 1, %s8
  %s11 = scalar_select 0, %s10, %s8
  $region1: #{tpu_custom_call.1} parent=0
    #allocation3 [shape = 'u8[65536]{0}', space=vmem, size = 0x10000, scoped, tag = 'output window, operand 0']
    #allocation4 [shape = 's32[2]{0}', space=sflag, size = 0x8, scoped, tag = 'scoped memory for tpu_custom_call.1']
    %12 = vsyncpa [#allocation4], 0
    %s13 = scalar_lea.sflag [#allocation4], 1
    %14 = vsyncpa %s13, 0
    loop: start=0, step=1, limit=4
    $region2: #{tpu_custom_call.1} parent=1 // loop_pre_header
      _
    $region3: #{tpu_custom_call.1} parent=1 // loop_header
      %s16 = sphi 0, %s20
      %p17 = scmp.ge.s32.totalorder %s16, 4
      %s26 = sphi 0, %s28
      %s29 = sphi 0, %s26
      %s30 = sphi 0, %s29
      %s46 = sphi 0, %s30
      %s50 = sphi 0, %s50
      %s52 = sphi 0, %s50
      %s53 = sphi 0, %s52
      %s67 = sphi 0, %s53
      %s71 = sphi 0, %s71
      %s73 = sphi 0, %s71
      %s74 = sphi 0, %s73
      %s88 = sphi 0, %s74
      %s92 = sphi 0, %s92
      %s94 = sphi 0, %s92
      %s95 = sphi 0, %s94
      %s109 = sphi 0, %s95
      %s113 = sphi 0, %s113
      %s115 = sphi 0, %s113
      %s116 = sphi 0, %s115
      %s130 = sphi 0, %s116
      %s134 = sphi 0, %s134
      %s136 = sphi 0, %s134
      %s137 = sphi 0, %s136
      %s151 = sphi 0, %s137
      %s155 = sphi 0, %s155
      %s157 = sphi 0, %s155
      %s158 = sphi 0, %s157
      %s172 = sphi 0, %s158
      %s178 = sphi 0, %s180
      %s181 = sphi 0, %s178
      %s182 = sphi 0, %s181
      %s198 = sphi 0, %s182
    $region4: #{tpu_custom_call.1} parent=1 // loop_header_branch
      %19 = sbr.rel (%p17) target = $region8
    $region5: #{tpu_custom_call.1} parent=1 // loop_body
      %s21 = ssub.s32 %s16, 1
      %s22 = ssub.s32 %s16, 2
      %s23 = sadd.s32 %s16, 1
      %s24 = ssub.s32 %s16, %s23
      %p25 = scmp.eq.s32.totalorder %s24, 0
      %s27 = sadd.s32 %s26, 1
      %s28 = scalar_select %p25, %s26, %s27
      %p31 = pneg %p25
      %p32 = scmp.eq.s32.totalorder %s16, 1
      %p33 = por %p31, %p32
      %p34 = scmp.ne.s32.totalorder %s26, %s29
      %p35 = scmp.eq.s32.totalorder %s16, 0
      %p36 = por %p34, %p35
      %p37 = scmp.ne.s32.totalorder %s26, %s29
      %p38 = scmp.eq.s32.totalorder %s21, 1
      %p39 = por %p37, %p38
      %p40 = scmp.ne.s32.totalorder %s29, %s30
      %p41 = scmp.eq.s32.totalorder %s21, 0
      %p42 = por %p40, %p41
      %p43 = scmp.ne.s32.totalorder %s29, %s30
      %p44 = scmp.eq.s32.totalorder %s22, 1
      %p45 = por %p43, %p44
      %p47 = scmp.ne.s32.totalorder %s30, %s46
      %p48 = scmp.eq.s32.totalorder %s22, 0
      %p49 = por %p47, %p48
      %s51 = sadd.s32 %s50, 1
      %p54 = scmp.eq.s32.totalorder %s16, 1
      %p55 = scmp.ne.s32.totalorder %s50, %s52
      %p56 = scmp.eq.s32.totalorder %s16, 0
      %p57 = por %p55, %p56
      %p58 = scmp.ne.s32.totalorder %s50, %s52
      %p59 = scmp.eq.s32.totalorder %s21, 1
      %p60 = por %p58, %p59
      %p61 = scmp.ne.s32.totalorder %s52, %s53
      %p62 = scmp.eq.s32.totalorder %s21, 0
      %p63 = por %p61, %p62
      %p64 = scmp.ne.s32.totalorder %s52, %s53
      %p65 = scmp.eq.s32.totalorder %s22, 1
      %p66 = por %p64, %p65
      %p68 = scmp.ne.s32.totalorder %s53, %s67
      %p69 = scmp.eq.s32.totalorder %s22, 0
      %p70 = por %p68, %p69
      %s72 = sadd.s32 %s71, 1
      %p75 = scmp.eq.s32.totalorder %s16, 1
      %p76 = scmp.ne.s32.totalorder %s71, %s73
      %p77 = scmp.eq.s32.totalorder %s16, 0
      %p78 = por %p76, %p77
      %p79 = scmp.ne.s32.totalorder %s71, %s73
      %p80 = scmp.eq.s32.totalorder %s21, 1
      %p81 = por %p79, %p80
      %p82 = scmp.ne.s32.totalorder %s73, %s74
      %p83 = scmp.eq.s32.totalorder %s21, 0
      %p84 = por %p82, %p83
      %p85 = scmp.ne.s32.totalorder %s73, %s74
      %p86 = scmp.eq.s32.totalorder %s22, 1
      %p87 = por %p85, %p86
      %p89 = scmp.ne.s32.totalorder %s74, %s88
      %p90 = scmp.eq.s32.totalorder %s22, 0
      %p91 = por %p89, %p90
      %s93 = sadd.s32 %s92, 1
      %p96 = scmp.eq.s32.totalorder %s16, 1
      %p97 = scmp.ne.s32.totalorder %s92, %s94
      %p98 = scmp.eq.s32.totalorder %s16, 0
      %p99 = por %p97, %p98
      %p100 = scmp.ne.s32.totalorder %s92, %s94
      %p101 = scmp.eq.s32.totalorder %s21, 1
      %p102 = por %p100, %p101
      %p103 = scmp.ne.s32.totalorder %s94, %s95
      %p104 = scmp.eq.s32.totalorder %s21, 0
      %p105 = por %p103, %p104
      %p106 = scmp.ne.s32.totalorder %s94, %s95
      %p107 = scmp.eq.s32.totalorder %s22, 1
      %p108 = por %p106, %p107
      %p110 = scmp.ne.s32.totalorder %s95, %s109
      %p111 = scmp.eq.s32.totalorder %s22, 0
      %p112 = por %p110, %p111
      %s114 = sadd.s32 %s113, 1
      %p117 = scmp.eq.s32.totalorder %s16, 1
      %p118 = scmp.ne.s32.totalorder %s113, %s115
      %p119 = scmp.eq.s32.totalorder %s16, 0
      %p120 = por %p118, %p119
      %p121 = scmp.ne.s32.totalorder %s113, %s115
      %p122 = scmp.eq.s32.totalorder %s21, 1
      %p123 = por %p121, %p122
      %p124 = scmp.ne.s32.totalorder %s115, %s116
      %p125 = scmp.eq.s32.totalorder %s21, 0
      %p126 = por %p124, %p125
      %p127 = scmp.ne.s32.totalorder %s115, %s116
      %p128 = scmp.eq.s32.totalorder %s22, 1
      %p129 = por %p127, %p128
      %p131 = scmp.ne.s32.totalorder %s116, %s130
      %p132 = scmp.eq.s32.totalorder %s22, 0
      %p133 = por %p131, %p132
      %s135 = sadd.s32 %s134, 1
      %p138 = scmp.eq.s32.totalorder %s16, 1
      %p139 = scmp.ne.s32.totalorder %s134, %s136
      %p140 = scmp.eq.s32.totalorder %s16, 0
      %p141 = por %p139, %p140
      %p142 = scmp.ne.s32.totalorder %s134, %s136
      %p143 = scmp.eq.s32.totalorder %s21, 1
      %p144 = por %p142, %p143
      %p145 = scmp.ne.s32.totalorder %s136, %s137
      %p146 = scmp.eq.s32.totalorder %s21, 0
      %p147 = por %p145, %p146
      %p148 = scmp.ne.s32.totalorder %s136, %s137
      %p149 = scmp.eq.s32.totalorder %s22, 1
      %p150 = por %p148, %p149
      %p152 = scmp.ne.s32.totalorder %s137, %s151
      %p153 = scmp.eq.s32.totalorder %s22, 0
      %p154 = por %p152, %p153
      %s156 = sadd.s32 %s155, 1
      %p159 = scmp.eq.s32.totalorder %s16, 1
      %p160 = scmp.ne.s32.totalorder %s155, %s157
      %p161 = scmp.eq.s32.totalorder %s16, 0
      %p162 = por %p160, %p161
      %p163 = scmp.ne.s32.totalorder %s155, %s157
      %p164 = scmp.eq.s32.totalorder %s21, 1
      %p165 = por %p163, %p164
      %p166 = scmp.ne.s32.totalorder %s157, %s158
      %p167 = scmp.eq.s32.totalorder %s21, 0
      %p168 = por %p166, %p167
      %p169 = scmp.ne.s32.totalorder %s157, %s158
      %p170 = scmp.eq.s32.totalorder %s22, 1
      %p171 = por %p169, %p170
      %p173 = scmp.ne.s32.totalorder %s158, %s172
      %p174 = scmp.eq.s32.totalorder %s22, 0
      %p175 = por %p173, %p174
      %s176 = ssub.s32 %s16, %s23
      %p177 = scmp.eq.s32.totalorder %s176, 0
      %s179 = sadd.s32 %s178, 1
      %s180 = scalar_select %p177, %s178, %s179
      %p183 = pneg %p177
      %p184 = scmp.eq.s32.totalorder %s16, 1
      %p185 = por %p183, %p184
      %p186 = scmp.ne.s32.totalorder %s178, %s181
      %p187 = scmp.eq.s32.totalorder %s16, 0
      %p188 = por %p186, %p187
      %p189 = scmp.ne.s32.totalorder %s178, %s181
      %p190 = scmp.eq.s32.totalorder %s21, 1
      %p191 = por %p189, %p190
      %p192 = scmp.ne.s32.totalorder %s181, %s182
      %p193 = scmp.eq.s32.totalorder %s21, 0
      %p194 = por %p192, %p193
      %p195 = scmp.ne.s32.totalorder %s181, %s182
      %p196 = scmp.eq.s32.totalorder %s22, 1
      %p197 = por %p195, %p196
      %p199 = scmp.ne.s32.totalorder %s182, %s198
      %p200 = scmp.eq.s32.totalorder %s22, 0
      %p201 = por %p199, %p200
      %p202 = scmp.le.s32.totalorder 1, %s16
      %p203 = scmp.lt.s32.totalorder %s16, 3
      %p204 = pnand %p202, %p203
      %p205 = pneg %p204
      // Predicated region
      $region9: #{tpu_custom_call.1} parent=5 // pred_check
        _
      $region10: #{tpu_custom_call.1} parent=5 // pred_check_branch
        %207 = sbr.rel (%p204) target = $region12
      $region11: #{tpu_custom_call.1} parent=5 // pred_region
        %s208 = ssub.s32 %s16, 1
        // Predicated region
        $region13: #{tpu_custom_call.1} parent=11 // pred_check
          %p209 = pneg %p63
        $region14: #{tpu_custom_call.1} parent=11 // pred_check_branch
          %211 = sbr.rel (%p209) target = $region16
        $region15: #{tpu_custom_call.1} parent=11 // pred_region
          _
        $region16: #{tpu_custom_call.1} parent=11 // pred_fallthru
          _
        // Predicated region
        $region17: #{tpu_custom_call.1} parent=11 // pred_check
          %p212 = pneg %p84
        $region18: #{tpu_custom_call.1} parent=11 // pred_check_branch
          %214 = sbr.rel (%p212) target = $region20
        $region19: #{tpu_custom_call.1} parent=11 // pred_region
          _
        $region20: #{tpu_custom_call.1} parent=11 // pred_fallthru
          _
        // Predicated region
        $region21: #{tpu_custom_call.1} parent=11 // pred_check
          %p215 = pneg %p105
        $region22: #{tpu_custom_call.1} parent=11 // pred_check_branch
          %217 = sbr.rel (%p215) target = $region24
        $region23: #{tpu_custom_call.1} parent=11 // pred_region
          _
        $region24: #{tpu_custom_call.1} parent=11 // pred_fallthru
          _
        // Predicated region
        $region25: #{tpu_custom_call.1} parent=11 // pred_check
          %p218 = pneg %p126
        $region26: #{tpu_custom_call.1} parent=11 // pred_check_branch
          %220 = sbr.rel (%p218) target = $region28
        $region27: #{tpu_custom_call.1} parent=11 // pred_region
          _
        $region28: #{tpu_custom_call.1} parent=11 // pred_fallthru
          _
        // Predicated region
        $region29: #{tpu_custom_call.1} parent=11 // pred_check
          %p221 = pneg %p147
        $region30: #{tpu_custom_call.1} parent=11 // pred_check_branch
          %223 = sbr.rel (%p221) target = $region32
        $region31: #{tpu_custom_call.1} parent=11 // pred_region
          _
        $region32: #{tpu_custom_call.1} parent=11 // pred_fallthru
          _
        // Predicated region
        $region33: #{tpu_custom_call.1} parent=11 // pred_check
          %p224 = pneg %p168
        $region34: #{tpu_custom_call.1} parent=11 // pred_check_branch
          %226 = sbr.rel (%p224) target = $region36
        $region35: #{tpu_custom_call.1} parent=11 // pred_region
          _
        $region36: #{tpu_custom_call.1} parent=11 // pred_fallthru
          _
      $region12: #{tpu_custom_call.1} parent=5 // pred_fallthru
        _
      %p227 = scmp.lt.s32.totalorder %s16, 2
      // Predicated region
      $region37: #{tpu_custom_call.1} parent=5 // pred_check
        %p228 = pneg %p227
      $region38: #{tpu_custom_call.1} parent=5 // pred_check_branch
        %230 = sbr.rel (%p228) target = $region40
      $region39: #{tpu_custom_call.1} parent=5 // pred_region
        // Predicated region
        $region41: #{tpu_custom_call.1} parent=39 // pred_check
          %p231 = pneg %p36
        $region42: #{tpu_custom_call.1} parent=39 // pred_check_branch
          %233 = sbr.rel (%p231) target = $region44
        $region43: #{tpu_custom_call.1} parent=39 // pred_region
          %p234 = scmp.lt.s32.totalorder %s16, 1
          %s235 = scalar_select %p234, %s16, 1
          %s236 = smul.addr %s235, 32
          %s237 = smul.addr %s236, 8
          %s238 = scalar_lea.vmem %s0, %s237
        $region44: #{tpu_custom_call.1} parent=39 // pred_fallthru
          _
      $region40: #{tpu_custom_call.1} parent=5 // pred_fallthru
        _
      %p239 = scmp.le.s32.totalorder 1, %s16
      %p240 = scmp.lt.s32.totalorder %s16, 3
      %p241 = pnand %p239, %p240
      %p242 = pneg %p241
      // Predicated region
      $region45: #{tpu_custom_call.1} parent=5 // pred_check
        _
      $region46: #{tpu_custom_call.1} parent=5 // pred_check_branch
        %244 = sbr.rel (%p241) target = $region48
      $region47: #{tpu_custom_call.1} parent=5 // pred_region
        %s245 = ssub.s32 %s16, 1
        %p246 = scmp.lt.s32.totalorder %s21, 1
        %s247 = scalar_select %p246, %s21, 1
        %s248 = smul.addr %s247, 32
        %s249 = smul.addr %s248, 8
        %s250 = scalar_lea.vmem %s0, %s249
        %p251 = pneg %p42
        %p252 = pneg %p39
        %p253 = pneg %p63
        %p254 = pneg %p60
        %p255 = pneg %p84
        %p256 = pneg %p81
        %p257 = pneg %p105
        %p258 = pneg %p102
        %p259 = pneg %p126
        %p260 = pneg %p123
        %p261 = pneg %p147
        %p262 = pneg %p144
        %p263 = pneg %p168
        %p264 = pneg %p165
        %p265 = pneg %p194
        %p266 = pneg %p191
        %s267 = sand.u32 %s181, 1
        %s268 = scalar_lea.sflag [#allocation4], %s267
        %s269 = sand.u32 %s181, 1
        %s270 = smul.addr %s269, 64
        %s271 = scalar_lea.vmem [#allocation3], %s270
        %p272 = scmp.lt.s32.totalorder %s21, 1
        %s273 = scalar_select %p272, %s21, 1
        %s274 = smul.addr %s273, 32
        %s275 = smul.addr %s274, 8
        %s276 = scalar_lea.vmem %s0, %s275
        %v278 = vld [vmem:[%s276] sm:$0xff]
        %v279 = vld [vmem:[%s276 + $0x8] sm:$0xff]
        %v280 = vld [vmem:[%s276 + $0x10] sm:$0xff]
        %v281 = vld [vmem:[%s276 + $0x18] sm:$0xff]
        %v282 = vld [vmem:[%s276 + $0x20] sm:$0xff]
        %v283 = vld [vmem:[%s276 + $0x28] sm:$0xff]
        %v284 = vld [vmem:[%s276 + $0x30] sm:$0xff]
        %v285 = vld [vmem:[%s276 + $0x38] sm:$0xff]
        %v286 = vld [vmem:[%s276 + $0x40] sm:$0xff]
        %v287 = vld [vmem:[%s276 + $0x48] sm:$0xff]
        %v288 = vld [vmem:[%s276 + $0x50] sm:$0xff]
        %v289 = vld [vmem:[%s276 + $0x58] sm:$0xff]
        %v290 = vld [vmem:[%s276 + $0x60] sm:$0xff]
        %v291 = vld [vmem:[%s276 + $0x68] sm:$0xff]
        %v292 = vld [vmem:[%s276 + $0x70] sm:$0xff]
        %v293 = vld [vmem:[%s276 + $0x78] sm:$0xff]
        %v294 = vld [vmem:[%s276 + $0x80] sm:$0xff]
        %v295 = vld [vmem:[%s276 + $0x88] sm:$0xff]
        %v296 = vld [vmem:[%s276 + $0x90] sm:$0xff]
        %v297 = vld [vmem:[%s276 + $0x98] sm:$0xff]
        %v298 = vld [vmem:[%s276 + $0xa0] sm:$0xff]
        %v299 = vld [vmem:[%s276 + $0xa8] sm:$0xff]
        %v300 = vld [vmem:[%s276 + $0xb0] sm:$0xff]
        %v301 = vld [vmem:[%s276 + $0xb8] sm:$0xff]
        %v302 = vld [vmem:[%s276 + $0xc0] sm:$0xff]
        %v303 = vld [vmem:[%s276 + $0xc8] sm:$0xff]
        %v304 = vld [vmem:[%s276 + $0xd0] sm:$0xff]
        %v305 = vld [vmem:[%s276 + $0xd8] sm:$0xff]
        %v306 = vld [vmem:[%s276 + $0xe0] sm:$0xff]
        %v307 = vld [vmem:[%s276 + $0xe8] sm:$0xff]
        %v308 = vld [vmem:[%s276 + $0xf0] sm:$0xff]
        %v309 = vld [vmem:[%s276 + $0xf8] sm:$0xff]
        %v342 = vrot.slane %v278, 2
        %v343 = vrot.slane %v278, 4
        %v344 = vrot.slane %v278, 6
        %v345 = vrot.slane %v279, 2
        %v346 = vrot.slane %v279, 4
        %v347 = vrot.slane %v279, 6
        %v348 = vrot.slane %v280, 2
        %v349 = vrot.slane %v280, 4
        %v350 = vrot.slane %v280, 6
        %v351 = vrot.slane %v281, 2
        %v352 = vrot.slane %v281, 4
        %v353 = vrot.slane %v281, 6
        %v354 = vrot.slane %v282, 2
        %v355 = vrot.slane %v282, 4
        %v356 = vrot.slane %v282, 6
        %v357 = vrot.slane %v283, 2
        %v358 = vrot.slane %v283, 4
        %v359 = vrot.slane %v283, 6
        %v360 = vrot.slane %v284, 2
        %v361 = vrot.slane %v284, 4
        %v362 = vrot.slane %v284, 6
        %v363 = vrot.slane %v285, 2
        %v364 = vrot.slane %v285, 4
        %v365 = vrot.slane %v285, 6
        %v366 = vrot.slane %v286, 2
        %v367 = vrot.slane %v286, 4
        %v368 = vrot.slane %v286, 6
        %v369 = vrot.slane %v287, 2
        %v370 = vrot.slane %v287, 4
        %v371 = vrot.slane %v287, 6
        %v372 = vrot.slane %v288, 2
        %v373 = vrot.slane %v288, 4
        %v374 = vrot.slane %v288, 6
        %v375 = vrot.slane %v289, 2
        %v376 = vrot.slane %v289, 4
        %v377 = vrot.slane %v289, 6
        %v378 = vrot.slane %v290, 2
        %v379 = vrot.slane %v290, 4
        %v380 = vrot.slane %v290, 6
        %v381 = vrot.slane %v291, 2
        %v382 = vrot.slane %v291, 4
        %v383 = vrot.slane %v291, 6
        %v384 = vrot.slane %v292, 2
        %v385 = vrot.slane %v292, 4
        %v386 = vrot.slane %v292, 6
        %v387 = vrot.slane %v293, 2
        %v388 = vrot.slane %v293, 4
        %v389 = vrot.slane %v293, 6
        %v390 = vrot.slane %v294, 2
        %v391 = vrot.slane %v294, 4
        %v392 = vrot.slane %v294, 6
        %v393 = vrot.slane %v295, 2
        %v394 = vrot.slane %v295, 4
        %v395 = vrot.slane %v295, 6
        %v396 = vrot.slane %v296, 2
        %v397 = vrot.slane %v296, 4
        %v398 = vrot.slane %v296, 6
        %v399 = vrot.slane %v297, 2
        %v400 = vrot.slane %v297, 4
        %v401 = vrot.slane %v297, 6
        %v402 = vrot.slane %v298, 2
        %v403 = vrot.slane %v298, 4
        %v404 = vrot.slane %v298, 6
        %v405 = vrot.slane %v299, 2
        %v406 = vrot.slane %v299, 4
        %v407 = vrot.slane %v299, 6
        %v408 = vrot.slane %v300, 2
        %v409 = vrot.slane %v300, 4
        %v410 = vrot.slane %v300, 6
        %v411 = vrot.slane %v301, 2
        %v412 = vrot.slane %v301, 4
        %v413 = vrot.slane %v301, 6
        %v414 = vrot.slane %v302, 2
        %v415 = vrot.slane %v302, 4
        %v416 = vrot.slane %v302, 6
        %v417 = vrot.slane %v303, 2
        %v418 = vrot.slane %v303, 4
        %v419 = vrot.slane %v303, 6
        %v420 = vrot.slane %v304, 2
        %v421 = vrot.slane %v304, 4
        %v422 = vrot.slane %v304, 6
        %v423 = vrot.slane %v305, 2
        %v424 = vrot.slane %v305, 4
        %v425 = vrot.slane %v305, 6
        %v426 = vrot.slane %v306, 2
        %v427 = vrot.slane %v306, 4
        %v428 = vrot.slane %v306, 6
        %v429 = vrot.slane %v307, 2
        %v430 = vrot.slane %v307, 4
        %v431 = vrot.slane %v307, 6
        %v432 = vrot.slane %v308, 2
        %v433 = vrot.slane %v308, 4
        %v434 = vrot.slane %v308, 6
        %v435 = vrot.slane %v309, 2
        %v436 = vrot.slane %v309, 4
        %v437 = vrot.slane %v309, 6
        %v534 = vrot.slane %v278, 7
        %v535 = vrot.slane %v534, 2
        %v536 = vrot.slane %v342, 7
        %v537 = vrot.slane %v536, 2
        %v538 = vrot.slane %v343, 7
        %v539 = vrot.slane %v538, 2
        %v540 = vrot.slane %v344, 7
        %v541 = vrot.slane %v540, 2
        %v542 = vrot.slane %v279, 7
        %v543 = vrot.slane %v542, 2
        %v544 = vrot.slane %v345, 7
        %v545 = vrot.slane %v544, 2
        %v546 = vrot.slane %v346, 7
        %v547 = vrot.slane %v546, 2
        %v548 = vrot.slane %v347, 7
        %v549 = vrot.slane %v548, 2
        %v550 = vrot.slane %v280, 7
        %v551 = vrot.slane %v550, 2
        %v552 = vrot.slane %v348, 7
        %v553 = vrot.slane %v552, 2
        %v554 = vrot.slane %v349, 7
        %v555 = vrot.slane %v554, 2
        %v556 = vrot.slane %v350, 7
        %v557 = vrot.slane %v556, 2
        %v558 = vrot.slane %v281, 7
        %v559 = vrot.slane %v558, 2
        %v560 = vrot.slane %v351, 7
        %v561 = vrot.slane %v560, 2
        %v562 = vrot.slane %v352, 7
        %v563 = vrot.slane %v562, 2
        %v564 = vrot.slane %v353, 7
        %v565 = vrot.slane %v564, 2
        %v566 = vrot.slane %v282, 7
        %v567 = vrot.slane %v566, 2
        %v568 = vrot.slane %v354, 7
        %v569 = vrot.slane %v568, 2
        %v570 = vrot.slane %v355, 7
        %v571 = vrot.slane %v570, 2
        %v572 = vrot.slane %v356, 7
        %v573 = vrot.slane %v572, 2
        %v574 = vrot.slane %v283, 7
        %v575 = vrot.slane %v574, 2
        %v576 = vrot.slane %v357, 7
        %v577 = vrot.slane %v576, 2
        %v578 = vrot.slane %v358, 7
        %v579 = vrot.slane %v578, 2
        %v580 = vrot.slane %v359, 7
        %v581 = vrot.slane %v580, 2
        %v582 = vrot.slane %v284, 7
        %v583 = vrot.slane %v582, 2
        %v584 = vrot.slane %v360, 7
        %v585 = vrot.slane %v584, 2
        %v586 = vrot.slane %v361, 7
        %v587 = vrot.slane %v586, 2
        %v588 = vrot.slane %v362, 7
        %v589 = vrot.slane %v588, 2
        %v590 = vrot.slane %v285, 7
        %v591 = vrot.slane %v590, 2
        %v592 = vrot.slane %v363, 7
        %v593 = vrot.slane %v592, 2
        %v594 = vrot.slane %v364, 7
        %v595 = vrot.slane %v594, 2
        %v596 = vrot.slane %v365, 7
        %v597 = vrot.slane %v596, 2
        %v598 = vrot.slane %v286, 7
        %v599 = vrot.slane %v598, 2
        %v600 = vrot.slane %v366, 7
        %v601 = vrot.slane %v600, 2
        %v602 = vrot.slane %v367, 7
        %v603 = vrot.slane %v602, 2
        %v604 = vrot.slane %v368, 7
        %v605 = vrot.slane %v604, 2
        %v606 = vrot.slane %v287, 7
        %v607 = vrot.slane %v606, 2
        %v608 = vrot.slane %v369, 7
        %v609 = vrot.slane %v608, 2
        %v610 = vrot.slane %v370, 7
        %v611 = vrot.slane %v610, 2
        %v612 = vrot.slane %v371, 7
        %v613 = vrot.slane %v612, 2
        %v614 = vrot.slane %v288, 7
        %v615 = vrot.slane %v614, 2
        %v616 = vrot.slane %v372, 7
        %v617 = vrot.slane %v616, 2
        %v618 = vrot.slane %v373, 7
        %v619 = vrot.slane %v618, 2
        %v620 = vrot.slane %v374, 7
        %v621 = vrot.slane %v620, 2
        %v622 = vrot.slane %v289, 7
        %v623 = vrot.slane %v622, 2
        %v624 = vrot.slane %v375, 7
        %v625 = vrot.slane %v624, 2
        %v626 = vrot.slane %v376, 7
        %v627 = vrot.slane %v626, 2
        %v628 = vrot.slane %v377, 7
        %v629 = vrot.slane %v628, 2
        %v630 = vrot.slane %v290, 7
        %v631 = vrot.slane %v630, 2
        %v632 = vrot.slane %v378, 7
        %v633 = vrot.slane %v632, 2
        %v634 = vrot.slane %v379, 7
        %v635 = vrot.slane %v634, 2
        %v636 = vrot.slane %v380, 7
        %v637 = vrot.slane %v636, 2
        %v638 = vrot.slane %v291, 7
        %v639 = vrot.slane %v638, 2
        %v640 = vrot.slane %v381, 7
        %v641 = vrot.slane %v640, 2
        %v642 = vrot.slane %v382, 7
        %v643 = vrot.slane %v642, 2
        %v644 = vrot.slane %v383, 7
        %v645 = vrot.slane %v644, 2
        %v646 = vrot.slane %v292, 7
        %v647 = vrot.slane %v646, 2
        %v648 = vrot.slane %v384, 7
        %v649 = vrot.slane %v648, 2
        %v650 = vrot.slane %v385, 7
        %v651 = vrot.slane %v650, 2
        %v652 = vrot.slane %v386, 7
        %v653 = vrot.slane %v652, 2
        %v654 = vrot.slane %v293, 7
        %v655 = vrot.slane %v654, 2
        %v656 = vrot.slane %v387, 7
        %v657 = vrot.slane %v656, 2
        %v658 = vrot.slane %v388, 7
        %v659 = vrot.slane %v658, 2
        %v660 = vrot.slane %v389, 7
        %v661 = vrot.slane %v660, 2
        %v662 = vrot.slane %v294, 7
        %v663 = vrot.slane %v662, 2
        %v664 = vrot.slane %v390, 7
        %v665 = vrot.slane %v664, 2
        %v666 = vrot.slane %v391, 7
        %v667 = vrot.slane %v666, 2
        %v668 = vrot.slane %v392, 7
        %v669 = vrot.slane %v668, 2
        %v670 = vrot.slane %v295, 7
        %v671 = vrot.slane %v670, 2
        %v672 = vrot.slane %v393, 7
        %v673 = vrot.slane %v672, 2
        %v674 = vrot.slane %v394, 7
        %v675 = vrot.slane %v674, 2
        %v676 = vrot.slane %v395, 7
        %v677 = vrot.slane %v676, 2
        %v678 = vrot.slane %v296, 7
        %v679 = vrot.slane %v678, 2
        %v680 = vrot.slane %v396, 7
        %v681 = vrot.slane %v680, 2
        %v682 = vrot.slane %v397, 7
        %v683 = vrot.slane %v682, 2
        %v684 = vrot.slane %v398, 7
        %v685 = vrot.slane %v684, 2
        %v686 = vrot.slane %v297, 7
        %v687 = vrot.slane %v686, 2
        %v688 = vrot.slane %v399, 7
        %v689 = vrot.slane %v688, 2
        %v690 = vrot.slane %v400, 7
        %v691 = vrot.slane %v690, 2
        %v692 = vrot.slane %v401, 7
        %v693 = vrot.slane %v692, 2
        %v694 = vrot.slane %v298, 7
        %v695 = vrot.slane %v694, 2
        %v696 = vrot.slane %v402, 7
        %v697 = vrot.slane %v696, 2
        %v698 = vrot.slane %v403, 7
        %v699 = vrot.slane %v698, 2
        %v700 = vrot.slane %v404, 7
        %v701 = vrot.slane %v700, 2
        %v702 = vrot.slane %v299, 7
        %v703 = vrot.slane %v702, 2
        %v704 = vrot.slane %v405, 7
        %v705 = vrot.slane %v704, 2
        %v706 = vrot.slane %v406, 7
        %v707 = vrot.slane %v706, 2
        %v708 = vrot.slane %v407, 7
        %v709 = vrot.slane %v708, 2
        %v710 = vrot.slane %v300, 7
        %v711 = vrot.slane %v710, 2
        %v712 = vrot.slane %v408, 7
        %v713 = vrot.slane %v712, 2
        %v714 = vrot.slane %v409, 7
        %v715 = vrot.slane %v714, 2
        %v716 = vrot.slane %v410, 7
        %v717 = vrot.slane %v716, 2
        %v718 = vrot.slane %v301, 7
        %v719 = vrot.slane %v718, 2
        %v720 = vrot.slane %v411, 7
        %v721 = vrot.slane %v720, 2
        %v722 = vrot.slane %v412, 7
        %v723 = vrot.slane %v722, 2
        %v724 = vrot.slane %v413, 7
        %v725 = vrot.slane %v724, 2
        %v726 = vrot.slane %v302, 7
        %v727 = vrot.slane %v726, 2
        %v728 = vrot.slane %v414, 7
        %v729 = vrot.slane %v728, 2
        %v730 = vrot.slane %v415, 7
        %v731 = vrot.slane %v730, 2
        %v732 = vrot.slane %v416, 7
        %v733 = vrot.slane %v732, 2
        %v734 = vrot.slane %v303, 7
        %v735 = vrot.slane %v734, 2
        %v736 = vrot.slane %v417, 7
        %v737 = vrot.slane %v736, 2
        %v738 = vrot.slane %v418, 7
        %v739 = vrot.slane %v738, 2
        %v740 = vrot.slane %v419, 7
        %v741 = vrot.slane %v740, 2
        %v742 = vrot.slane %v304, 7
        %v743 = vrot.slane %v742, 2
        %v744 = vrot.slane %v420, 7
        %v745 = vrot.slane %v744, 2
        %v746 = vrot.slane %v421, 7
        %v747 = vrot.slane %v746, 2
        %v748 = vrot.slane %v422, 7
        %v749 = vrot.slane %v748, 2
        %v750 = vrot.slane %v305, 7
        %v751 = vrot.slane %v750, 2
        %v752 = vrot.slane %v423, 7
        %v753 = vrot.slane %v752, 2
        %v754 = vrot.slane %v424, 7
        %v755 = vrot.slane %v754, 2
        %v756 = vrot.slane %v425, 7
        %v757 = vrot.slane %v756, 2
        %v758 = vrot.slane %v306, 7
        %v759 = vrot.slane %v758, 2
        %v760 = vrot.slane %v426, 7
        %v761 = vrot.slane %v760, 2
        %v762 = vrot.slane %v427, 7
        %v763 = vrot.slane %v762, 2
        %v764 = vrot.slane %v428, 7
        %v765 = vrot.slane %v764, 2
        %v766 = vrot.slane %v307, 7
        %v767 = vrot.slane %v766, 2
        %v768 = vrot.slane %v429, 7
        %v769 = vrot.slane %v768, 2
        %v770 = vrot.slane %v430, 7
        %v771 = vrot.slane %v770, 2
        %v772 = vrot.slane %v431, 7
        %v773 = vrot.slane %v772, 2
        %v774 = vrot.slane %v308, 7
        %v775 = vrot.slane %v774, 2
        %v776 = vrot.slane %v432, 7
        %v777 = vrot.slane %v776, 2
        %v778 = vrot.slane %v433, 7
        %v779 = vrot.slane %v778, 2
        %v780 = vrot.slane %v434, 7
        %v781 = vrot.slane %v780, 2
        %v782 = vrot.slane %v309, 7
        %v783 = vrot.slane %v782, 2
        %v784 = vrot.slane %v435, 7
        %v785 = vrot.slane %v784, 2
        %v786 = vrot.slane %v436, 7
        %v787 = vrot.slane %v786, 2
        %v788 = vrot.slane %v437, 7
        %v789 = vrot.slane %v788, 2
        %v918 = vadd.f32 %v278, %v535
        %v919 = vadd.f32 %v342, %v537
        %v920 = vadd.f32 %v343, %v539
        %v921 = vadd.f32 %v344, %v541
        %v922 = vadd.f32 %v279, %v543
        %v923 = vadd.f32 %v345, %v545
        %v924 = vadd.f32 %v346, %v547
        %v925 = vadd.f32 %v347, %v549
        %v926 = vadd.f32 %v280, %v551
        %v927 = vadd.f32 %v348, %v553
        %v928 = vadd.f32 %v349, %v555
        %v929 = vadd.f32 %v350, %v557
        %v930 = vadd.f32 %v281, %v559
        %v931 = vadd.f32 %v351, %v561
        %v932 = vadd.f32 %v352, %v563
        %v933 = vadd.f32 %v353, %v565
        %v934 = vadd.f32 %v282, %v567
        %v935 = vadd.f32 %v354, %v569
        %v936 = vadd.f32 %v355, %v571
        %v937 = vadd.f32 %v356, %v573
        %v938 = vadd.f32 %v283, %v575
        %v939 = vadd.f32 %v357, %v577
        %v940 = vadd.f32 %v358, %v579
        %v941 = vadd.f32 %v359, %v581
        %v942 = vadd.f32 %v284, %v583
        %v943 = vadd.f32 %v360, %v585
        %v944 = vadd.f32 %v361, %v587
        %v945 = vadd.f32 %v362, %v589
        %v946 = vadd.f32 %v285, %v591
        %v947 = vadd.f32 %v363, %v593
        %v948 = vadd.f32 %v364, %v595
        %v949 = vadd.f32 %v365, %v597
        %v950 = vadd.f32 %v286, %v599
        %v951 = vadd.f32 %v366, %v601
        %v952 = vadd.f32 %v367, %v603
        %v953 = vadd.f32 %v368, %v605
        %v954 = vadd.f32 %v287, %v607
        %v955 = vadd.f32 %v369, %v609
        %v956 = vadd.f32 %v370, %v611
        %v957 = vadd.f32 %v371, %v613
        %v958 = vadd.f32 %v288, %v615
        %v959 = vadd.f32 %v372, %v617
        %v960 = vadd.f32 %v373, %v619
        %v961 = vadd.f32 %v374, %v621
        %v962 = vadd.f32 %v289, %v623
        %v963 = vadd.f32 %v375, %v625
        %v964 = vadd.f32 %v376, %v627
        %v965 = vadd.f32 %v377, %v629
        %v966 = vadd.f32 %v290, %v631
        %v967 = vadd.f32 %v378, %v633
        %v968 = vadd.f32 %v379, %v635
        %v969 = vadd.f32 %v380, %v637
        %v970 = vadd.f32 %v291, %v639
        %v971 = vadd.f32 %v381, %v641
        %v972 = vadd.f32 %v382, %v643
        %v973 = vadd.f32 %v383, %v645
        %v974 = vadd.f32 %v292, %v647
        %v975 = vadd.f32 %v384, %v649
        %v976 = vadd.f32 %v385, %v651
        %v977 = vadd.f32 %v386, %v653
        %v978 = vadd.f32 %v293, %v655
        %v979 = vadd.f32 %v387, %v657
        %v980 = vadd.f32 %v388, %v659
        %v981 = vadd.f32 %v389, %v661
        %v982 = vadd.f32 %v294, %v663
        %v983 = vadd.f32 %v390, %v665
        %v984 = vadd.f32 %v391, %v667
        %v985 = vadd.f32 %v392, %v669
        %v986 = vadd.f32 %v295, %v671
        %v987 = vadd.f32 %v393, %v673
        %v988 = vadd.f32 %v394, %v675
        %v989 = vadd.f32 %v395, %v677
        %v990 = vadd.f32 %v296, %v679
        %v991 = vadd.f32 %v396, %v681
        %v992 = vadd.f32 %v397, %v683
        %v993 = vadd.f32 %v398, %v685
        %v994 = vadd.f32 %v297, %v687
        %v995 = vadd.f32 %v399, %v689
        %v996 = vadd.f32 %v400, %v691
        %v997 = vadd.f32 %v401, %v693
        %v998 = vadd.f32 %v298, %v695
        %v999 = vadd.f32 %v402, %v697
        %v1000 = vadd.f32 %v403, %v699
        %v1001 = vadd.f32 %v404, %v701
        %v1002 = vadd.f32 %v299, %v703
        %v1003 = vadd.f32 %v405, %v705
        %v1004 = vadd.f32 %v406, %v707
        %v1005 = vadd.f32 %v407, %v709
        %v1006 = vadd.f32 %v300, %v711
        %v1007 = vadd.f32 %v408, %v713
        %v1008 = vadd.f32 %v409, %v715
        %v1009 = vadd.f32 %v410, %v717
        %v1010 = vadd.f32 %v301, %v719
        %v1011 = vadd.f32 %v411, %v721
        %v1012 = vadd.f32 %v412, %v723
        %v1013 = vadd.f32 %v413, %v725
        %v1014 = vadd.f32 %v302, %v727
        %v1015 = vadd.f32 %v414, %v729
        %v1016 = vadd.f32 %v415, %v731
        %v1017 = vadd.f32 %v416, %v733
        %v1018 = vadd.f32 %v303, %v735
        %v1019 = vadd.f32 %v417, %v737
        %v1020 = vadd.f32 %v418, %v739
        %v1021 = vadd.f32 %v419, %v741
        %v1022 = vadd.f32 %v304, %v743
        %v1023 = vadd.f32 %v420, %v745
        %v1024 = vadd.f32 %v421, %v747
        %v1025 = vadd.f32 %v422, %v749
        %v1026 = vadd.f32 %v305, %v751
        %v1027 = vadd.f32 %v423, %v753
        %v1028 = vadd.f32 %v424, %v755
        %v1029 = vadd.f32 %v425, %v757
        %v1030 = vadd.f32 %v306, %v759
        %v1031 = vadd.f32 %v426, %v761
        %v1032 = vadd.f32 %v427, %v763
        %v1033 = vadd.f32 %v428, %v765
        %v1034 = vadd.f32 %v307, %v767
        %v1035 = vadd.f32 %v429, %v769
        %v1036 = vadd.f32 %v430, %v771
        %v1037 = vadd.f32 %v431, %v773
        %v1038 = vadd.f32 %v308, %v775
        %v1039 = vadd.f32 %v432, %v777
        %v1040 = vadd.f32 %v433, %v779
        %v1041 = vadd.f32 %v434, %v781
        %v1042 = vadd.f32 %v309, %v783
        %v1043 = vadd.f32 %v435, %v785
        %v1044 = vadd.f32 %v436, %v787
        %v1045 = vadd.f32 %v437, %v789
        %v1046 = vadd.f32 %v918, %v926
        %v1047 = vadd.f32 %v919, %v927
        %v1048 = vadd.f32 %v920, %v928
        %v1049 = vadd.f32 %v921, %v929
        %v1050 = vadd.f32 %v922, %v930
        %v1051 = vadd.f32 %v923, %v931
        %v1052 = vadd.f32 %v924, %v932
        %v1053 = vadd.f32 %v925, %v933
        %v1054 = vadd.f32 %v934, %v942
        %v1055 = vadd.f32 %v935, %v943
        %v1056 = vadd.f32 %v936, %v944
        %v1057 = vadd.f32 %v937, %v945
        %v1058 = vadd.f32 %v938, %v946
        %v1059 = vadd.f32 %v939, %v947
        %v1060 = vadd.f32 %v940, %v948
        %v1061 = vadd.f32 %v941, %v949
        %v1062 = vadd.f32 %v950, %v958
        %v1063 = vadd.f32 %v951, %v959
        %v1064 = vadd.f32 %v952, %v960
        %v1065 = vadd.f32 %v953, %v961
        %v1066 = vadd.f32 %v954, %v962
        %v1067 = vadd.f32 %v955, %v963
        %v1068 = vadd.f32 %v956, %v964
        %v1069 = vadd.f32 %v957, %v965
        %v1070 = vadd.f32 %v966, %v974
        %v1071 = vadd.f32 %v967, %v975
        %v1072 = vadd.f32 %v968, %v976
        %v1073 = vadd.f32 %v969, %v977
        %v1074 = vadd.f32 %v970, %v978
        %v1075 = vadd.f32 %v971, %v979
        %v1076 = vadd.f32 %v972, %v980
        %v1077 = vadd.f32 %v973, %v981
        %v1078 = vadd.f32 %v982, %v990
        %v1079 = vadd.f32 %v983, %v991
        %v1080 = vadd.f32 %v984, %v992
        %v1081 = vadd.f32 %v985, %v993
        %v1082 = vadd.f32 %v986, %v994
        %v1083 = vadd.f32 %v987, %v995
        %v1084 = vadd.f32 %v988, %v996
        %v1085 = vadd.f32 %v989, %v997
        %v1086 = vadd.f32 %v998, %v1006
        %v1087 = vadd.f32 %v999, %v1007
        %v1088 = vadd.f32 %v1000, %v1008
        %v1089 = vadd.f32 %v1001, %v1009
        %v1090 = vadd.f32 %v1002, %v1010
        %v1091 = vadd.f32 %v1003, %v1011
        %v1092 = vadd.f32 %v1004, %v1012
        %v1093 = vadd.f32 %v1005, %v1013
        %v1094 = vadd.f32 %v1014, %v1022
        %v1095 = vadd.f32 %v1015, %v1023
        %v1096 = vadd.f32 %v1016, %v1024
        %v1097 = vadd.f32 %v1017, %v1025
        %v1098 = vadd.f32 %v1018, %v1026
        %v1099 = vadd.f32 %v1019, %v1027
        %v1100 = vadd.f32 %v1020, %v1028
        %v1101 = vadd.f32 %v1021, %v1029
        %v1102 = vadd.f32 %v1030, %v1038
        %v1103 = vadd.f32 %v1031, %v1039
        %v1104 = vadd.f32 %v1032, %v1040
        %v1105 = vadd.f32 %v1033, %v1041
        %v1106 = vadd.f32 %v1034, %v1042
        %v1107 = vadd.f32 %v1035, %v1043
        %v1108 = vadd.f32 %v1036, %v1044
        %v1109 = vadd.f32 %v1037, %v1045
        %v1110 = vpack.c.bf16 %v1046, %v1046
        %v1111 = vpack.c.bf16 %v1047, %v1047
        %v1112 = vpack.c.bf16 %v1048, %v1048
        %v1113 = vpack.c.bf16 %v1049, %v1049
        %v1114 = vpack.c.bf16 %v1050, %v1050
        %v1115 = vpack.c.bf16 %v1051, %v1051
        %v1116 = vpack.c.bf16 %v1052, %v1052
        %v1117 = vpack.c.bf16 %v1053, %v1053
        %v1118 = vpack.c.bf16 %v1054, %v1054
        %v1119 = vpack.c.bf16 %v1055, %v1055
        %v1120 = vpack.c.bf16 %v1056, %v1056
        %v1121 = vpack.c.bf16 %v1057, %v1057
        %v1122 = vpack.c.bf16 %v1058, %v1058
        %v1123 = vpack.c.bf16 %v1059, %v1059
        %v1124 = vpack.c.bf16 %v1060, %v1060
        %v1125 = vpack.c.bf16 %v1061, %v1061
        %v1126 = vpack.c.bf16 %v1062, %v1062
        %v1127 = vpack.c.bf16 %v1063, %v1063
        %v1128 = vpack.c.bf16 %v1064, %v1064
        %v1129 = vpack.c.bf16 %v1065, %v1065
        %v1130 = vpack.c.bf16 %v1066, %v1066
        %v1131 = vpack.c.bf16 %v1067, %v1067
        %v1132 = vpack.c.bf16 %v1068, %v1068
        %v1133 = vpack.c.bf16 %v1069, %v1069
        %v1134 = vpack.c.bf16 %v1070, %v1070
        %v1135 = vpack.c.bf16 %v1071, %v1071
        %v1136 = vpack.c.bf16 %v1072, %v1072
        %v1137 = vpack.c.bf16 %v1073, %v1073
        %v1138 = vpack.c.bf16 %v1074, %v1074
        %v1139 = vpack.c.bf16 %v1075, %v1075
        %v1140 = vpack.c.bf16 %v1076, %v1076
        %v1141 = vpack.c.bf16 %v1077, %v1077
        %v1142 = vpack.c.bf16 %v1078, %v1078
        %v1143 = vpack.c.bf16 %v1079, %v1079
        %v1144 = vpack.c.bf16 %v1080, %v1080
        %v1145 = vpack.c.bf16 %v1081, %v1081
        %v1146 = vpack.c.bf16 %v1082, %v1082
        %v1147 = vpack.c.bf16 %v1083, %v1083
        %v1148 = vpack.c.bf16 %v1084, %v1084
        %v1149 = vpack.c.bf16 %v1085, %v1085
        %v1150 = vpack.c.bf16 %v1086, %v1086
        %v1151 = vpack.c.bf16 %v1087, %v1087
        %v1152 = vpack.c.bf16 %v1088, %v1088
        %v1153 = vpack.c.bf16 %v1089, %v1089
        %v1154 = vpack.c.bf16 %v1090, %v1090
        %v1155 = vpack.c.bf16 %v1091, %v1091
        %v1156 = vpack.c.bf16 %v1092, %v1092
        %v1157 = vpack.c.bf16 %v1093, %v1093
        %v1158 = vpack.c.bf16 %v1094, %v1094
        %v1159 = vpack.c.bf16 %v1095, %v1095
        %v1160 = vpack.c.bf16 %v1096, %v1096
        %v1161 = vpack.c.bf16 %v1097, %v1097
        %v1162 = vpack.c.bf16 %v1098, %v1098
        %v1163 = vpack.c.bf16 %v1099, %v1099
        %v1164 = vpack.c.bf16 %v1100, %v1100
        %v1165 = vpack.c.bf16 %v1101, %v1101
        %v1166 = vpack.c.bf16 %v1102, %v1102
        %v1167 = vpack.c.bf16 %v1103, %v1103
        %v1168 = vpack.c.bf16 %v1104, %v1104
        %v1169 = vpack.c.bf16 %v1105, %v1105
        %v1170 = vpack.c.bf16 %v1106, %v1106
        %v1171 = vpack.c.bf16 %v1107, %v1107
        %v1172 = vpack.c.bf16 %v1108, %v1108
        %v1173 = vpack.c.bf16 %v1109, %v1109
        %v1174 = vld [vmem:[%s5] sm:$0x3]
        %v1175 = vld [vmem:[%s6] sm:$0x1]
        %v1177 = vperm.slane %v1175, 0
        %v1243 = vunpack.c.l.b16 %v1110
        %v1244 = vunpack.c.l.b16 %v1111
        %v1245 = vunpack.c.l.b16 %v1112
        %v1246 = vunpack.c.l.b16 %v1113
        %v1247 = vunpack.c.l.b16 %v1114
        %v1248 = vunpack.c.l.b16 %v1115
        %v1249 = vunpack.c.l.b16 %v1116
        %v1250 = vunpack.c.l.b16 %v1117
        %v1251 = vunpack.c.l.b16 %v1118
        %v1252 = vunpack.c.l.b16 %v1119
        %v1253 = vunpack.c.l.b16 %v1120
        %v1254 = vunpack.c.l.b16 %v1121
        %v1255 = vunpack.c.l.b16 %v1122
        %v1256 = vunpack.c.l.b16 %v1123
        %v1257 = vunpack.c.l.b16 %v1124
        %v1258 = vunpack.c.l.b16 %v1125
        %v1259 = vunpack.c.l.b16 %v1126
        %v1260 = vunpack.c.l.b16 %v1127
        %v1261 = vunpack.c.l.b16 %v1128
        %v1262 = vunpack.c.l.b16 %v1129
        %v1263 = vunpack.c.l.b16 %v1130
        %v1264 = vunpack.c.l.b16 %v1131
        %v1265 = vunpack.c.l.b16 %v1132
        %v1266 = vunpack.c.l.b16 %v1133
        %v1267 = vunpack.c.l.b16 %v1134
        %v1268 = vunpack.c.l.b16 %v1135
        %v1269 = vunpack.c.l.b16 %v1136
        %v1270 = vunpack.c.l.b16 %v1137
        %v1271 = vunpack.c.l.b16 %v1138
        %v1272 = vunpack.c.l.b16 %v1139
        %v1273 = vunpack.c.l.b16 %v1140
        %v1274 = vunpack.c.l.b16 %v1141
        %v1275 = vunpack.c.l.b16 %v1142
        %v1276 = vunpack.c.l.b16 %v1143
        %v1277 = vunpack.c.l.b16 %v1144
        %v1278 = vunpack.c.l.b16 %v1145
        %v1279 = vunpack.c.l.b16 %v1146
        %v1280 = vunpack.c.l.b16 %v1147
        %v1281 = vunpack.c.l.b16 %v1148
        %v1282 = vunpack.c.l.b16 %v1149
        %v1283 = vunpack.c.l.b16 %v1150
        %v1284 = vunpack.c.l.b16 %v1151
        %v1285 = vunpack.c.l.b16 %v1152
        %v1286 = vunpack.c.l.b16 %v1153
        %v1287 = vunpack.c.l.b16 %v1154
        %v1288 = vunpack.c.l.b16 %v1155
        %v1289 = vunpack.c.l.b16 %v1156
        %v1290 = vunpack.c.l.b16 %v1157
        %v1291 = vunpack.c.l.b16 %v1158
        %v1292 = vunpack.c.l.b16 %v1159
        %v1293 = vunpack.c.l.b16 %v1160
        %v1294 = vunpack.c.l.b16 %v1161
        %v1295 = vunpack.c.l.b16 %v1162
        %v1296 = vunpack.c.l.b16 %v1163
        %v1297 = vunpack.c.l.b16 %v1164
        %v1298 = vunpack.c.l.b16 %v1165
        %v1299 = vunpack.c.l.b16 %v1166
        %v1300 = vunpack.c.l.b16 %v1167
        %v1301 = vunpack.c.l.b16 %v1168
        %v1302 = vunpack.c.l.b16 %v1169
        %v1303 = vunpack.c.l.b16 %v1170
        %v1304 = vunpack.c.l.b16 %v1171
        %v1305 = vunpack.c.l.b16 %v1172
        %v1306 = vunpack.c.l.b16 %v1173
        %v1307 = vrot.slane %v1244, 7
        %vm1308 = vcmask 1041409
        %v1309 = vsel %vm1308, %v1307, %v1243
        %v1310 = vrot.slane %v1245, 6
        %vm1311 = vcmask 1042434
        %v1312 = vsel %vm1311, %v1310, %v1309
        %v1313 = vrot.slane %v1246, 5
        %vm1314 = vcmask 1043459
        %v1315 = vsel %vm1314, %v1313, %v1312
        %v1316 = vrot.slane %v1247, 4
        %vm1317 = vcmask 1044484
        %v1318 = vsel %vm1317, %v1316, %v1315
        %v1319 = vrot.slane %v1248, 3
        %vm1320 = vcmask 1045509
        %v1321 = vsel %vm1320, %v1319, %v1318
        %v1322 = vrot.slane %v1249, 2
        %vm1323 = vcmask 1046534
        %v1324 = vsel %vm1323, %v1322, %v1321
        %v1325 = vrot.slane %v1250, 1
        %vm1326 = vcmask 1047559
        %v1327 = vsel %vm1326, %v1325, %v1324
        %v1328 = vrot.slane %v1252, 7
        %v1329 = vsel %vm1308, %v1328, %v1251
        %v1330 = vrot.slane %v1253, 6
        %v1331 = vsel %vm1311, %v1330, %v1329
        %v1332 = vrot.slane %v1254, 5
        %v1333 = vsel %vm1314, %v1332, %v1331
        %v1334 = vrot.slane %v1255, 4
        %v1335 = vsel %vm1317, %v1334, %v1333
        %v1336 = vrot.slane %v1256, 3
        %v1337 = vsel %vm1320, %v1336, %v1335
        %v1338 = vrot.slane %v1257, 2
        %v1339 = vsel %vm1323, %v1338, %v1337
        %v1340 = vrot.slane %v1258, 1
        %v1341 = vsel %vm1326, %v1340, %v1339
        %v1342 = vrot.slane %v1260, 7
        %v1343 = vsel %vm1308, %v1342, %v1259
        %v1344 = vrot.slane %v1261, 6
        %v1345 = vsel %vm1311, %v1344, %v1343
        %v1346 = vrot.slane %v1262, 5
        %v1347 = vsel %vm1314, %v1346, %v1345
        %v1348 = vrot.slane %v1263, 4
        %v1349 = vsel %vm1317, %v1348, %v1347
        %v1350 = vrot.slane %v1264, 3
        %v1351 = vsel %vm1320, %v1350, %v1349
        %v1352 = vrot.slane %v1265, 2
        %v1353 = vsel %vm1323, %v1352, %v1351
        %v1354 = vrot.slane %v1266, 1
        %v1355 = vsel %vm1326, %v1354, %v1353
        %v1356 = vrot.slane %v1268, 7
        %v1357 = vsel %vm1308, %v1356, %v1267
        %v1358 = vrot.slane %v1269, 6
        %v1359 = vsel %vm1311, %v1358, %v1357
        %v1360 = vrot.slane %v1270, 5
        %v1361 = vsel %vm1314, %v1360, %v1359
        %v1362 = vrot.slane %v1271, 4
        %v1363 = vsel %vm1317, %v1362, %v1361
        %v1364 = vrot.slane %v1272, 3
        %v1365 = vsel %vm1320, %v1364, %v1363
        %v1366 = vrot.slane %v1273, 2
        %v1367 = vsel %vm1323, %v1366, %v1365
        %v1368 = vrot.slane %v1274, 1
        %v1369 = vsel %vm1326, %v1368, %v1367
        %v1370 = vrot.slane %v1276, 7
        %v1371 = vsel %vm1308, %v1370, %v1275
        %v1372 = vrot.slane %v1277, 6
        %v1373 = vsel %vm1311, %v1372, %v1371
        %v1374 = vrot.slane %v1278, 5
        %v1375 = vsel %vm1314, %v1374, %v1373
        %v1376 = vrot.slane %v1279, 4
        %v1377 = vsel %vm1317, %v1376, %v1375
        %v1378 = vrot.slane %v1280, 3
        %v1379 = vsel %vm1320, %v1378, %v1377
        %v1380 = vrot.slane %v1281, 2
        %v1381 = vsel %vm1323, %v1380, %v1379
        %v1382 = vrot.slane %v1282, 1
        %v1383 = vsel %vm1326, %v1382, %v1381
        %v1384 = vrot.slane %v1284, 7
        %v1385 = vsel %vm1308, %v1384, %v1283
        %v1386 = vrot.slane %v1285, 6
        %v1387 = vsel %vm1311, %v1386, %v1385
        %v1388 = vrot.slane %v1286, 5
        %v1389 = vsel %vm1314, %v1388, %v1387
        %v1390 = vrot.slane %v1287, 4
        %v1391 = vsel %vm1317, %v1390, %v1389
        %v1392 = vrot.slane %v1288, 3
        %v1393 = vsel %vm1320, %v1392, %v1391
        %v1394 = vrot.slane %v1289, 2
        %v1395 = vsel %vm1323, %v1394, %v1393
        %v1396 = vrot.slane %v1290, 1
        %v1397 = vsel %vm1326, %v1396, %v1395
        %v1398 = vrot.slane %v1292, 7
        %v1399 = vsel %vm1308, %v1398, %v1291
        %v1400 = vrot.slane %v1293, 6
        %v1401 = vsel %vm1311, %v1400, %v1399
        %v1402 = vrot.slane %v1294, 5
        %v1403 = vsel %vm1314, %v1402, %v1401
        %v1404 = vrot.slane %v1295, 4
        %v1405 = vsel %vm1317, %v1404, %v1403
        %v1406 = vrot.slane %v1296, 3
        %v1407 = vsel %vm1320, %v1406, %v1405
        %v1408 = vrot.slane %v1297, 2
        %v1409 = vsel %vm1323, %v1408, %v1407
        %v1410 = vrot.slane %v1298, 1
        %v1411 = vsel %vm1326, %v1410, %v1409
        %v1412 = vrot.slane %v1300, 7
        %v1413 = vsel %vm1308, %v1412, %v1299
        %v1414 = vrot.slane %v1301, 6
        %v1415 = vsel %vm1311, %v1414, %v1413
        %v1416 = vrot.slane %v1302, 5
        %v1417 = vsel %vm1314, %v1416, %v1415
        %v1418 = vrot.slane %v1303, 4
        %v1419 = vsel %vm1317, %v1418, %v1417
        %v1420 = vrot.slane %v1304, 3
        %v1421 = vsel %vm1320, %v1420, %v1419
        %v1422 = vrot.slane %v1305, 2
        %v1423 = vsel %vm1323, %v1422, %v1421
        %v1424 = vrot.slane %v1306, 1
        %v1425 = vsel %vm1326, %v1424, %v1423
        %v1426 = vpack.c.b16 %v1341, %v1327
        %v1427 = vpack.c.b16 %v1369, %v1355
        %v1428 = vpack.c.b16 %v1397, %v1383
        %v1429 = vpack.c.b16 %v1425, %v1411
        %vm1430 = vcmask 31744
        %v1432 = vsel %vm1430, %v1426, 0
        %v1435 = vsel %vm1430, %v1427, 0
        %v1438 = vsel %vm1430, %v1428, 0
        %v1441 = vsel %vm1430, %v1429, 0
        %vm1443 = vcmask 1041408
        %v1445 = vsel %vm1443, %v1174, 0
        %1447 = vmatpush.bf16.msra.mxu0 0
        %1448 = vmatpush.bf16.msra.mxu0 0
        %1449 = vmatpush.bf16.msra.mxu0 0
        %1450 = vmatpush.bf16.msra.mxu0 0
        %1451 = vmatpush.bf16.msra.mxu0 0
        %1452 = vmatpush.bf16.msra.mxu0 0
        %1453 = vmatpush.bf16.msra.mxu0 0
        %1454 = vmatpush.bf16.msra.mxu0 %v1445
        %1455 = vmatmul.bf16.gmra.mxu0 %v1432
        %v1456 = vpop.f32.mrf.mxu0
        %v1457 = vadd.f32 %v1177, %v1456
        %v1458 = vpop.f32.mrf.mxu0
        %v1459 = vadd.f32 %v1177, %v1458
        %1460 = vmatmul.bf16.gmra.mxu0 %v1435
        %v1461 = vpop.f32.mrf.mxu0
        %v1462 = vadd.f32 %v1177, %v1461
        %v1463 = vpop.f32.mrf.mxu0
        %v1464 = vadd.f32 %v1177, %v1463
        %1465 = vmatmul.bf16.gmra.mxu0 %v1438
        %v1466 = vpop.f32.mrf.mxu0
        %v1467 = vadd.f32 %v1177, %v1466
        %v1468 = vpop.f32.mrf.mxu0
        %v1469 = vadd.f32 %v1177, %v1468
        %1470 = vmatmul.bf16.gmra.mxu0 %v1441
        %v1471 = vpop.f32.mrf.mxu0
        %v1472 = vadd.f32 %v1177, %v1471
        %v1473 = vpop.f32.mrf.mxu0
        %v1474 = vadd.f32 %v1177, %v1473
        %1475 = vdwg.mxu0
        %1476 = vst.msk [vmem:[#allocation2] sm:$0xff] %vm1430, 0.0
        %1477 = vst.msk [vmem:[#allocation2 + $0x8] sm:$0xff] %vm1430, 0.0
        %vm1478 = vcmask 25600
        %1479 = vst.msk [vmem:[#allocation2 + $0x10] sm:$0x3] %vm1478, 0.0
        %s1480 = scalar_lea.vmem [#allocation2], 408
        %1481 = vst.msk [vmem:[%s1480] sm:$0xff] %vm1430, 0.0
        %1482 = vst.msk [vmem:[%s1480 + $0x8] sm:$0xff] %vm1430, 0.0
        %1483 = vst.msk [vmem:[%s1480 + $0x10] sm:$0x3] %vm1478, 0.0
        %vm1484 = vcmask 24576
        %1485 = vst.msk [vmem:[#allocation2] sm:$0x1] %vm1484, 0.0
        %1486 = vst.msk [vmem:[#allocation2 + $0x18] sm:$0x1] %vm1484, 0.0
        %1487 = vst.msk [vmem:[#allocation2 + $0x30] sm:$0x1] %vm1484, 0.0
        %1488 = vst.msk [vmem:[#allocation2 + $0x48] sm:$0x1] %vm1484, 0.0
        %1489 = vst.msk [vmem:[#allocation2 + $0x60] sm:$0x1] %vm1484, 0.0
        %1490 = vst.msk [vmem:[#allocation2 + $0x78] sm:$0x1] %vm1484, 0.0
        %1491 = vst.msk [vmem:[#allocation2 + $0x90] sm:$0x1] %vm1484, 0.0
        %1492 = vst.msk [vmem:[#allocation2 + $0xa8] sm:$0x1] %vm1484, 0.0
        %1493 = vst.msk [vmem:[#allocation2 + $0xc0] sm:$0x1] %vm1484, 0.0
        %1494 = vst.msk [vmem:[#allocation2 + $0xd8] sm:$0x1] %vm1484, 0.0
        %1495 = vst.msk [vmem:[#allocation2 + $0xf0] sm:$0x1] %vm1484, 0.0
        %1496 = vst.msk [vmem:[#allocation2 + $0x108] sm:$0x1] %vm1484, 0.0
        %1497 = vst.msk [vmem:[#allocation2 + $0x120] sm:$0x1] %vm1484, 0.0
        %1498 = vst.msk [vmem:[#allocation2 + $0x138] sm:$0x1] %vm1484, 0.0
        %1499 = vst.msk [vmem:[#allocation2 + $0x150] sm:$0x1] %vm1484, 0.0
        %1500 = vst.msk [vmem:[#allocation2 + $0x168] sm:$0x1] %vm1484, 0.0
        %1501 = vst.msk [vmem:[#allocation2 + $0x180] sm:$0x1] %vm1484, 0.0
        %1502 = vst.msk [vmem:[#allocation2 + $0x198] sm:$0x1] %vm1484, 0.0
        %1503 = vst.msk [vmem:[#allocation2 + $0x11] sm:$0x1] %vm1484, 0.0
        %1504 = vst.msk [vmem:[#allocation2 + $0x29] sm:$0x1] %vm1484, 0.0
        %1505 = vst.msk [vmem:[#allocation2 + $0x41] sm:$0x1] %vm1484, 0.0
        %1506 = vst.msk [vmem:[#allocation2 + $0x59] sm:$0x1] %vm1484, 0.0
        %1507 = vst.msk [vmem:[#allocation2 + $0x71] sm:$0x1] %vm1484, 0.0
        %1508 = vst.msk [vmem:[#allocation2 + $0x89] sm:$0x1] %vm1484, 0.0
        %1509 = vst.msk [vmem:[#allocation2 + $0xa1] sm:$0x1] %vm1484, 0.0
        %1510 = vst.msk [vmem:[#allocation2 + $0xb9] sm:$0x1] %vm1484, 0.0
        %1511 = vst.msk [vmem:[#allocation2 + $0xd1] sm:$0x1] %vm1484, 0.0
        %1512 = vst.msk [vmem:[#allocation2 + $0xe9] sm:$0x1] %vm1484, 0.0
        %1513 = vst.msk [vmem:[#allocation2 + $0x101] sm:$0x1] %vm1484, 0.0
        %1514 = vst.msk [vmem:[#allocation2 + $0x119] sm:$0x1] %vm1484, 0.0
        %1515 = vst.msk [vmem:[#allocation2 + $0x131] sm:$0x1] %vm1484, 0.0
        %1516 = vst.msk [vmem:[#allocation2 + $0x149] sm:$0x1] %vm1484, 0.0
        %1517 = vst.msk [vmem:[#allocation2 + $0x161] sm:$0x1] %vm1484, 0.0
        %1518 = vst.msk [vmem:[#allocation2 + $0x179] sm:$0x1] %vm1484, 0.0
        %1519 = vst.msk [vmem:[#allocation2 + $0x191] sm:$0x1] %vm1484, 0.0
        %1520 = vst.msk [vmem:[#allocation2 + $0x1a9] sm:$0x1] %vm1484, 0.0
        %s1521 = scalar_lea.vmem [#allocation2], 24
        %1522 = vst.msk [vmem:[%s1521 + $0x1] sm:$0xff] %vm1430, %v278
        %1523 = vst.msk [vmem:[%s1521 + $0x9] sm:$0xff] %vm1430, %v279
        %1524 = vst.msk [vmem:[%s1521 + $0x19] sm:$0xff] %vm1430, %v280
        %1525 = vst.msk [vmem:[%s1521 + $0x21] sm:$0xff] %vm1430, %v281
        %1526 = vst.msk [vmem:[%s1521 + $0x31] sm:$0xff] %vm1430, %v282
        %1527 = vst.msk [vmem:[%s1521 + $0x39] sm:$0xff] %vm1430, %v283
        %1528 = vst.msk [vmem:[%s1521 + $0x49] sm:$0xff] %vm1430, %v284
        %1529 = vst.msk [vmem:[%s1521 + $0x51] sm:$0xff] %vm1430, %v285
        %1530 = vst.msk [vmem:[%s1521 + $0x61] sm:$0xff] %vm1430, %v286
        %1531 = vst.msk [vmem:[%s1521 + $0x69] sm:$0xff] %vm1430, %v287
        %1532 = vst.msk [vmem:[%s1521 + $0x79] sm:$0xff] %vm1430, %v288
        %1533 = vst.msk [vmem:[%s1521 + $0x81] sm:$0xff] %vm1430, %v289
        %1534 = vst.msk [vmem:[%s1521 + $0x91] sm:$0xff] %vm1430, %v290
        %1535 = vst.msk [vmem:[%s1521 + $0x99] sm:$0xff] %vm1430, %v291
        %1536 = vst.msk [vmem:[%s1521 + $0xa9] sm:$0xff] %vm1430, %v292
        %1537 = vst.msk [vmem:[%s1521 + $0xb1] sm:$0xff] %vm1430, %v293
        %1538 = vst.msk [vmem:[%s1521 + $0xc1] sm:$0xff] %vm1430, %v294
        %1539 = vst.msk [vmem:[%s1521 + $0xc9] sm:$0xff] %vm1430, %v295
        %1540 = vst.msk [vmem:[%s1521 + $0xd9] sm:$0xff] %vm1430, %v296
        %1541 = vst.msk [vmem:[%s1521 + $0xe1] sm:$0xff] %vm1430, %v297
        %1542 = vst.msk [vmem:[%s1521 + $0xf1] sm:$0xff] %vm1430, %v298
        %1543 = vst.msk [vmem:[%s1521 + $0xf9] sm:$0xff] %vm1430, %v299
        %1544 = vst.msk [vmem:[%s1521 + $0x109] sm:$0xff] %vm1430, %v300
        %1545 = vst.msk [vmem:[%s1521 + $0x111] sm:$0xff] %vm1430, %v301
        %1546 = vst.msk [vmem:[%s1521 + $0x121] sm:$0xff] %vm1430, %v302
        %1547 = vst.msk [vmem:[%s1521 + $0x129] sm:$0xff] %vm1430, %v303
        %1548 = vst.msk [vmem:[%s1521 + $0x139] sm:$0xff] %vm1430, %v304
        %1549 = vst.msk [vmem:[%s1521 + $0x141] sm:$0xff] %vm1430, %v305
        %1550 = vst.msk [vmem:[%s1521 + $0x151] sm:$0xff] %vm1430, %v306
        %1551 = vst.msk [vmem:[%s1521 + $0x159] sm:$0xff] %vm1430, %v307
        %1552 = vst.msk [vmem:[%s1521 + $0x169] sm:$0xff] %vm1430, %v308
        %1553 = vst.msk [vmem:[%s1521 + $0x171] sm:$0xff] %vm1430, %v309
        %v1554 = vld [vmem:[#allocation2] sm:$0xff]
        %v1555 = vld [vmem:[#allocation2 + $0x8] sm:$0xff]
        %v1556 = vld [vmem:[#allocation2 + $0x10] sm:$0x3]
        %v1557 = vld [vmem:[#allocation2 + $0x18] sm:$0xff]
        %v1558 = vld [vmem:[#allocation2 + $0x20] sm:$0xff]
        %v1559 = vld [vmem:[#allocation2 + $0x28] sm:$0x3]
        %v1560 = vld [vmem:[#allocation2 + $0x30] sm:$0xff]
        %v1561 = vld [vmem:[#allocation2 + $0x38] sm:$0xff]
        %v1562 = vld [vmem:[#allocation2 + $0x40] sm:$0x3]
        %v1563 = vld [vmem:[#allocation2 + $0x48] sm:$0xff]
        %v1564 = vld [vmem:[#allocation2 + $0x50] sm:$0xff]
        %v1565 = vld [vmem:[#allocation2 + $0x58] sm:$0x3]
        %v1566 = vld [vmem:[#allocation2 + $0x60] sm:$0xff]
        %v1567 = vld [vmem:[#allocation2 + $0x68] sm:$0xff]
        %v1568 = vld [vmem:[#allocation2 + $0x70] sm:$0x3]
        %v1569 = vld [vmem:[#allocation2 + $0x78] sm:$0xff]
        %v1570 = vld [vmem:[#allocation2 + $0x80] sm:$0xff]
        %v1571 = vld [vmem:[#allocation2 + $0x88] sm:$0x3]
        %v1572 = vld [vmem:[#allocation2 + $0x90] sm:$0xff]
        %v1573 = vld [vmem:[#allocation2 + $0x98] sm:$0xff]
        %v1574 = vld [vmem:[#allocation2 + $0xa0] sm:$0x3]
        %v1575 = vld [vmem:[#allocation2 + $0xa8] sm:$0xff]
        %v1576 = vld [vmem:[#allocation2 + $0xb0] sm:$0xff]
        %v1577 = vld [vmem:[#allocation2 + $0xb8] sm:$0x3]
        %v1578 = vld [vmem:[#allocation2 + $0xc0] sm:$0xff]
        %v1579 = vld [vmem:[#allocation2 + $0xc8] sm:$0xff]
        %v1580 = vld [vmem:[#allocation2 + $0xd0] sm:$0x3]
        %v1581 = vld [vmem:[#allocation2 + $0xd8] sm:$0xff]
        %v1582 = vld [vmem:[#allocation2 + $0xe0] sm:$0xff]
        %v1583 = vld [vmem:[#allocation2 + $0xe8] sm:$0x3]
        %v1584 = vld [vmem:[#allocation2 + $0xf0] sm:$0xff]
        %v1585 = vld [vmem:[#allocation2 + $0xf8] sm:$0xff]
        %v1586 = vld [vmem:[#allocation2 + $0x100] sm:$0x3]
        %v1587 = vld [vmem:[#allocation2 + $0x108] sm:$0xff]
        %v1588 = vld [vmem:[#allocation2 + $0x110] sm:$0xff]
        %v1589 = vld [vmem:[#allocation2 + $0x118] sm:$0x3]
        %v1590 = vld [vmem:[#allocation2 + $0x120] sm:$0xff]
        %v1591 = vld [vmem:[#allocation2 + $0x128] sm:$0xff]
        %v1592 = vld [vmem:[#allocation2 + $0x130] sm:$0x3]
        %v1593 = vld [vmem:[#allocation2 + $0x138] sm:$0xff]
        %v1594 = vld [vmem:[#allocation2 + $0x140] sm:$0xff]
        %v1595 = vld [vmem:[#allocation2 + $0x148] sm:$0x3]
        %v1596 = vld [vmem:[#allocation2 + $0x150] sm:$0xff]
        %v1597 = vld [vmem:[#allocation2 + $0x158] sm:$0xff]
        %v1598 = vld [vmem:[#allocation2 + $0x160] sm:$0x3]
        %v1599 = vld [vmem:[#allocation2 + $0x168] sm:$0xff]
        %v1600 = vld [vmem:[#allocation2 + $0x170] sm:$0xff]
        %v1601 = vld [vmem:[#allocation2 + $0x178] sm:$0x3]
        %v1602 = vld [vmem:[#allocation2 + $0x180] sm:$0xff]
        %v1603 = vld [vmem:[#allocation2 + $0x188] sm:$0xff]
        %v1604 = vld [vmem:[#allocation2 + $0x190] sm:$0x3]
        %v1605 = vld [vmem:[#allocation2 + $0x198] sm:$0xff]
        %v1606 = vld [vmem:[#allocation2 + $0x1a0] sm:$0xff]
        %v1607 = vld [vmem:[#allocation2 + $0x1a8] sm:$0x3]
        %vm1656 = vcmask 1046528
        %v1657 = vrot.slane %v1554, 1
        %v1658 = vrot.slane %v1555, 1
        %v1659 = vsel %vm1656, %v1657, %v1658
        %v1660 = vrot.slane %v1556, 1
        %v1661 = vsel %vm1656, %v1658, %v1660
        %v1662 = vrot.slane %v1557, 1
        %v1663 = vrot.slane %v1558, 1
        %v1664 = vsel %vm1656, %v1662, %v1663
        %v1665 = vrot.slane %v1559, 1
        %v1666 = vsel %vm1656, %v1663, %v1665
        %v1667 = vrot.slane %v1560, 1
        %v1668 = vrot.slane %v1561, 1
        %v1669 = vsel %vm1656, %v1667, %v1668
        %v1670 = vrot.slane %v1562, 1
        %v1671 = vsel %vm1656, %v1668, %v1670
        %v1672 = vrot.slane %v1563, 1
        %v1673 = vrot.slane %v1564, 1
        %v1674 = vsel %vm1656, %v1672, %v1673
        %v1675 = vrot.slane %v1565, 1
        %v1676 = vsel %vm1656, %v1673, %v1675
        %v1677 = vrot.slane %v1566, 1
        %v1678 = vrot.slane %v1567, 1
        %v1679 = vsel %vm1656, %v1677, %v1678
        %v1680 = vrot.slane %v1568, 1
        %v1681 = vsel %vm1656, %v1678, %v1680
        %v1682 = vrot.slane %v1569, 1
        %v1683 = vrot.slane %v1570, 1
        %v1684 = vsel %vm1656, %v1682, %v1683
        %v1685 = vrot.slane %v1571, 1
        %v1686 = vsel %vm1656, %v1683, %v1685
        %v1687 = vrot.slane %v1572, 1
        %v1688 = vrot.slane %v1573, 1
        %v1689 = vsel %vm1656, %v1687, %v1688
        %v1690 = vrot.slane %v1574, 1
        %v1691 = vsel %vm1656, %v1688, %v1690
        %v1692 = vrot.slane %v1575, 1
        %v1693 = vrot.slane %v1576, 1
        %v1694 = vsel %vm1656, %v1692, %v1693
        %v1695 = vrot.slane %v1577, 1
        %v1696 = vsel %vm1656, %v1693, %v1695
        %v1697 = vrot.slane %v1578, 1
        %v1698 = vrot.slane %v1579, 1
        %v1699 = vsel %vm1656, %v1697, %v1698
        %v1700 = vrot.slane %v1580, 1
        %v1701 = vsel %vm1656, %v1698, %v1700
        %v1702 = vrot.slane %v1581, 1
        %v1703 = vrot.slane %v1582, 1
        %v1704 = vsel %vm1656, %v1702, %v1703
        %v1705 = vrot.slane %v1583, 1
        %v1706 = vsel %vm1656, %v1703, %v1705
        %v1707 = vrot.slane %v1584, 1
        %v1708 = vrot.slane %v1585, 1
        %v1709 = vsel %vm1656, %v1707, %v1708
        %v1710 = vrot.slane %v1586, 1
        %v1711 = vsel %vm1656, %v1708, %v1710
        %v1712 = vrot.slane %v1587, 1
        %v1713 = vrot.slane %v1588, 1
        %v1714 = vsel %vm1656, %v1712, %v1713
        %v1715 = vrot.slane %v1589, 1
        %v1716 = vsel %vm1656, %v1713, %v1715
        %v1717 = vrot.slane %v1590, 1
        %v1718 = vrot.slane %v1591, 1
        %v1719 = vsel %vm1656, %v1717, %v1718
        %v1720 = vrot.slane %v1592, 1
        %v1721 = vsel %vm1656, %v1718, %v1720
        %v1722 = vrot.slane %v1593, 1
        %v1723 = vrot.slane %v1594, 1
        %v1724 = vsel %vm1656, %v1722, %v1723
        %v1725 = vrot.slane %v1595, 1
        %v1726 = vsel %vm1656, %v1723, %v1725
        %v1727 = vrot.slane %v1596, 1
        %v1728 = vrot.slane %v1597, 1
        %v1729 = vsel %vm1656, %v1727, %v1728
        %v1730 = vrot.slane %v1598, 1
        %v1731 = vsel %vm1656, %v1728, %v1730
        %v1732 = vrot.slane %v1599, 1
        %v1733 = vrot.slane %v1600, 1
        %v1734 = vsel %vm1656, %v1732, %v1733
        %v1735 = vrot.slane %v1601, 1
        %v1736 = vsel %vm1656, %v1733, %v1735
        %1737 = vrot.lane.b32.xlu0 %v1659, 4
        %v1738 = vpop.permute.xlu0 %1737
        %1739 = vrot.lane.b32.xlu0 %v1661, 4
        %v1740 = vpop.permute.xlu0 %1739
        %1741 = vrot.lane.b32.xlu0 %v1664, 4
        %v1742 = vpop.permute.xlu0 %1741
        %1743 = vrot.lane.b32.xlu0 %v1666, 4
        %v1744 = vpop.permute.xlu0 %1743
        %1745 = vrot.lane.b32.xlu0 %v1669, 4
        %v1746 = vpop.permute.xlu0 %1745
        %1747 = vrot.lane.b32.xlu0 %v1671, 4
        %v1748 = vpop.permute.xlu0 %1747
        %1749 = vrot.lane.b32.xlu0 %v1674, 4
        %v1750 = vpop.permute.xlu0 %1749
        %1751 = vrot.lane.b32.xlu0 %v1676, 4
        %v1752 = vpop.permute.xlu0 %1751
        %1753 = vrot.lane.b32.xlu0 %v1679, 4
        %v1754 = vpop.permute.xlu0 %1753
        %1755 = vrot.lane.b32.xlu0 %v1681, 4
        %v1756 = vpop.permute.xlu0 %1755
        %1757 = vrot.lane.b32.xlu0 %v1684, 4
        %v1758 = vpop.permute.xlu0 %1757
        %1759 = vrot.lane.b32.xlu0 %v1686, 4
        %v1760 = vpop.permute.xlu0 %1759
        %1761 = vrot.lane.b32.xlu0 %v1689, 4
        %v1762 = vpop.permute.xlu0 %1761
        %1763 = vrot.lane.b32.xlu0 %v1691, 4
        %v1764 = vpop.permute.xlu0 %1763
        %1765 = vrot.lane.b32.xlu0 %v1694, 4
        %v1766 = vpop.permute.xlu0 %1765
        %1767 = vrot.lane.b32.xlu0 %v1696, 4
        %v1768 = vpop.permute.xlu0 %1767
        %1769 = vrot.lane.b32.xlu0 %v1699, 4
        %v1770 = vpop.permute.xlu0 %1769
        %1771 = vrot.lane.b32.xlu0 %v1701, 4
        %v1772 = vpop.permute.xlu0 %1771
        %1773 = vrot.lane.b32.xlu0 %v1704, 4
        %v1774 = vpop.permute.xlu0 %1773
        %1775 = vrot.lane.b32.xlu0 %v1706, 4
        %v1776 = vpop.permute.xlu0 %1775
        %1777 = vrot.lane.b32.xlu0 %v1709, 4
        %v1778 = vpop.permute.xlu0 %1777
        %1779 = vrot.lane.b32.xlu0 %v1711, 4
        %v1780 = vpop.permute.xlu0 %1779
        %1781 = vrot.lane.b32.xlu0 %v1714, 4
        %v1782 = vpop.permute.xlu0 %1781
        %1783 = vrot.lane.b32.xlu0 %v1716, 4
        %v1784 = vpop.permute.xlu0 %1783
        %1785 = vrot.lane.b32.xlu0 %v1719, 4
        %v1786 = vpop.permute.xlu0 %1785
        %1787 = vrot.lane.b32.xlu0 %v1721, 4
        %v1788 = vpop.permute.xlu0 %1787
        %1789 = vrot.lane.b32.xlu0 %v1724, 4
        %v1790 = vpop.permute.xlu0 %1789
        %1791 = vrot.lane.b32.xlu0 %v1726, 4
        %v1792 = vpop.permute.xlu0 %1791
        %1793 = vrot.lane.b32.xlu0 %v1729, 4
        %v1794 = vpop.permute.xlu0 %1793
        %1795 = vrot.lane.b32.xlu0 %v1731, 4
        %v1796 = vpop.permute.xlu0 %1795
        %1797 = vrot.lane.b32.xlu0 %v1734, 4
        %v1798 = vpop.permute.xlu0 %1797
        %1799 = vrot.lane.b32.xlu0 %v1736, 4
        %v1800 = vpop.permute.xlu0 %1799
        %vm1833 = vcmask 1045504
        %v1834 = vrot.slane %v1554, 2
        %v1835 = vrot.slane %v1555, 2
        %v1836 = vsel %vm1833, %v1834, %v1835
        %v1837 = vrot.slane %v1556, 2
        %v1838 = vsel %vm1833, %v1835, %v1837
        %v1839 = vrot.slane %v1557, 2
        %v1840 = vrot.slane %v1558, 2
        %v1841 = vsel %vm1833, %v1839, %v1840
        %v1842 = vrot.slane %v1559, 2
        %v1843 = vsel %vm1833, %v1840, %v1842
        %v1844 = vrot.slane %v1560, 2
        %v1845 = vrot.slane %v1561, 2
        %v1846 = vsel %vm1833, %v1844, %v1845
        %v1847 = vrot.slane %v1562, 2
        %v1848 = vsel %vm1833, %v1845, %v1847
        %v1849 = vrot.slane %v1563, 2
        %v1850 = vrot.slane %v1564, 2
        %v1851 = vsel %vm1833, %v1849, %v1850
        %v1852 = vrot.slane %v1565, 2
        %v1853 = vsel %vm1833, %v1850, %v1852
        %v1854 = vrot.slane %v1566, 2
        %v1855 = vrot.slane %v1567, 2
        %v1856 = vsel %vm1833, %v1854, %v1855
        %v1857 = vrot.slane %v1568, 2
        %v1858 = vsel %vm1833, %v1855, %v1857
        %v1859 = vrot.slane %v1569, 2
        %v1860 = vrot.slane %v1570, 2
        %v1861 = vsel %vm1833, %v1859, %v1860
        %v1862 = vrot.slane %v1571, 2
        %v1863 = vsel %vm1833, %v1860, %v1862
        %v1864 = vrot.slane %v1572, 2
        %v1865 = vrot.slane %v1573, 2
        %v1866 = vsel %vm1833, %v1864, %v1865
        %v1867 = vrot.slane %v1574, 2
        %v1868 = vsel %vm1833, %v1865, %v1867
        %v1869 = vrot.slane %v1575, 2
        %v1870 = vrot.slane %v1576, 2
        %v1871 = vsel %vm1833, %v1869, %v1870
        %v1872 = vrot.slane %v1577, 2
        %v1873 = vsel %vm1833, %v1870, %v1872
        %v1874 = vrot.slane %v1578, 2
        %v1875 = vrot.slane %v1579, 2
        %v1876 = vsel %vm1833, %v1874, %v1875
        %v1877 = vrot.slane %v1580, 2
        %v1878 = vsel %vm1833, %v1875, %v1877
        %v1879 = vrot.slane %v1581, 2
        %v1880 = vrot.slane %v1582, 2
        %v1881 = vsel %vm1833, %v1879, %v1880
        %v1882 = vrot.slane %v1583, 2
        %v1883 = vsel %vm1833, %v1880, %v1882
        %v1884 = vrot.slane %v1584, 2
        %v1885 = vrot.slane %v1585, 2
        %v1886 = vsel %vm1833, %v1884, %v1885
        %v1887 = vrot.slane %v1586, 2
        %v1888 = vsel %vm1833, %v1885, %v1887
        %v1889 = vrot.slane %v1587, 2
        %v1890 = vrot.slane %v1588, 2
        %v1891 = vsel %vm1833, %v1889, %v1890
        %v1892 = vrot.slane %v1589, 2
        %v1893 = vsel %vm1833, %v1890, %v1892
        %v1894 = vrot.slane %v1590, 2
        %v1895 = vrot.slane %v1591, 2
        %v1896 = vsel %vm1833, %v1894, %v1895
        %v1897 = vrot.slane %v1592, 2
        %v1898 = vsel %vm1833, %v1895, %v1897
        %v1899 = vrot.slane %v1593, 2
        %v1900 = vrot.slane %v1594, 2
        %v1901 = vsel %vm1833, %v1899, %v1900
        %v1902 = vrot.slane %v1595, 2
        %v1903 = vsel %vm1833, %v1900, %v1902
        %v1904 = vrot.slane %v1596, 2
        %v1905 = vrot.slane %v1597, 2
        %v1906 = vsel %vm1833, %v1904, %v1905
        %v1907 = vrot.slane %v1598, 2
        %v1908 = vsel %vm1833, %v1905, %v1907
        %v1909 = vrot.slane %v1599, 2
        %v1910 = vrot.slane %v1600, 2
        %v1911 = vsel %vm1833, %v1909, %v1910
        %v1912 = vrot.slane %v1601, 2
        %v1913 = vsel %vm1833, %v1910, %v1912
        %1914 = vrot.lane.b32.xlu0 %v1836, 8
        %v1915 = vpop.permute.xlu0 %1914
        %1916 = vrot.lane.b32.xlu0 %v1838, 8
        %v1917 = vpop.permute.xlu0 %1916
        %1918 = vrot.lane.b32.xlu0 %v1841, 8
        %v1919 = vpop.permute.xlu0 %1918
        %1920 = vrot.lane.b32.xlu0 %v1843, 8
        %v1921 = vpop.permute.xlu0 %1920
        %1922 = vrot.lane.b32.xlu0 %v1846, 8
        %v1923 = vpop.permute.xlu0 %1922
        %1924 = vrot.lane.b32.xlu0 %v1848, 8
        %v1925 = vpop.permute.xlu0 %1924
        %1926 = vrot.lane.b32.xlu0 %v1851, 8
        %v1927 = vpop.permute.xlu0 %1926
        %1928 = vrot.lane.b32.xlu0 %v1853, 8
        %v1929 = vpop.permute.xlu0 %1928
        %1930 = vrot.lane.b32.xlu0 %v1856, 8
        %v1931 = vpop.permute.xlu0 %1930
        %1932 = vrot.lane.b32.xlu0 %v1858, 8
        %v1933 = vpop.permute.xlu0 %1932
        %1934 = vrot.lane.b32.xlu0 %v1861, 8
        %v1935 = vpop.permute.xlu0 %1934
        %1936 = vrot.lane.b32.xlu0 %v1863, 8
        %v1937 = vpop.permute.xlu0 %1936
        %1938 = vrot.lane.b32.xlu0 %v1866, 8
        %v1939 = vpop.permute.xlu0 %1938
        %1940 = vrot.lane.b32.xlu0 %v1868, 8
        %v1941 = vpop.permute.xlu0 %1940
        %1942 = vrot.lane.b32.xlu0 %v1871, 8
        %v1943 = vpop.permute.xlu0 %1942
        %1944 = vrot.lane.b32.xlu0 %v1873, 8
        %v1945 = vpop.permute.xlu0 %1944
        %1946 = vrot.lane.b32.xlu0 %v1876, 8
        %v1947 = vpop.permute.xlu0 %1946
        %1948 = vrot.lane.b32.xlu0 %v1878, 8
        %v1949 = vpop.permute.xlu0 %1948
        %1950 = vrot.lane.b32.xlu0 %v1881, 8
        %v1951 = vpop.permute.xlu0 %1950
        %1952 = vrot.lane.b32.xlu0 %v1883, 8
        %v1953 = vpop.permute.xlu0 %1952
        %1954 = vrot.lane.b32.xlu0 %v1886, 8
        %v1955 = vpop.permute.xlu0 %1954
        %1956 = vrot.lane.b32.xlu0 %v1888, 8
        %v1957 = vpop.permute.xlu0 %1956
        %1958 = vrot.lane.b32.xlu0 %v1891, 8
        %v1959 = vpop.permute.xlu0 %1958
        %1960 = vrot.lane.b32.xlu0 %v1893, 8
        %v1961 = vpop.permute.xlu0 %1960
        %1962 = vrot.lane.b32.xlu0 %v1896, 8
        %v1963 = vpop.permute.xlu0 %1962
        %1964 = vrot.lane.b32.xlu0 %v1898, 8
        %v1965 = vpop.permute.xlu0 %1964
        %1966 = vrot.lane.b32.xlu0 %v1901, 8
        %v1967 = vpop.permute.xlu0 %1966
        %1968 = vrot.lane.b32.xlu0 %v1903, 8
        %v1969 = vpop.permute.xlu0 %1968
        %1970 = vrot.lane.b32.xlu0 %v1906, 8
        %v1971 = vpop.permute.xlu0 %1970
        %1972 = vrot.lane.b32.xlu0 %v1908, 8
        %v1973 = vpop.permute.xlu0 %1972
        %1974 = vrot.lane.b32.xlu0 %v1911, 8
        %v1975 = vpop.permute.xlu0 %1974
        %1976 = vrot.lane.b32.xlu0 %v1913, 8
        %v1977 = vpop.permute.xlu0 %1976
        %v2010 = vsel %vm1430, %v1554, %v1738
        %v2011 = vsel %vm1430, %v1555, %v1740
        %v2012 = vsel %vm1430, %v1557, %v1742
        %v2013 = vsel %vm1430, %v1558, %v1744
        %v2014 = vsel %vm1430, %v1560, %v1746
        %v2015 = vsel %vm1430, %v1561, %v1748
        %v2016 = vsel %vm1430, %v1563, %v1750
        %v2017 = vsel %vm1430, %v1564, %v1752
        %v2018 = vsel %vm1430, %v1566, %v1754
        %v2019 = vsel %vm1430, %v1567, %v1756
        %v2020 = vsel %vm1430, %v1569, %v1758
        %v2021 = vsel %vm1430, %v1570, %v1760
        %v2022 = vsel %vm1430, %v1572, %v1762
        %v2023 = vsel %vm1430, %v1573, %v1764
        %v2024 = vsel %vm1430, %v1575, %v1766
        %v2025 = vsel %vm1430, %v1576, %v1768
        %v2026 = vsel %vm1430, %v1578, %v1770
        %v2027 = vsel %vm1430, %v1579, %v1772
        %v2028 = vsel %vm1430, %v1581, %v1774
        %v2029 = vsel %vm1430, %v1582, %v1776
        %v2030 = vsel %vm1430, %v1584, %v1778
        %v2031 = vsel %vm1430, %v1585, %v1780
        %v2032 = vsel %vm1430, %v1587, %v1782
        %v2033 = vsel %vm1430, %v1588, %v1784
        %v2034 = vsel %vm1430, %v1590, %v1786
        %v2035 = vsel %vm1430, %v1591, %v1788
        %v2036 = vsel %vm1430, %v1593, %v1790
        %v2037 = vsel %vm1430, %v1594, %v1792
        %v2038 = vsel %vm1430, %v1596, %v1794
        %v2039 = vsel %vm1430, %v1597, %v1796
        %v2040 = vsel %vm1430, %v1599, %v1798
        %v2041 = vsel %vm1430, %v1600, %v1800
        %vm2042 = vcmask 64512
        %v2043 = vsel %vm2042, %v2010, %v1915
        %v2044 = vsel %vm2042, %v2011, %v1917
        %v2045 = vsel %vm2042, %v2012, %v1919
        %v2046 = vsel %vm2042, %v2013, %v1921
        %v2047 = vsel %vm2042, %v2014, %v1923
        %v2048 = vsel %vm2042, %v2015, %v1925
        %v2049 = vsel %vm2042, %v2016, %v1927
        %v2050 = vsel %vm2042, %v2017, %v1929
        %v2051 = vsel %vm2042, %v2018, %v1931
        %v2052 = vsel %vm2042, %v2019, %v1933
        %v2053 = vsel %vm2042, %v2020, %v1935
        %v2054 = vsel %vm2042, %v2021, %v1937
        %v2055 = vsel %vm2042, %v2022, %v1939
        %v2056 = vsel %vm2042, %v2023, %v1941
        %v2057 = vsel %vm2042, %v2024, %v1943
        %v2058 = vsel %vm2042, %v2025, %v1945
        %v2059 = vsel %vm2042, %v2026, %v1947
        %v2060 = vsel %vm2042, %v2027, %v1949
        %v2061 = vsel %vm2042, %v2028, %v1951
        %v2062 = vsel %vm2042, %v2029, %v1953
        %v2063 = vsel %vm2042, %v2030, %v1955
        %v2064 = vsel %vm2042, %v2031, %v1957
        %v2065 = vsel %vm2042, %v2032, %v1959
        %v2066 = vsel %vm2042, %v2033, %v1961
        %v2067 = vsel %vm2042, %v2034, %v1963
        %v2068 = vsel %vm2042, %v2035, %v1965
        %v2069 = vsel %vm2042, %v2036, %v1967
        %v2070 = vsel %vm2042, %v2037, %v1969
        %v2071 = vsel %vm2042, %v2038, %v1971
        %v2072 = vsel %vm2042, %v2039, %v1973
        %v2073 = vsel %vm2042, %v2040, %v1975
        %v2074 = vsel %vm2042, %v2041, %v1977
        %v2075 = vpack.c.bf16 %v2044, %v2043
        %v2076 = vpack.c.bf16 %v2046, %v2045
        %v2077 = vpack.c.bf16 %v2048, %v2047
        %v2078 = vpack.c.bf16 %v2050, %v2049
        %v2079 = vpack.c.bf16 %v2052, %v2051
        %v2080 = vpack.c.bf16 %v2054, %v2053
        %v2081 = vpack.c.bf16 %v2056, %v2055
        %v2082 = vpack.c.bf16 %v2058, %v2057
        %v2083 = vpack.c.bf16 %v2060, %v2059
        %v2084 = vpack.c.bf16 %v2062, %v2061
        %v2085 = vpack.c.bf16 %v2064, %v2063
        %v2086 = vpack.c.bf16 %v2066, %v2065
        %v2087 = vpack.c.bf16 %v2068, %v2067
        %v2088 = vpack.c.bf16 %v2070, %v2069
        %v2089 = vpack.c.bf16 %v2072, %v2071
        %v2090 = vpack.c.bf16 %v2074, %v2073
        %v2091 = vld [vmem:[%s1] sm:$0xf]
        %v2092 = vld [vmem:[%s1 + $0x4] sm:$0x3]
        %v2096 = vrot.slane %v1602, 1
        %v2097 = vrot.slane %v1603, 1
        %v2098 = vsel %vm1656, %v2096, %v2097
        %v2099 = vrot.slane %v1604, 1
        %v2100 = vsel %vm1656, %v2097, %v2099
        %2101 = vrot.lane.b32.xlu0 %v2098, 4
        %v2102 = vpop.permute.xlu0 %2101
        %2103 = vrot.lane.b32.xlu0 %v2100, 4
        %v2104 = vpop.permute.xlu0 %2103
        %v2107 = vrot.slane %v1602, 2
        %v2108 = vrot.slane %v1603, 2
        %v2109 = vsel %vm1833, %v2107, %v2108
        %v2110 = vrot.slane %v1604, 2
        %v2111 = vsel %vm1833, %v2108, %v2110
        %2112 = vrot.lane.b32.xlu0 %v2109, 8
        %v2113 = vpop.permute.xlu0 %2112
        %2114 = vrot.lane.b32.xlu0 %v2111, 8
        %v2115 = vpop.permute.xlu0 %2114
        %v2118 = vsel %vm1430, %v1602, %v2102
        %v2119 = vsel %vm1430, %v1603, %v2104
        %v2120 = vsel %vm2042, %v2118, %v2113
        %v2121 = vsel %vm2042, %v2119, %v2115
        %v2122 = vpack.c.bf16 %v2121, %v2120
        %s2123 = scalar_lea.vmem %s1, 8
        %v2124 = vld [vmem:[%s2123] sm:$0xf]
        %v2125 = vld [vmem:[%s2123 + $0x4] sm:$0x3]
        %v2128 = vunpack.c.l.b16 %v2124
        %v2129 = vunpack.c.l.b16 %v2125
        %v2130 = vpack.c.b16 %v2129, %v2128
        %vm2131 = vcmask 97280
        %v2133 = vsel %vm2131, %v2076, 0
        %v2136 = vsel %vm2131, %v2077, 0
        %v2139 = vsel %vm2131, %v2078, 0
        %v2142 = vsel %vm2131, %v2079, 0
        %v2145 = vsel %vm2131, %v2080, 0
        %v2148 = vsel %vm2131, %v2081, 0
        %v2151 = vsel %vm2131, %v2082, 0
        %v2154 = vsel %vm2131, %v2083, 0
        %v2157 = vsel %vm2131, %v2084, 0
        %v2160 = vsel %vm2131, %v2085, 0
        %v2163 = vsel %vm2131, %v2086, 0
        %v2166 = vsel %vm2131, %v2087, 0
        %v2169 = vsel %vm2131, %v2088, 0
        %v2172 = vsel %vm2131, %v2089, 0
        %v2175 = vsel %vm2131, %v2090, 0
        %v2178 = vsel %vm2131, %v2122, 0
        %v2181 = vsel %vm1833, %v2130, 0
        %2183 = vmatpush.bf16.msra.mxu0 0
        %2184 = vmatpush.bf16.msra.mxu0 0
        %2185 = vmatpush.bf16.msra.mxu0 0
        %2186 = vmatpush.bf16.msra.mxu0 0
        %2187 = vmatpush.bf16.msra.mxu0 0
        %2188 = vmatpush.bf16.msra.mxu0 0
        %2189 = vmatpush.bf16.msra.mxu0 0
        %2190 = vmatpush.bf16.msra.mxu0 %v2181
        %2191 = vmatmul.bf16.gmra.mxu0 %v2133
        %v2192 = vpop.f32.mrf.mxu0
        %v2193 = vadd.f32 0.0, %v2192
        %v2194 = vpop.f32.mrf.mxu0
        %v2195 = vadd.f32 0.0, %v2194
        %2196 = vmatmul.bf16.gmra.mxu0 %v2136
        %v2197 = vpop.f32.mrf.mxu0
        %v2198 = vadd.f32 0.0, %v2197
        %v2199 = vpop.f32.mrf.mxu0
        %v2200 = vadd.f32 0.0, %v2199
        %2201 = vmatmul.bf16.gmra.mxu0 %v2139
        %v2202 = vpop.f32.mrf.mxu0
        %v2203 = vadd.f32 0.0, %v2202
        %v2204 = vpop.f32.mrf.mxu0
        %v2205 = vadd.f32 0.0, %v2204
        %2206 = vmatmul.bf16.gmra.mxu0 %v2142
        %v2207 = vpop.f32.mrf.mxu0
        %v2208 = vadd.f32 0.0, %v2207
        %v2209 = vpop.f32.mrf.mxu0
        %v2210 = vadd.f32 0.0, %v2209
        %2211 = vmatmul.bf16.gmra.mxu0 %v2145
        %v2212 = vpop.f32.mrf.mxu0
        %v2213 = vadd.f32 0.0, %v2212
        %v2214 = vpop.f32.mrf.mxu0
        %v2215 = vadd.f32 0.0, %v2214
        %2216 = vmatmul.bf16.gmra.mxu0 %v2148
        %v2217 = vpop.f32.mrf.mxu0
        %v2218 = vadd.f32 0.0, %v2217
        %v2219 = vpop.f32.mrf.mxu0
        %v2220 = vadd.f32 0.0, %v2219
        %2221 = vmatmul.bf16.gmra.mxu0 %v2151
        %v2222 = vpop.f32.mrf.mxu0
        %v2223 = vadd.f32 0.0, %v2222
        %v2224 = vpop.f32.mrf.mxu0
        %v2225 = vadd.f32 0.0, %v2224
        %2226 = vmatmul.bf16.gmra.mxu0 %v2154
        %v2227 = vpop.f32.mrf.mxu0
        %v2228 = vadd.f32 0.0, %v2227
        %v2229 = vpop.f32.mrf.mxu0
        %v2230 = vadd.f32 0.0, %v2229
        %2231 = vmatmul.bf16.gmra.mxu0 %v2157
        %v2232 = vpop.f32.mrf.mxu0
        %v2233 = vadd.f32 0.0, %v2232
        %v2234 = vpop.f32.mrf.mxu0
        %v2235 = vadd.f32 0.0, %v2234
        %2236 = vmatmul.bf16.gmra.mxu0 %v2160
        %v2237 = vpop.f32.mrf.mxu0
        %v2238 = vadd.f32 0.0, %v2237
        %v2239 = vpop.f32.mrf.mxu0
        %v2240 = vadd.f32 0.0, %v2239
        %2241 = vmatmul.bf16.gmra.mxu0 %v2163
        %v2242 = vpop.f32.mrf.mxu0
        %v2243 = vadd.f32 0.0, %v2242
        %v2244 = vpop.f32.mrf.mxu0
        %v2245 = vadd.f32 0.0, %v2244
        %2246 = vmatmul.bf16.gmra.mxu0 %v2166
        %v2247 = vpop.f32.mrf.mxu0
        %v2248 = vadd.f32 0.0, %v2247
        %v2249 = vpop.f32.mrf.mxu0
        %v2250 = vadd.f32 0.0, %v2249
        %2251 = vmatmul.bf16.gmra.mxu0 %v2169
        %v2252 = vpop.f32.mrf.mxu0
        %v2253 = vadd.f32 0.0, %v2252
        %v2254 = vpop.f32.mrf.mxu0
        %v2255 = vadd.f32 0.0, %v2254
        %2256 = vmatmul.bf16.gmra.mxu0 %v2172
        %v2257 = vpop.f32.mrf.mxu0
        %v2258 = vadd.f32 0.0, %v2257
        %v2259 = vpop.f32.mrf.mxu0
        %v2260 = vadd.f32 0.0, %v2259
        %2261 = vmatmul.bf16.gmra.mxu0 %v2175
        %v2262 = vpop.f32.mrf.mxu0
        %v2263 = vadd.f32 0.0, %v2262
        %v2264 = vpop.f32.mrf.mxu0
        %v2265 = vadd.f32 0.0, %v2264
        %2266 = vmatmul.bf16.gmra.mxu0 %v2178
        %v2267 = vpop.f32.mrf.mxu0
        %v2268 = vadd.f32 0.0, %v2267
        %v2269 = vpop.f32.mrf.mxu0
        %v2270 = vadd.f32 0.0, %v2269
        %2271 = vdwg.mxu0
        %v2274 = vunpack.c.l.b16 %v2091
        %v2275 = vunpack.c.l.b16 %v2092
        %v2276 = vpack.c.b16 %v2275, %v2274
        %v2278 = vsel %vm2131, %v2075, 0
        %v2281 = vsel %vm1833, %v2276, 0
        %2283 = vmatpush.bf16.msra.mxu0 0
        %2284 = vmatpush.bf16.msra.mxu0 0
        %2285 = vmatpush.bf16.msra.mxu0 0
        %2286 = vmatpush.bf16.msra.mxu0 0
        %2287 = vmatpush.bf16.msra.mxu0 0
        %2288 = vmatpush.bf16.msra.mxu0 0
        %2289 = vmatpush.bf16.msra.mxu0 0
        %2290 = vmatpush.bf16.msra.mxu0 %v2281
        %2291 = vmatmul.bf16.gmra.mxu0 %v2278
        %v2292 = vpop.f32.mrf.mxu0
        %v2293 = vadd.f32 %v2193, %v2292
        %v2294 = vpop.f32.mrf.mxu0
        %v2295 = vadd.f32 %v2195, %v2294
        %2296 = vmatmul.bf16.gmra.mxu0 %v2133
        %v2297 = vpop.f32.mrf.mxu0
        %v2298 = vadd.f32 %v2198, %v2297
        %v2299 = vpop.f32.mrf.mxu0
        %v2300 = vadd.f32 %v2200, %v2299
        %2301 = vmatmul.bf16.gmra.mxu0 %v2136
        %v2302 = vpop.f32.mrf.mxu0
        %v2303 = vadd.f32 %v2203, %v2302
        %v2304 = vpop.f32.mrf.mxu0
        %v2305 = vadd.f32 %v2205, %v2304
        %2306 = vmatmul.bf16.gmra.mxu0 %v2139
        %v2307 = vpop.f32.mrf.mxu0
        %v2308 = vadd.f32 %v2208, %v2307
        %v2309 = vpop.f32.mrf.mxu0
        %v2310 = vadd.f32 %v2210, %v2309
        %2311 = vmatmul.bf16.gmra.mxu0 %v2142
        %v2312 = vpop.f32.mrf.mxu0
        %v2313 = vadd.f32 %v2213, %v2312
        %v2314 = vpop.f32.mrf.mxu0
        %v2315 = vadd.f32 %v2215, %v2314
        %2316 = vmatmul.bf16.gmra.mxu0 %v2145
        %v2317 = vpop.f32.mrf.mxu0
        %v2318 = vadd.f32 %v2218, %v2317
        %v2319 = vpop.f32.mrf.mxu0
        %v2320 = vadd.f32 %v2220, %v2319
        %2321 = vmatmul.bf16.gmra.mxu0 %v2148
        %v2322 = vpop.f32.mrf.mxu0
        %v2323 = vadd.f32 %v2223, %v2322
        %v2324 = vpop.f32.mrf.mxu0
        %v2325 = vadd.f32 %v2225, %v2324
        %2326 = vmatmul.bf16.gmra.mxu0 %v2151
        %v2327 = vpop.f32.mrf.mxu0
        %v2328 = vadd.f32 %v2228, %v2327
        %v2329 = vpop.f32.mrf.mxu0
        %v2330 = vadd.f32 %v2230, %v2329
        %2331 = vmatmul.bf16.gmra.mxu0 %v2154
        %v2332 = vpop.f32.mrf.mxu0
        %v2333 = vadd.f32 %v2233, %v2332
        %v2334 = vpop.f32.mrf.mxu0
        %v2335 = vadd.f32 %v2235, %v2334
        %2336 = vmatmul.bf16.gmra.mxu0 %v2157
        %v2337 = vpop.f32.mrf.mxu0
        %v2338 = vadd.f32 %v2238, %v2337
        %v2339 = vpop.f32.mrf.mxu0
        %v2340 = vadd.f32 %v2240, %v2339
        %2341 = vmatmul.bf16.gmra.mxu0 %v2160
        %v2342 = vpop.f32.mrf.mxu0
        %v2343 = vadd.f32 %v2243, %v2342
        %v2344 = vpop.f32.mrf.mxu0
        %v2345 = vadd.f32 %v2245, %v2344
        %2346 = vmatmul.bf16.gmra.mxu0 %v2163
        %v2347 = vpop.f32.mrf.mxu0
        %v2348 = vadd.f32 %v2248, %v2347
        %v2349 = vpop.f32.mrf.mxu0
        %v2350 = vadd.f32 %v2250, %v2349
        %2351 = vmatmul.bf16.gmra.mxu0 %v2166
        %v2352 = vpop.f32.mrf.mxu0
        %v2353 = vadd.f32 %v2253, %v2352
        %v2354 = vpop.f32.mrf.mxu0
        %v2355 = vadd.f32 %v2255, %v2354
        %2356 = vmatmul.bf16.gmra.mxu0 %v2169
        %v2357 = vpop.f32.mrf.mxu0
        %v2358 = vadd.f32 %v2258, %v2357
        %v2359 = vpop.f32.mrf.mxu0
        %v2360 = vadd.f32 %v2260, %v2359
        %2361 = vmatmul.bf16.gmra.mxu0 %v2172
        %v2362 = vpop.f32.mrf.mxu0
        %v2363 = vadd.f32 %v2263, %v2362
        %v2364 = vpop.f32.mrf.mxu0
        %v2365 = vadd.f32 %v2265, %v2364
        %2366 = vmatmul.bf16.gmra.mxu0 %v2175
        %v2367 = vpop.f32.mrf.mxu0
        %v2368 = vadd.f32 %v2268, %v2367
        %v2369 = vpop.f32.mrf.mxu0
        %v2370 = vadd.f32 %v2270, %v2369
        %2371 = vdwg.mxu0
        %v2375 = vrot.slane %v1605, 1
        %v2376 = vrot.slane %v1606, 1
        %v2377 = vsel %vm1656, %v2375, %v2376
        %v2378 = vrot.slane %v1607, 1
        %v2379 = vsel %vm1656, %v2376, %v2378
        %2380 = vrot.lane.b32.xlu0 %v2377, 4
        %v2381 = vpop.permute.xlu0 %2380
        %2382 = vrot.lane.b32.xlu0 %v2379, 4
        %v2383 = vpop.permute.xlu0 %2382
        %v2386 = vrot.slane %v1605, 2
        %v2387 = vrot.slane %v1606, 2
        %v2388 = vsel %vm1833, %v2386, %v2387
        %v2389 = vrot.slane %v1607, 2
        %v2390 = vsel %vm1833, %v2387, %v2389
        %2391 = vrot.lane.b32.xlu0 %v2388, 8
        %v2392 = vpop.permute.xlu0 %2391
        %2393 = vrot.lane.b32.xlu0 %v2390, 8
        %v2394 = vpop.permute.xlu0 %2393
        %v2397 = vsel %vm1430, %v1605, %v2381
        %v2398 = vsel %vm1430, %v1606, %v2383
        %v2399 = vsel %vm2042, %v2397, %v2392
        %v2400 = vsel %vm2042, %v2398, %v2394
        %v2401 = vpack.c.bf16 %v2400, %v2399
        %s2402 = scalar_lea.vmem %s1, 16
        %v2403 = vld [vmem:[%s2402] sm:$0xf]
        %v2404 = vld [vmem:[%s2402 + $0x4] sm:$0x3]
        %v2407 = vunpack.c.l.b16 %v2403
        %v2408 = vunpack.c.l.b16 %v2404
        %v2409 = vpack.c.b16 %v2408, %v2407
        %v2411 = vsel %vm2131, %v2401, 0
        %v2414 = vsel %vm1833, %v2409, 0
        %2416 = vmatpush.bf16.msra.mxu0 0
        %2417 = vmatpush.bf16.msra.mxu0 0
        %2418 = vmatpush.bf16.msra.mxu0 0
        %2419 = vmatpush.bf16.msra.mxu0 0
        %2420 = vmatpush.bf16.msra.mxu0 0
        %2421 = vmatpush.bf16.msra.mxu0 0
        %2422 = vmatpush.bf16.msra.mxu0 0
        %2423 = vmatpush.bf16.msra.mxu0 %v2414
        %2424 = vmatmul.bf16.gmra.mxu0 %v2136
        %v2425 = vpop.f32.mrf.mxu0
        %v2426 = vadd.f32 0.0, %v2425
        %v2427 = vpop.f32.mrf.mxu0
        %v2428 = vadd.f32 0.0, %v2427
        %2429 = vmatmul.bf16.gmra.mxu0 %v2139
        %v2430 = vpop.f32.mrf.mxu0
        %v2431 = vadd.f32 0.0, %v2430
        %v2432 = vpop.f32.mrf.mxu0
        %v2433 = vadd.f32 0.0, %v2432
        %2434 = vmatmul.bf16.gmra.mxu0 %v2142
        %v2435 = vpop.f32.mrf.mxu0
        %v2436 = vadd.f32 0.0, %v2435
        %v2437 = vpop.f32.mrf.mxu0
        %v2438 = vadd.f32 0.0, %v2437
        %2439 = vmatmul.bf16.gmra.mxu0 %v2145
        %v2440 = vpop.f32.mrf.mxu0
        %v2441 = vadd.f32 0.0, %v2440
        %v2442 = vpop.f32.mrf.mxu0
        %v2443 = vadd.f32 0.0, %v2442
        %2444 = vmatmul.bf16.gmra.mxu0 %v2148
        %v2445 = vpop.f32.mrf.mxu0
        %v2446 = vadd.f32 0.0, %v2445
        %v2447 = vpop.f32.mrf.mxu0
        %v2448 = vadd.f32 0.0, %v2447
        %2449 = vmatmul.bf16.gmra.mxu0 %v2151
        %v2450 = vpop.f32.mrf.mxu0
        %v2451 = vadd.f32 0.0, %v2450
        %v2452 = vpop.f32.mrf.mxu0
        %v2453 = vadd.f32 0.0, %v2452
        %2454 = vmatmul.bf16.gmra.mxu0 %v2154
        %v2455 = vpop.f32.mrf.mxu0
        %v2456 = vadd.f32 0.0, %v2455
        %v2457 = vpop.f32.mrf.mxu0
        %v2458 = vadd.f32 0.0, %v2457
        %2459 = vmatmul.bf16.gmra.mxu0 %v2157
        %v2460 = vpop.f32.mrf.mxu0
        %v2461 = vadd.f32 0.0, %v2460
        %v2462 = vpop.f32.mrf.mxu0
        %v2463 = vadd.f32 0.0, %v2462
        %2464 = vmatmul.bf16.gmra.mxu0 %v2160
        %v2465 = vpop.f32.mrf.mxu0
        %v2466 = vadd.f32 0.0, %v2465
        %v2467 = vpop.f32.mrf.mxu0
        %v2468 = vadd.f32 0.0, %v2467
        %2469 = vmatmul.bf16.gmra.mxu0 %v2163
        %v2470 = vpop.f32.mrf.mxu0
        %v2471 = vadd.f32 0.0, %v2470
        %v2472 = vpop.f32.mrf.mxu0
        %v2473 = vadd.f32 0.0, %v2472
        %2474 = vmatmul.bf16.gmra.mxu0 %v2166
        %v2475 = vpop.f32.mrf.mxu0
        %v2476 = vadd.f32 0.0, %v2475
        %v2477 = vpop.f32.mrf.mxu0
        %v2478 = vadd.f32 0.0, %v2477
        %2479 = vmatmul.bf16.gmra.mxu0 %v2169
        %v2480 = vpop.f32.mrf.mxu0
        %v2481 = vadd.f32 0.0, %v2480
        %v2482 = vpop.f32.mrf.mxu0
        %v2483 = vadd.f32 0.0, %v2482
        %2484 = vmatmul.bf16.gmra.mxu0 %v2172
        %v2485 = vpop.f32.mrf.mxu0
        %v2486 = vadd.f32 0.0, %v2485
        %v2487 = vpop.f32.mrf.mxu0
        %v2488 = vadd.f32 0.0, %v2487
        %2489 = vmatmul.bf16.gmra.mxu0 %v2175
        %v2490 = vpop.f32.mrf.mxu0
        %v2491 = vadd.f32 0.0, %v2490
        %v2492 = vpop.f32.mrf.mxu0
        %v2493 = vadd.f32 0.0, %v2492
        %2494 = vmatmul.bf16.gmra.mxu0 %v2178
        %v2495 = vpop.f32.mrf.mxu0
        %v2496 = vadd.f32 0.0, %v2495
        %v2497 = vpop.f32.mrf.mxu0
        %v2498 = vadd.f32 0.0, %v2497
        %2499 = vmatmul.bf16.gmra.mxu0 %v2411
        %v2500 = vpop.f32.mrf.mxu0
        %v2501 = vadd.f32 0.0, %v2500
        %v2502 = vpop.f32.mrf.mxu0
        %v2503 = vadd.f32 0.0, %v2502
        %2504 = vdwg.mxu0
        %v2505 = vadd.f32 %v2293, %v2426
        %v2506 = vadd.f32 %v2295, %v2428
        %v2507 = vadd.f32 %v2298, %v2431
        %v2508 = vadd.f32 %v2300, %v2433
        %v2509 = vadd.f32 %v2303, %v2436
        %v2510 = vadd.f32 %v2305, %v2438
        %v2511 = vadd.f32 %v2308, %v2441
        %v2512 = vadd.f32 %v2310, %v2443
        %v2513 = vadd.f32 %v2313, %v2446
        %v2514 = vadd.f32 %v2315, %v2448
        %v2515 = vadd.f32 %v2318, %v2451
        %v2516 = vadd.f32 %v2320, %v2453
        %v2517 = vadd.f32 %v2323, %v2456
        %v2518 = vadd.f32 %v2325, %v2458
        %v2519 = vadd.f32 %v2328, %v2461
        %v2520 = vadd.f32 %v2330, %v2463
        %v2521 = vadd.f32 %v2333, %v2466
        %v2522 = vadd.f32 %v2335, %v2468
        %v2523 = vadd.f32 %v2338, %v2471
        %v2524 = vadd.f32 %v2340, %v2473
        %v2525 = vadd.f32 %v2343, %v2476
        %v2526 = vadd.f32 %v2345, %v2478
        %v2527 = vadd.f32 %v2348, %v2481
        %v2528 = vadd.f32 %v2350, %v2483
        %v2529 = vadd.f32 %v2353, %v2486
        %v2530 = vadd.f32 %v2355, %v2488
        %v2531 = vadd.f32 %v2358, %v2491
        %v2532 = vadd.f32 %v2360, %v2493
        %v2533 = vadd.f32 %v2363, %v2496
        %v2534 = vadd.f32 %v2365, %v2498
        %v2535 = vadd.f32 %v2368, %v2501
        %v2536 = vadd.f32 %v2370, %v2503
        %v2537 = vld [vmem:[%s2] sm:$0x1]
        %v2539 = vperm.slane %v2537, 0
        %v2541 = vadd.f32 %v2505, %v2539
        %v2542 = vadd.f32 %v2506, %v2539
        %v2543 = vadd.f32 %v2507, %v2539
        %v2544 = vadd.f32 %v2508, %v2539
        %v2545 = vadd.f32 %v2509, %v2539
        %v2546 = vadd.f32 %v2510, %v2539
        %v2547 = vadd.f32 %v2511, %v2539
        %v2548 = vadd.f32 %v2512, %v2539
        %v2549 = vadd.f32 %v2513, %v2539
        %v2550 = vadd.f32 %v2514, %v2539
        %v2551 = vadd.f32 %v2515, %v2539
        %v2552 = vadd.f32 %v2516, %v2539
        %v2553 = vadd.f32 %v2517, %v2539
        %v2554 = vadd.f32 %v2518, %v2539
        %v2555 = vadd.f32 %v2519, %v2539
        %v2556 = vadd.f32 %v2520, %v2539
        %v2557 = vadd.f32 %v2521, %v2539
        %v2558 = vadd.f32 %v2522, %v2539
        %v2559 = vadd.f32 %v2523, %v2539
        %v2560 = vadd.f32 %v2524, %v2539
        %v2561 = vadd.f32 %v2525, %v2539
        %v2562 = vadd.f32 %v2526, %v2539
        %v2563 = vadd.f32 %v2527, %v2539
        %v2564 = vadd.f32 %v2528, %v2539
        %v2565 = vadd.f32 %v2529, %v2539
        %v2566 = vadd.f32 %v2530, %v2539
        %v2567 = vadd.f32 %v2531, %v2539
        %v2568 = vadd.f32 %v2532, %v2539
        %v2569 = vadd.f32 %v2533, %v2539
        %v2570 = vadd.f32 %v2534, %v2539
        %v2571 = vadd.f32 %v2535, %v2539
        %v2572 = vadd.f32 %v2536, %v2539
        %vm2573 = vcmp.gt.f32.partialorder %v2541, 0.0
        %vm2574 = vcmp.gt.f32.partialorder %v2542, 0.0
        %vm2575 = vcmp.gt.f32.partialorder %v2543, 0.0
        %vm2576 = vcmp.gt.f32.partialorder %v2544, 0.0
        %vm2577 = vcmp.gt.f32.partialorder %v2545, 0.0
        %vm2578 = vcmp.gt.f32.partialorder %v2546, 0.0
        %vm2579 = vcmp.gt.f32.partialorder %v2547, 0.0
        %vm2580 = vcmp.gt.f32.partialorder %v2548, 0.0
        %vm2581 = vcmp.gt.f32.partialorder %v2549, 0.0
        %vm2582 = vcmp.gt.f32.partialorder %v2550, 0.0
        %vm2583 = vcmp.gt.f32.partialorder %v2551, 0.0
        %vm2584 = vcmp.gt.f32.partialorder %v2552, 0.0
        %vm2585 = vcmp.gt.f32.partialorder %v2553, 0.0
        %vm2586 = vcmp.gt.f32.partialorder %v2554, 0.0
        %vm2587 = vcmp.gt.f32.partialorder %v2555, 0.0
        %vm2588 = vcmp.gt.f32.partialorder %v2556, 0.0
        %vm2589 = vcmp.gt.f32.partialorder %v2557, 0.0
        %vm2590 = vcmp.gt.f32.partialorder %v2558, 0.0
        %vm2591 = vcmp.gt.f32.partialorder %v2559, 0.0
        %vm2592 = vcmp.gt.f32.partialorder %v2560, 0.0
        %vm2593 = vcmp.gt.f32.partialorder %v2561, 0.0
        %vm2594 = vcmp.gt.f32.partialorder %v2562, 0.0
        %vm2595 = vcmp.gt.f32.partialorder %v2563, 0.0
        %vm2596 = vcmp.gt.f32.partialorder %v2564, 0.0
        %vm2597 = vcmp.gt.f32.partialorder %v2565, 0.0
        %vm2598 = vcmp.gt.f32.partialorder %v2566, 0.0
        %vm2599 = vcmp.gt.f32.partialorder %v2567, 0.0
        %vm2600 = vcmp.gt.f32.partialorder %v2568, 0.0
        %vm2601 = vcmp.gt.f32.partialorder %v2569, 0.0
        %vm2602 = vcmp.gt.f32.partialorder %v2570, 0.0
        %vm2603 = vcmp.gt.f32.partialorder %v2571, 0.0
        %vm2604 = vcmp.gt.f32.partialorder %v2572, 0.0
        %v2605 = vmul.f32 %v2541, 0.2
        %v2606 = vmul.f32 %v2542, 0.2
        %v2607 = vmul.f32 %v2543, 0.2
        %v2608 = vmul.f32 %v2544, 0.2
        %v2609 = vmul.f32 %v2545, 0.2
        %v2610 = vmul.f32 %v2546, 0.2
        %v2611 = vmul.f32 %v2547, 0.2
        %v2612 = vmul.f32 %v2548, 0.2
        %v2613 = vmul.f32 %v2549, 0.2
        %v2614 = vmul.f32 %v2550, 0.2
        %v2615 = vmul.f32 %v2551, 0.2
        %v2616 = vmul.f32 %v2552, 0.2
        %v2617 = vmul.f32 %v2553, 0.2
        %v2618 = vmul.f32 %v2554, 0.2
        %v2619 = vmul.f32 %v2555, 0.2
        %v2620 = vmul.f32 %v2556, 0.2
        %v2621 = vmul.f32 %v2557, 0.2
        %v2622 = vmul.f32 %v2558, 0.2
        %v2623 = vmul.f32 %v2559, 0.2
        %v2624 = vmul.f32 %v2560, 0.2
        %v2625 = vmul.f32 %v2561, 0.2
        %v2626 = vmul.f32 %v2562, 0.2
        %v2627 = vmul.f32 %v2563, 0.2
        %v2628 = vmul.f32 %v2564, 0.2
        %v2629 = vmul.f32 %v2565, 0.2
        %v2630 = vmul.f32 %v2566, 0.2
        %v2631 = vmul.f32 %v2567, 0.2
        %v2632 = vmul.f32 %v2568, 0.2
        %v2633 = vmul.f32 %v2569, 0.2
        %v2634 = vmul.f32 %v2570, 0.2
        %v2635 = vmul.f32 %v2571, 0.2
        %v2636 = vmul.f32 %v2572, 0.2
        %v2637 = vsel %vm2573, %v2541, %v2605
        %v2638 = vsel %vm2574, %v2542, %v2606
        %v2639 = vsel %vm2575, %v2543, %v2607
        %v2640 = vsel %vm2576, %v2544, %v2608
        %v2641 = vsel %vm2577, %v2545, %v2609
        %v2642 = vsel %vm2578, %v2546, %v2610
        %v2643 = vsel %vm2579, %v2547, %v2611
        %v2644 = vsel %vm2580, %v2548, %v2612
        %v2645 = vsel %vm2581, %v2549, %v2613
        %v2646 = vsel %vm2582, %v2550, %v2614
        %v2647 = vsel %vm2583, %v2551, %v2615
        %v2648 = vsel %vm2584, %v2552, %v2616
        %v2649 = vsel %vm2585, %v2553, %v2617
        %v2650 = vsel %vm2586, %v2554, %v2618
        %v2651 = vsel %vm2587, %v2555, %v2619
        %v2652 = vsel %vm2588, %v2556, %v2620
        %v2653 = vsel %vm2589, %v2557, %v2621
        %v2654 = vsel %vm2590, %v2558, %v2622
        %v2655 = vsel %vm2591, %v2559, %v2623
        %v2656 = vsel %vm2592, %v2560, %v2624
        %v2657 = vsel %vm2593, %v2561, %v2625
        %v2658 = vsel %vm2594, %v2562, %v2626
        %v2659 = vsel %vm2595, %v2563, %v2627
        %v2660 = vsel %vm2596, %v2564, %v2628
        %v2661 = vsel %vm2597, %v2565, %v2629
        %v2662 = vsel %vm2598, %v2566, %v2630
        %v2663 = vsel %vm2599, %v2567, %v2631
        %v2664 = vsel %vm2600, %v2568, %v2632
        %v2665 = vsel %vm2601, %v2569, %v2633
        %v2666 = vsel %vm2602, %v2570, %v2634
        %v2667 = vsel %vm2603, %v2571, %v2635
        %v2668 = vsel %vm2604, %v2572, %v2636
        %2669 = vst.msk [vmem:[%s1521 + $0x1] sm:$0xff] %vm1430, %v2637
        %2670 = vst.msk [vmem:[%s1521 + $0x9] sm:$0xff] %vm1430, %v2638
        %2671 = vst.msk [vmem:[%s1521 + $0x19] sm:$0xff] %vm1430, %v2639
        %2672 = vst.msk [vmem:[%s1521 + $0x21] sm:$0xff] %vm1430, %v2640
        %2673 = vst.msk [vmem:[%s1521 + $0x31] sm:$0xff] %vm1430, %v2641
        %2674 = vst.msk [vmem:[%s1521 + $0x39] sm:$0xff] %vm1430, %v2642
        %2675 = vst.msk [vmem:[%s1521 + $0x49] sm:$0xff] %vm1430, %v2643
        %2676 = vst.msk [vmem:[%s1521 + $0x51] sm:$0xff] %vm1430, %v2644
        %2677 = vst.msk [vmem:[%s1521 + $0x61] sm:$0xff] %vm1430, %v2645
        %2678 = vst.msk [vmem:[%s1521 + $0x69] sm:$0xff] %vm1430, %v2646
        %2679 = vst.msk [vmem:[%s1521 + $0x79] sm:$0xff] %vm1430, %v2647
        %2680 = vst.msk [vmem:[%s1521 + $0x81] sm:$0xff] %vm1430, %v2648
        %2681 = vst.msk [vmem:[%s1521 + $0x91] sm:$0xff] %vm1430, %v2649
        %2682 = vst.msk [vmem:[%s1521 + $0x99] sm:$0xff] %vm1430, %v2650
        %2683 = vst.msk [vmem:[%s1521 + $0xa9] sm:$0xff] %vm1430, %v2651
        %2684 = vst.msk [vmem:[%s1521 + $0xb1] sm:$0xff] %vm1430, %v2652
        %2685 = vst.msk [vmem:[%s1521 + $0xc1] sm:$0xff] %vm1430, %v2653
        %2686 = vst.msk [vmem:[%s1521 + $0xc9] sm:$0xff] %vm1430, %v2654
        %2687 = vst.msk [vmem:[%s1521 + $0xd9] sm:$0xff] %vm1430, %v2655
        %2688 = vst.msk [vmem:[%s1521 + $0xe1] sm:$0xff] %vm1430, %v2656
        %2689 = vst.msk [vmem:[%s1521 + $0xf1] sm:$0xff] %vm1430, %v2657
        %2690 = vst.msk [vmem:[%s1521 + $0xf9] sm:$0xff] %vm1430, %v2658
        %2691 = vst.msk [vmem:[%s1521 + $0x109] sm:$0xff] %vm1430, %v2659
        %2692 = vst.msk [vmem:[%s1521 + $0x111] sm:$0xff] %vm1430, %v2660
        %2693 = vst.msk [vmem:[%s1521 + $0x121] sm:$0xff] %vm1430, %v2661
        %2694 = vst.msk [vmem:[%s1521 + $0x129] sm:$0xff] %vm1430, %v2662
        %2695 = vst.msk [vmem:[%s1521 + $0x139] sm:$0xff] %vm1430, %v2663
        %2696 = vst.msk [vmem:[%s1521 + $0x141] sm:$0xff] %vm1430, %v2664
        %2697 = vst.msk [vmem:[%s1521 + $0x151] sm:$0xff] %vm1430, %v2665
        %2698 = vst.msk [vmem:[%s1521 + $0x159] sm:$0xff] %vm1430, %v2666
        %2699 = vst.msk [vmem:[%s1521 + $0x169] sm:$0xff] %vm1430, %v2667
        %2700 = vst.msk [vmem:[%s1521 + $0x171] sm:$0xff] %vm1430, %v2668
        %v2701 = vld [vmem:[#allocation2] sm:$0xff]
        %v2702 = vld [vmem:[#allocation2 + $0x8] sm:$0xff]
        %v2703 = vld [vmem:[#allocation2 + $0x10] sm:$0x3]
        %v2704 = vld [vmem:[#allocation2 + $0x18] sm:$0xff]
        %v2705 = vld [vmem:[#allocation2 + $0x20] sm:$0xff]
        %v2706 = vld [vmem:[#allocation2 + $0x28] sm:$0x3]
        %v2707 = vld [vmem:[#allocation2 + $0x30] sm:$0xff]
        %v2708 = vld [vmem:[#allocation2 + $0x38] sm:$0xff]
        %v2709 = vld [vmem:[#allocation2 + $0x40] sm:$0x3]
        %v2710 = vld [vmem:[#allocation2 + $0x48] sm:$0xff]
        %v2711 = vld [vmem:[#allocation2 + $0x50] sm:$0xff]
        %v2712 = vld [vmem:[#allocation2 + $0x58] sm:$0x3]
        %v2713 = vld [vmem:[#allocation2 + $0x60] sm:$0xff]
        %v2714 = vld [vmem:[#allocation2 + $0x68] sm:$0xff]
        %v2715 = vld [vmem:[#allocation2 + $0x70] sm:$0x3]
        %v2716 = vld [vmem:[#allocation2 + $0x78] sm:$0xff]
        %v2717 = vld [vmem:[#allocation2 + $0x80] sm:$0xff]
        %v2718 = vld [vmem:[#allocation2 + $0x88] sm:$0x3]
        %v2719 = vld [vmem:[#allocation2 + $0x90] sm:$0xff]
        %v2720 = vld [vmem:[#allocation2 + $0x98] sm:$0xff]
        %v2721 = vld [vmem:[#allocation2 + $0xa0] sm:$0x3]
        %v2722 = vld [vmem:[#allocation2 + $0xa8] sm:$0xff]
        %v2723 = vld [vmem:[#allocation2 + $0xb0] sm:$0xff]
        %v2724 = vld [vmem:[#allocation2 + $0xb8] sm:$0x3]
        %v2725 = vld [vmem:[#allocation2 + $0xc0] sm:$0xff]
        %v2726 = vld [vmem:[#allocation2 + $0xc8] sm:$0xff]
        %v2727 = vld [vmem:[#allocation2 + $0xd0] sm:$0x3]
        %v2728 = vld [vmem:[#allocation2 + $0xd8] sm:$0xff]
        %v2729 = vld [vmem:[#allocation2 + $0xe0] sm:$0xff]
        %v2730 = vld [vmem:[#allocation2 + $0xe8] sm:$0x3]
        %v2731 = vld [vmem:[#allocation2 + $0xf0] sm:$0xff]
        %v2732 = vld [vmem:[#allocation2 + $0xf8] sm:$0xff]
        %v2733 = vld [vmem:[#allocation2 + $0x100] sm:$0x3]
        %v2734 = vld [vmem:[#allocation2 + $0x108] sm:$0xff]
        %v2735 = vld [vmem:[#allocation2 + $0x110] sm:$0xff]
        %v2736 = vld [vmem:[#allocation2 + $0x118] sm:$0x3]
        %v2737 = vld [vmem:[#allocation2 + $0x120] sm:$0xff]
        %v2738 = vld [vmem:[#allocation2 + $0x128] sm:$0xff]
        %v2739 = vld [vmem:[#allocation2 + $0x130] sm:$0x3]
        %v2740 = vld [vmem:[#allocation2 + $0x138] sm:$0xff]
        %v2741 = vld [vmem:[#allocation2 + $0x140] sm:$0xff]
        %v2742 = vld [vmem:[#allocation2 + $0x148] sm:$0x3]
        %v2743 = vld [vmem:[#allocation2 + $0x150] sm:$0xff]
        %v2744 = vld [vmem:[#allocation2 + $0x158] sm:$0xff]
        %v2745 = vld [vmem:[#allocation2 + $0x160] sm:$0x3]
        %v2746 = vld [vmem:[#allocation2 + $0x168] sm:$0xff]
        %v2747 = vld [vmem:[#allocation2 + $0x170] sm:$0xff]
        %v2748 = vld [vmem:[#allocation2 + $0x178] sm:$0x3]
        %v2749 = vld [vmem:[#allocation2 + $0x180] sm:$0xff]
        %v2750 = vld [vmem:[#allocation2 + $0x188] sm:$0xff]
        %v2751 = vld [vmem:[#allocation2 + $0x190] sm:$0x3]
        %v2752 = vld [vmem:[#allocation2 + $0x198] sm:$0xff]
        %v2753 = vld [vmem:[#allocation2 + $0x1a0] sm:$0xff]
        %v2754 = vld [vmem:[#allocation2 + $0x1a8] sm:$0x3]
        %v2803 = vrot.slane %v2701, 1
        %v2804 = vrot.slane %v2702, 1
        %v2805 = vsel %vm1656, %v2803, %v2804
        %v2806 = vrot.slane %v2703, 1
        %v2807 = vsel %vm1656, %v2804, %v2806
        %v2808 = vrot.slane %v2704, 1
        %v2809 = vrot.slane %v2705, 1
        %v2810 = vsel %vm1656, %v2808, %v2809
        %v2811 = vrot.slane %v2706, 1
        %v2812 = vsel %vm1656, %v2809, %v2811
        %v2813 = vrot.slane %v2707, 1
        %v2814 = vrot.slane %v2708, 1
        %v2815 = vsel %vm1656, %v2813, %v2814
        %v2816 = vrot.slane %v2709, 1
        %v2817 = vsel %vm1656, %v2814, %v2816
        %v2818 = vrot.slane %v2710, 1
        %v2819 = vrot.slane %v2711, 1
        %v2820 = vsel %vm1656, %v2818, %v2819
        %v2821 = vrot.slane %v2712, 1
        %v2822 = vsel %vm1656, %v2819, %v2821
        %v2823 = vrot.slane %v2713, 1
        %v2824 = vrot.slane %v2714, 1
        %v2825 = vsel %vm1656, %v2823, %v2824
        %v2826 = vrot.slane %v2715, 1
        %v2827 = vsel %vm1656, %v2824, %v2826
        %v2828 = vrot.slane %v2716, 1
        %v2829 = vrot.slane %v2717, 1
        %v2830 = vsel %vm1656, %v2828, %v2829
        %v2831 = vrot.slane %v2718, 1
        %v2832 = vsel %vm1656, %v2829, %v2831
        %v2833 = vrot.slane %v2719, 1
        %v2834 = vrot.slane %v2720, 1
        %v2835 = vsel %vm1656, %v2833, %v2834
        %v2836 = vrot.slane %v2721, 1
        %v2837 = vsel %vm1656, %v2834, %v2836
        %v2838 = vrot.slane %v2722, 1
        %v2839 = vrot.slane %v2723, 1
        %v2840 = vsel %vm1656, %v2838, %v2839
        %v2841 = vrot.slane %v2724, 1
        %v2842 = vsel %vm1656, %v2839, %v2841
        %v2843 = vrot.slane %v2725, 1
        %v2844 = vrot.slane %v2726, 1
        %v2845 = vsel %vm1656, %v2843, %v2844
        %v2846 = vrot.slane %v2727, 1
        %v2847 = vsel %vm1656, %v2844, %v2846
        %v2848 = vrot.slane %v2728, 1
        %v2849 = vrot.slane %v2729, 1
        %v2850 = vsel %vm1656, %v2848, %v2849
        %v2851 = vrot.slane %v2730, 1
        %v2852 = vsel %vm1656, %v2849, %v2851
        %v2853 = vrot.slane %v2731, 1
        %v2854 = vrot.slane %v2732, 1
        %v2855 = vsel %vm1656, %v2853, %v2854
        %v2856 = vrot.slane %v2733, 1
        %v2857 = vsel %vm1656, %v2854, %v2856
        %v2858 = vrot.slane %v2734, 1
        %v2859 = vrot.slane %v2735, 1
        %v2860 = vsel %vm1656, %v2858, %v2859
        %v2861 = vrot.slane %v2736, 1
        %v2862 = vsel %vm1656, %v2859, %v2861
        %v2863 = vrot.slane %v2737, 1
        %v2864 = vrot.slane %v2738, 1
        %v2865 = vsel %vm1656, %v2863, %v2864
        %v2866 = vrot.slane %v2739, 1
        %v2867 = vsel %vm1656, %v2864, %v2866
        %v2868 = vrot.slane %v2740, 1
        %v2869 = vrot.slane %v2741, 1
        %v2870 = vsel %vm1656, %v2868, %v2869
        %v2871 = vrot.slane %v2742, 1
        %v2872 = vsel %vm1656, %v2869, %v2871
        %v2873 = vrot.slane %v2743, 1
        %v2874 = vrot.slane %v2744, 1
        %v2875 = vsel %vm1656, %v2873, %v2874
        %v2876 = vrot.slane %v2745, 1
        %v2877 = vsel %vm1656, %v2874, %v2876
        %v2878 = vrot.slane %v2746, 1
        %v2879 = vrot.slane %v2747, 1
        %v2880 = vsel %vm1656, %v2878, %v2879
        %v2881 = vrot.slane %v2748, 1
        %v2882 = vsel %vm1656, %v2879, %v2881
        %2883 = vrot.lane.b32.xlu0 %v2805, 4
        %v2884 = vpop.permute.xlu0 %2883
        %2885 = vrot.lane.b32.xlu0 %v2807, 4
        %v2886 = vpop.permute.xlu0 %2885
        %2887 = vrot.lane.b32.xlu0 %v2810, 4
        %v2888 = vpop.permute.xlu0 %2887
        %2889 = vrot.lane.b32.xlu0 %v2812, 4
        %v2890 = vpop.permute.xlu0 %2889
        %2891 = vrot.lane.b32.xlu0 %v2815, 4
        %v2892 = vpop.permute.xlu0 %2891
        %2893 = vrot.lane.b32.xlu0 %v2817, 4
        %v2894 = vpop.permute.xlu0 %2893
        %2895 = vrot.lane.b32.xlu0 %v2820, 4
        %v2896 = vpop.permute.xlu0 %2895
        %2897 = vrot.lane.b32.xlu0 %v2822, 4
        %v2898 = vpop.permute.xlu0 %2897
        %2899 = vrot.lane.b32.xlu0 %v2825, 4
        %v2900 = vpop.permute.xlu0 %2899
        %2901 = vrot.lane.b32.xlu0 %v2827, 4
        %v2902 = vpop.permute.xlu0 %2901
        %2903 = vrot.lane.b32.xlu0 %v2830, 4
        %v2904 = vpop.permute.xlu0 %2903
        %2905 = vrot.lane.b32.xlu0 %v2832, 4
        %v2906 = vpop.permute.xlu0 %2905
        %2907 = vrot.lane.b32.xlu0 %v2835, 4
        %v2908 = vpop.permute.xlu0 %2907
        %2909 = vrot.lane.b32.xlu0 %v2837, 4
        %v2910 = vpop.permute.xlu0 %2909
        %2911 = vrot.lane.b32.xlu0 %v2840, 4
        %v2912 = vpop.permute.xlu0 %2911
        %2913 = vrot.lane.b32.xlu0 %v2842, 4
        %v2914 = vpop.permute.xlu0 %2913
        %2915 = vrot.lane.b32.xlu0 %v2845, 4
        %v2916 = vpop.permute.xlu0 %2915
        %2917 = vrot.lane.b32.xlu0 %v2847, 4
        %v2918 = vpop.permute.xlu0 %2917
        %2919 = vrot.lane.b32.xlu0 %v2850, 4
        %v2920 = vpop.permute.xlu0 %2919
        %2921 = vrot.lane.b32.xlu0 %v2852, 4
        %v2922 = vpop.permute.xlu0 %2921
        %2923 = vrot.lane.b32.xlu0 %v2855, 4
        %v2924 = vpop.permute.xlu0 %2923
        %2925 = vrot.lane.b32.xlu0 %v2857, 4
        %v2926 = vpop.permute.xlu0 %2925
        %2927 = vrot.lane.b32.xlu0 %v2860, 4
        %v2928 = vpop.permute.xlu0 %2927
        %2929 = vrot.lane.b32.xlu0 %v2862, 4
        %v2930 = vpop.permute.xlu0 %2929
        %2931 = vrot.lane.b32.xlu0 %v2865, 4
        %v2932 = vpop.permute.xlu0 %2931
        %2933 = vrot.lane.b32.xlu0 %v2867, 4
        %v2934 = vpop.permute.xlu0 %2933
        %2935 = vrot.lane.b32.xlu0 %v2870, 4
        %v2936 = vpop.permute.xlu0 %2935
        %2937 = vrot.lane.b32.xlu0 %v2872, 4
        %v2938 = vpop.permute.xlu0 %2937
        %2939 = vrot.lane.b32.xlu0 %v2875, 4
        %v2940 = vpop.permute.xlu0 %2939
        %2941 = vrot.lane.b32.xlu0 %v2877, 4
        %v2942 = vpop.permute.xlu0 %2941
        %2943 = vrot.lane.b32.xlu0 %v2880, 4
        %v2944 = vpop.permute.xlu0 %2943
        %2945 = vrot.lane.b32.xlu0 %v2882, 4
        %v2946 = vpop.permute.xlu0 %2945
        %v2979 = vrot.slane %v2701, 2
        %v2980 = vrot.slane %v2702, 2
        %v2981 = vsel %vm1833, %v2979, %v2980
        %v2982 = vrot.slane %v2703, 2
        %v2983 = vsel %vm1833, %v2980, %v2982
        %v2984 = vrot.slane %v2704, 2
        %v2985 = vrot.slane %v2705, 2
        %v2986 = vsel %vm1833, %v2984, %v2985
        %v2987 = vrot.slane %v2706, 2
        %v2988 = vsel %vm1833, %v2985, %v2987
        %v2989 = vrot.slane %v2707, 2
        %v2990 = vrot.slane %v2708, 2
        %v2991 = vsel %vm1833, %v2989, %v2990
        %v2992 = vrot.slane %v2709, 2
        %v2993 = vsel %vm1833, %v2990, %v2992
        %v2994 = vrot.slane %v2710, 2
        %v2995 = vrot.slane %v2711, 2
        %v2996 = vsel %vm1833, %v2994, %v2995
        %v2997 = vrot.slane %v2712, 2
        %v2998 = vsel %vm1833, %v2995, %v2997
        %v2999 = vrot.slane %v2713, 2
        %v3000 = vrot.slane %v2714, 2
        %v3001 = vsel %vm1833, %v2999, %v3000
        %v3002 = vrot.slane %v2715, 2
        %v3003 = vsel %vm1833, %v3000, %v3002
        %v3004 = vrot.slane %v2716, 2
        %v3005 = vrot.slane %v2717, 2
        %v3006 = vsel %vm1833, %v3004, %v3005
        %v3007 = vrot.slane %v2718, 2
        %v3008 = vsel %vm1833, %v3005, %v3007
        %v3009 = vrot.slane %v2719, 2
        %v3010 = vrot.slane %v2720, 2
        %v3011 = vsel %vm1833, %v3009, %v3010
        %v3012 = vrot.slane %v2721, 2
        %v3013 = vsel %vm1833, %v3010, %v3012
        %v3014 = vrot.slane %v2722, 2
        %v3015 = vrot.slane %v2723, 2
        %v3016 = vsel %vm1833, %v3014, %v3015
        %v3017 = vrot.slane %v2724, 2
        %v3018 = vsel %vm1833, %v3015, %v3017
        %v3019 = vrot.slane %v2725, 2
        %v3020 = vrot.slane %v2726, 2
        %v3021 = vsel %vm1833, %v3019, %v3020
        %v3022 = vrot.slane %v2727, 2
        %v3023 = vsel %vm1833, %v3020, %v3022
        %v3024 = vrot.slane %v2728, 2
        %v3025 = vrot.slane %v2729, 2
        %v3026 = vsel %vm1833, %v3024, %v3025
        %v3027 = vrot.slane %v2730, 2
        %v3028 = vsel %vm1833, %v3025, %v3027
        %v3029 = vrot.slane %v2731, 2
        %v3030 = vrot.slane %v2732, 2
        %v3031 = vsel %vm1833, %v3029, %v3030
        %v3032 = vrot.slane %v2733, 2
        %v3033 = vsel %vm1833, %v3030, %v3032
        %v3034 = vrot.slane %v2734, 2
        %v3035 = vrot.slane %v2735, 2
        %v3036 = vsel %vm1833, %v3034, %v3035
        %v3037 = vrot.slane %v2736, 2
        %v3038 = vsel %vm1833, %v3035, %v3037
        %v3039 = vrot.slane %v2737, 2
        %v3040 = vrot.slane %v2738, 2
        %v3041 = vsel %vm1833, %v3039, %v3040
        %v3042 = vrot.slane %v2739, 2
        %v3043 = vsel %vm1833, %v3040, %v3042
        %v3044 = vrot.slane %v2740, 2
        %v3045 = vrot.slane %v2741, 2
        %v3046 = vsel %vm1833, %v3044, %v3045
        %v3047 = vrot.slane %v2742, 2
        %v3048 = vsel %vm1833, %v3045, %v3047
        %v3049 = vrot.slane %v2743, 2
        %v3050 = vrot.slane %v2744, 2
        %v3051 = vsel %vm1833, %v3049, %v3050
        %v3052 = vrot.slane %v2745, 2
        %v3053 = vsel %vm1833, %v3050, %v3052
        %v3054 = vrot.slane %v2746, 2
        %v3055 = vrot.slane %v2747, 2
        %v3056 = vsel %vm1833, %v3054, %v3055
        %v3057 = vrot.slane %v2748, 2
        %v3058 = vsel %vm1833, %v3055, %v3057
        %3059 = vrot.lane.b32.xlu0 %v2981, 8
        %v3060 = vpop.permute.xlu0 %3059
        %3061 = vrot.lane.b32.xlu0 %v2983, 8
        %v3062 = vpop.permute.xlu0 %3061
        %3063 = vrot.lane.b32.xlu0 %v2986, 8
        %v3064 = vpop.permute.xlu0 %3063
        %3065 = vrot.lane.b32.xlu0 %v2988, 8
        %v3066 = vpop.permute.xlu0 %3065
        %3067 = vrot.lane.b32.xlu0 %v2991, 8
        %v3068 = vpop.permute.xlu0 %3067
        %3069 = vrot.lane.b32.xlu0 %v2993, 8
        %v3070 = vpop.permute.xlu0 %3069
        %3071 = vrot.lane.b32.xlu0 %v2996, 8
        %v3072 = vpop.permute.xlu0 %3071
        %3073 = vrot.lane.b32.xlu0 %v2998, 8
        %v3074 = vpop.permute.xlu0 %3073
        %3075 = vrot.lane.b32.xlu0 %v3001, 8
        %v3076 = vpop.permute.xlu0 %3075
        %3077 = vrot.lane.b32.xlu0 %v3003, 8
        %v3078 = vpop.permute.xlu0 %3077
        %3079 = vrot.lane.b32.xlu0 %v3006, 8
        %v3080 = vpop.permute.xlu0 %3079
        %3081 = vrot.lane.b32.xlu0 %v3008, 8
        %v3082 = vpop.permute.xlu0 %3081
        %3083 = vrot.lane.b32.xlu0 %v3011, 8
        %v3084 = vpop.permute.xlu0 %3083
        %3085 = vrot.lane.b32.xlu0 %v3013, 8
        %v3086 = vpop.permute.xlu0 %3085
        %3087 = vrot.lane.b32.xlu0 %v3016, 8
        %v3088 = vpop.permute.xlu0 %3087
        %3089 = vrot.lane.b32.xlu0 %v3018, 8
        %v3090 = vpop.permute.xlu0 %3089
        %3091 = vrot.lane.b32.xlu0 %v3021, 8
        %v3092 = vpop.permute.xlu0 %3091
        %3093 = vrot.lane.b32.xlu0 %v3023, 8
        %v3094 = vpop.permute.xlu0 %3093
        %3095 = vrot.lane.b32.xlu0 %v3026, 8
        %v3096 = vpop.permute.xlu0 %3095
        %3097 = vrot.lane.b32.xlu0 %v3028, 8
        %v3098 = vpop.permute.xlu0 %3097
        %3099 = vrot.lane.b32.xlu0 %v3031, 8
        %v3100 = vpop.permute.xlu0 %3099
        %3101 = vrot.lane.b32.xlu0 %v3033, 8
        %v3102 = vpop.permute.xlu0 %3101
        %3103 = vrot.lane.b32.xlu0 %v3036, 8
        %v3104 = vpop.permute.xlu0 %3103
        %3105 = vrot.lane.b32.xlu0 %v3038, 8
        %v3106 = vpop.permute.xlu0 %3105
        %3107 = vrot.lane.b32.xlu0 %v3041, 8
        %v3108 = vpop.permute.xlu0 %3107
        %3109 = vrot.lane.b32.xlu0 %v3043, 8
        %v3110 = vpop.permute.xlu0 %3109
        %3111 = vrot.lane.b32.xlu0 %v3046, 8
        %v3112 = vpop.permute.xlu0 %3111
        %3113 = vrot.lane.b32.xlu0 %v3048, 8
        %v3114 = vpop.permute.xlu0 %3113
        %3115 = vrot.lane.b32.xlu0 %v3051, 8
        %v3116 = vpop.permute.xlu0 %3115
        %3117 = vrot.lane.b32.xlu0 %v3053, 8
        %v3118 = vpop.permute.xlu0 %3117
        %3119 = vrot.lane.b32.xlu0 %v3056, 8
        %v3120 = vpop.permute.xlu0 %3119
        %3121 = vrot.lane.b32.xlu0 %v3058, 8
        %v3122 = vpop.permute.xlu0 %3121
        %v3155 = vsel %vm1430, %v2701, %v2884
        %v3156 = vsel %vm1430, %v2702, %v2886
        %v3157 = vsel %vm1430, %v2704, %v2888
        %v3158 = vsel %vm1430, %v2705, %v2890
        %v3159 = vsel %vm1430, %v2707, %v2892
        %v3160 = vsel %vm1430, %v2708, %v2894
        %v3161 = vsel %vm1430, %v2710, %v2896
        %v3162 = vsel %vm1430, %v2711, %v2898
        %v3163 = vsel %vm1430, %v2713, %v2900
        %v3164 = vsel %vm1430, %v2714, %v2902
        %v3165 = vsel %vm1430, %v2716, %v2904
        %v3166 = vsel %vm1430, %v2717, %v2906
        %v3167 = vsel %vm1430, %v2719, %v2908
        %v3168 = vsel %vm1430, %v2720, %v2910
        %v3169 = vsel %vm1430, %v2722, %v2912
        %v3170 = vsel %vm1430, %v2723, %v2914
        %v3171 = vsel %vm1430, %v2725, %v2916
        %v3172 = vsel %vm1430, %v2726, %v2918
        %v3173 = vsel %vm1430, %v2728, %v2920
        %v3174 = vsel %vm1430, %v2729, %v2922
        %v3175 = vsel %vm1430, %v2731, %v2924
        %v3176 = vsel %vm1430, %v2732, %v2926
        %v3177 = vsel %vm1430, %v2734, %v2928
        %v3178 = vsel %vm1430, %v2735, %v2930
        %v3179 = vsel %vm1430, %v2737, %v2932
        %v3180 = vsel %vm1430, %v2738, %v2934
        %v3181 = vsel %vm1430, %v2740, %v2936
        %v3182 = vsel %vm1430, %v2741, %v2938
        %v3183 = vsel %vm1430, %v2743, %v2940
        %v3184 = vsel %vm1430, %v2744, %v2942
        %v3185 = vsel %vm1430, %v2746, %v2944
        %v3186 = vsel %vm1430, %v2747, %v2946
        %v3187 = vsel %vm2042, %v3155, %v3060
        %v3188 = vsel %vm2042, %v3156, %v3062
        %v3189 = vsel %vm2042, %v3157, %v3064
        %v3190 = vsel %vm2042, %v3158, %v3066
        %v3191 = vsel %vm2042, %v3159, %v3068
        %v3192 = vsel %vm2042, %v3160, %v3070
        %v3193 = vsel %vm2042, %v3161, %v3072
        %v3194 = vsel %vm2042, %v3162, %v3074
        %v3195 = vsel %vm2042, %v3163, %v3076
        %v3196 = vsel %vm2042, %v3164, %v3078
        %v3197 = vsel %vm2042, %v3165, %v3080
        %v3198 = vsel %vm2042, %v3166, %v3082
        %v3199 = vsel %vm2042, %v3167, %v3084
        %v3200 = vsel %vm2042, %v3168, %v3086
        %v3201 = vsel %vm2042, %v3169, %v3088
        %v3202 = vsel %vm2042, %v3170, %v3090
        %v3203 = vsel %vm2042, %v3171, %v3092
        %v3204 = vsel %vm2042, %v3172, %v3094
        %v3205 = vsel %vm2042, %v3173, %v3096
        %v3206 = vsel %vm2042, %v3174, %v3098
        %v3207 = vsel %vm2042, %v3175, %v3100
        %v3208 = vsel %vm2042, %v3176, %v3102
        %v3209 = vsel %vm2042, %v3177, %v3104
        %v3210 = vsel %vm2042, %v3178, %v3106
        %v3211 = vsel %vm2042, %v3179, %v3108
        %v3212 = vsel %vm2042, %v3180, %v3110
        %v3213 = vsel %vm2042, %v3181, %v3112
        %v3214 = vsel %vm2042, %v3182, %v3114
        %v3215 = vsel %vm2042, %v3183, %v3116
        %v3216 = vsel %vm2042, %v3184, %v3118
        %v3217 = vsel %vm2042, %v3185, %v3120
        %v3218 = vsel %vm2042, %v3186, %v3122
        %v3219 = vpack.c.bf16 %v3188, %v3187
        %v3220 = vpack.c.bf16 %v3190, %v3189
        %v3221 = vpack.c.bf16 %v3192, %v3191
        %v3222 = vpack.c.bf16 %v3194, %v3193
        %v3223 = vpack.c.bf16 %v3196, %v3195
        %v3224 = vpack.c.bf16 %v3198, %v3197
        %v3225 = vpack.c.bf16 %v3200, %v3199
        %v3226 = vpack.c.bf16 %v3202, %v3201
        %v3227 = vpack.c.bf16 %v3204, %v3203
        %v3228 = vpack.c.bf16 %v3206, %v3205
        %v3229 = vpack.c.bf16 %v3208, %v3207
        %v3230 = vpack.c.bf16 %v3210, %v3209
        %v3231 = vpack.c.bf16 %v3212, %v3211
        %v3232 = vpack.c.bf16 %v3214, %v3213
        %v3233 = vpack.c.bf16 %v3216, %v3215
        %v3234 = vpack.c.bf16 %v3218, %v3217
        %v3235 = vld [vmem:[%s3] sm:$0xf]
        %v3236 = vld [vmem:[%s3 + $0x4] sm:$0x3]
        %v3240 = vrot.slane %v2749, 1
        %v3241 = vrot.slane %v2750, 1
        %v3242 = vsel %vm1656, %v3240, %v3241
        %v3243 = vrot.slane %v2751, 1
        %v3244 = vsel %vm1656, %v3241, %v3243
        %3245 = vrot.lane.b32.xlu0 %v3242, 4
        %v3246 = vpop.permute.xlu0 %3245
        %3247 = vrot.lane.b32.xlu0 %v3244, 4
        %v3248 = vpop.permute.xlu0 %3247
        %v3251 = vrot.slane %v2749, 2
        %v3252 = vrot.slane %v2750, 2
        %v3253 = vsel %vm1833, %v3251, %v3252
        %v3254 = vrot.slane %v2751, 2
        %v3255 = vsel %vm1833, %v3252, %v3254
        %3256 = vrot.lane.b32.xlu0 %v3253, 8
        %v3257 = vpop.permute.xlu0 %3256
        %3258 = vrot.lane.b32.xlu0 %v3255, 8
        %v3259 = vpop.permute.xlu0 %3258
        %v3262 = vsel %vm1430, %v2749, %v3246
        %v3263 = vsel %vm1430, %v2750, %v3248
        %v3264 = vsel %vm2042, %v3262, %v3257
        %v3265 = vsel %vm2042, %v3263, %v3259
        %v3266 = vpack.c.bf16 %v3265, %v3264
        %s3267 = scalar_lea.vmem %s3, 8
        %v3268 = vld [vmem:[%s3267] sm:$0xf]
        %v3269 = vld [vmem:[%s3267 + $0x4] sm:$0x3]
        %v3272 = vunpack.c.l.b16 %v3268
        %v3273 = vunpack.c.l.b16 %v3269
        %v3274 = vpack.c.b16 %v3273, %v3272
        %v3276 = vsel %vm2131, %v3220, 0
        %v3279 = vsel %vm2131, %v3221, 0
        %v3282 = vsel %vm2131, %v3222, 0
        %v3285 = vsel %vm2131, %v3223, 0
        %v3288 = vsel %vm2131, %v3224, 0
        %v3291 = vsel %vm2131, %v3225, 0
        %v3294 = vsel %vm2131, %v3226, 0
        %v3297 = vsel %vm2131, %v3227, 0
        %v3300 = vsel %vm2131, %v3228, 0
        %v3303 = vsel %vm2131, %v3229, 0
        %v3306 = vsel %vm2131, %v3230, 0
        %v3309 = vsel %vm2131, %v3231, 0
        %v3312 = vsel %vm2131, %v3232, 0
        %v3315 = vsel %vm2131, %v3233, 0
        %v3318 = vsel %vm2131, %v3234, 0
        %v3321 = vsel %vm2131, %v3266, 0
        %v3324 = vsel %vm1833, %v3274, 0
        %3326 = vmatpush.bf16.msra.mxu0 0
        %3327 = vmatpush.bf16.msra.mxu0 0
        %3328 = vmatpush.bf16.msra.mxu0 0
        %3329 = vmatpush.bf16.msra.mxu0 0
        %3330 = vmatpush.bf16.msra.mxu0 0
        %3331 = vmatpush.bf16.msra.mxu0 0
        %3332 = vmatpush.bf16.msra.mxu0 0
        %3333 = vmatpush.bf16.msra.mxu0 %v3324
        %3334 = vmatmul.bf16.gmra.mxu0 %v3276
        %v3335 = vpop.f32.mrf.mxu0
        %v3336 = vadd.f32 0.0, %v3335
        %v3337 = vpop.f32.mrf.mxu0
        %v3338 = vadd.f32 0.0, %v3337
        %3339 = vmatmul.bf16.gmra.mxu0 %v3279
        %v3340 = vpop.f32.mrf.mxu0
        %v3341 = vadd.f32 0.0, %v3340
        %v3342 = vpop.f32.mrf.mxu0
        %v3343 = vadd.f32 0.0, %v3342
        %3344 = vmatmul.bf16.gmra.mxu0 %v3282
        %v3345 = vpop.f32.mrf.mxu0
        %v3346 = vadd.f32 0.0, %v3345
        %v3347 = vpop.f32.mrf.mxu0
        %v3348 = vadd.f32 0.0, %v3347
        %3349 = vmatmul.bf16.gmra.mxu0 %v3285
        %v3350 = vpop.f32.mrf.mxu0
        %v3351 = vadd.f32 0.0, %v3350
        %v3352 = vpop.f32.mrf.mxu0
        %v3353 = vadd.f32 0.0, %v3352
        %3354 = vmatmul.bf16.gmra.mxu0 %v3288
        %v3355 = vpop.f32.mrf.mxu0
        %v3356 = vadd.f32 0.0, %v3355
        %v3357 = vpop.f32.mrf.mxu0
        %v3358 = vadd.f32 0.0, %v3357
        %3359 = vmatmul.bf16.gmra.mxu0 %v3291
        %v3360 = vpop.f32.mrf.mxu0
        %v3361 = vadd.f32 0.0, %v3360
        %v3362 = vpop.f32.mrf.mxu0
        %v3363 = vadd.f32 0.0, %v3362
        %3364 = vmatmul.bf16.gmra.mxu0 %v3294
        %v3365 = vpop.f32.mrf.mxu0
        %v3366 = vadd.f32 0.0, %v3365
        %v3367 = vpop.f32.mrf.mxu0
        %v3368 = vadd.f32 0.0, %v3367
        %3369 = vmatmul.bf16.gmra.mxu0 %v3297
        %v3370 = vpop.f32.mrf.mxu0
        %v3371 = vadd.f32 0.0, %v3370
        %v3372 = vpop.f32.mrf.mxu0
        %v3373 = vadd.f32 0.0, %v3372
        %3374 = vmatmul.bf16.gmra.mxu0 %v3300
        %v3375 = vpop.f32.mrf.mxu0
        %v3376 = vadd.f32 0.0, %v3375
        %v3377 = vpop.f32.mrf.mxu0
        %v3378 = vadd.f32 0.0, %v3377
        %3379 = vmatmul.bf16.gmra.mxu0 %v3303
        %v3380 = vpop.f32.mrf.mxu0
        %v3381 = vadd.f32 0.0, %v3380
        %v3382 = vpop.f32.mrf.mxu0
        %v3383 = vadd.f32 0.0, %v3382
        %3384 = vmatmul.bf16.gmra.mxu0 %v3306
        %v3385 = vpop.f32.mrf.mxu0
        %v3386 = vadd.f32 0.0, %v3385
        %v3387 = vpop.f32.mrf.mxu0
        %v3388 = vadd.f32 0.0, %v3387
        %3389 = vmatmul.bf16.gmra.mxu0 %v3309
        %v3390 = vpop.f32.mrf.mxu0
        %v3391 = vadd.f32 0.0, %v3390
        %v3392 = vpop.f32.mrf.mxu0
        %v3393 = vadd.f32 0.0, %v3392
        %3394 = vmatmul.bf16.gmra.mxu0 %v3312
        %v3395 = vpop.f32.mrf.mxu0
        %v3396 = vadd.f32 0.0, %v3395
        %v3397 = vpop.f32.mrf.mxu0
        %v3398 = vadd.f32 0.0, %v3397
        %3399 = vmatmul.bf16.gmra.mxu0 %v3315
        %v3400 = vpop.f32.mrf.mxu0
        %v3401 = vadd.f32 0.0, %v3400
        %v3402 = vpop.f32.mrf.mxu0
        %v3403 = vadd.f32 0.0, %v3402
        %3404 = vmatmul.bf16.gmra.mxu0 %v3318
        %v3405 = vpop.f32.mrf.mxu0
        %v3406 = vadd.f32 0.0, %v3405
        %v3407 = vpop.f32.mrf.mxu0
        %v3408 = vadd.f32 0.0, %v3407
        %3409 = vmatmul.bf16.gmra.mxu0 %v3321
        %v3410 = vpop.f32.mrf.mxu0
        %v3411 = vadd.f32 0.0, %v3410
        %v3412 = vpop.f32.mrf.mxu0
        %v3413 = vadd.f32 0.0, %v3412
        %3414 = vdwg.mxu0
        %v3417 = vunpack.c.l.b16 %v3235
        %v3418 = vunpack.c.l.b16 %v3236
        %v3419 = vpack.c.b16 %v3418, %v3417
        %v3421 = vsel %vm2131, %v3219, 0
        %v3424 = vsel %vm1833, %v3419, 0
        %3426 = vmatpush.bf16.msra.mxu0 0
        %3427 = vmatpush.bf16.msra.mxu0 0
        %3428 = vmatpush.bf16.msra.mxu0 0
        %3429 = vmatpush.bf16.msra.mxu0 0
        %3430 = vmatpush.bf16.msra.mxu0 0
        %3431 = vmatpush.bf16.msra.mxu0 0
        %3432 = vmatpush.bf16.msra.mxu0 0
        %3433 = vmatpush.bf16.msra.mxu0 %v3424
        %3434 = vmatmul.bf16.gmra.mxu0 %v3421
        %v3435 = vpop.f32.mrf.mxu0
        %v3436 = vadd.f32 %v3336, %v3435
        %v3437 = vpop.f32.mrf.mxu0
        %v3438 = vadd.f32 %v3338, %v3437
        %3439 = vmatmul.bf16.gmra.mxu0 %v3276
        %v3440 = vpop.f32.mrf.mxu0
        %v3441 = vadd.f32 %v3341, %v3440
        %v3442 = vpop.f32.mrf.mxu0
        %v3443 = vadd.f32 %v3343, %v3442
        %3444 = vmatmul.bf16.gmra.mxu0 %v3279
        %v3445 = vpop.f32.mrf.mxu0
        %v3446 = vadd.f32 %v3346, %v3445
        %v3447 = vpop.f32.mrf.mxu0
        %v3448 = vadd.f32 %v3348, %v3447
        %3449 = vmatmul.bf16.gmra.mxu0 %v3282
        %v3450 = vpop.f32.mrf.mxu0
        %v3451 = vadd.f32 %v3351, %v3450
        %v3452 = vpop.f32.mrf.mxu0
        %v3453 = vadd.f32 %v3353, %v3452
        %3454 = vmatmul.bf16.gmra.mxu0 %v3285
        %v3455 = vpop.f32.mrf.mxu0
        %v3456 = vadd.f32 %v3356, %v3455
        %v3457 = vpop.f32.mrf.mxu0
        %v3458 = vadd.f32 %v3358, %v3457
        %3459 = vmatmul.bf16.gmra.mxu0 %v3288
        %v3460 = vpop.f32.mrf.mxu0
        %v3461 = vadd.f32 %v3361, %v3460
        %v3462 = vpop.f32.mrf.mxu0
        %v3463 = vadd.f32 %v3363, %v3462
        %3464 = vmatmul.bf16.gmra.mxu0 %v3291
        %v3465 = vpop.f32.mrf.mxu0
        %v3466 = vadd.f32 %v3366, %v3465
        %v3467 = vpop.f32.mrf.mxu0
        %v3468 = vadd.f32 %v3368, %v3467
        %3469 = vmatmul.bf16.gmra.mxu0 %v3294
        %v3470 = vpop.f32.mrf.mxu0
        %v3471 = vadd.f32 %v3371, %v3470
        %v3472 = vpop.f32.mrf.mxu0
        %v3473 = vadd.f32 %v3373, %v3472
        %3474 = vmatmul.bf16.gmra.mxu0 %v3297
        %v3475 = vpop.f32.mrf.mxu0
        %v3476 = vadd.f32 %v3376, %v3475
        %v3477 = vpop.f32.mrf.mxu0
        %v3478 = vadd.f32 %v3378, %v3477
        %3479 = vmatmul.bf16.gmra.mxu0 %v3300
        %v3480 = vpop.f32.mrf.mxu0
        %v3481 = vadd.f32 %v3381, %v3480
        %v3482 = vpop.f32.mrf.mxu0
        %v3483 = vadd.f32 %v3383, %v3482
        %3484 = vmatmul.bf16.gmra.mxu0 %v3303
        %v3485 = vpop.f32.mrf.mxu0
        %v3486 = vadd.f32 %v3386, %v3485
        %v3487 = vpop.f32.mrf.mxu0
        %v3488 = vadd.f32 %v3388, %v3487
        %3489 = vmatmul.bf16.gmra.mxu0 %v3306
        %v3490 = vpop.f32.mrf.mxu0
        %v3491 = vadd.f32 %v3391, %v3490
        %v3492 = vpop.f32.mrf.mxu0
        %v3493 = vadd.f32 %v3393, %v3492
        %3494 = vmatmul.bf16.gmra.mxu0 %v3309
        %v3495 = vpop.f32.mrf.mxu0
        %v3496 = vadd.f32 %v3396, %v3495
        %v3497 = vpop.f32.mrf.mxu0
        %v3498 = vadd.f32 %v3398, %v3497
        %3499 = vmatmul.bf16.gmra.mxu0 %v3312
        %v3500 = vpop.f32.mrf.mxu0
        %v3501 = vadd.f32 %v3401, %v3500
        %v3502 = vpop.f32.mrf.mxu0
        %v3503 = vadd.f32 %v3403, %v3502
        %3504 = vmatmul.bf16.gmra.mxu0 %v3315
        %v3505 = vpop.f32.mrf.mxu0
        %v3506 = vadd.f32 %v3406, %v3505
        %v3507 = vpop.f32.mrf.mxu0
        %v3508 = vadd.f32 %v3408, %v3507
        %3509 = vmatmul.bf16.gmra.mxu0 %v3318
        %v3510 = vpop.f32.mrf.mxu0
        %v3511 = vadd.f32 %v3411, %v3510
        %v3512 = vpop.f32.mrf.mxu0
        %v3513 = vadd.f32 %v3413, %v3512
        %3514 = vdwg.mxu0
        %v3518 = vrot.slane %v2752, 1
        %v3519 = vrot.slane %v2753, 1
        %v3520 = vsel %vm1656, %v3518, %v3519
        %v3521 = vrot.slane %v2754, 1
        %v3522 = vsel %vm1656, %v3519, %v3521
        %3523 = vrot.lane.b32.xlu0 %v3520, 4
        %v3524 = vpop.permute.xlu0 %3523
        %3525 = vrot.lane.b32.xlu0 %v3522, 4
        %v3526 = vpop.permute.xlu0 %3525
        %v3529 = vrot.slane %v2752, 2
        %v3530 = vrot.slane %v2753, 2
        %v3531 = vsel %vm1833, %v3529, %v3530
        %v3532 = vrot.slane %v2754, 2
        %v3533 = vsel %vm1833, %v3530, %v3532
        %3534 = vrot.lane.b32.xlu0 %v3531, 8
        %v3535 = vpop.permute.xlu0 %3534
        %3536 = vrot.lane.b32.xlu0 %v3533, 8
        %v3537 = vpop.permute.xlu0 %3536
        %v3540 = vsel %vm1430, %v2752, %v3524
        %v3541 = vsel %vm1430, %v2753, %v3526
        %v3542 = vsel %vm2042, %v3540, %v3535
        %v3543 = vsel %vm2042, %v3541, %v3537
        %v3544 = vpack.c.bf16 %v3543, %v3542
        %s3545 = scalar_lea.vmem %s3, 16
        %v3546 = vld [vmem:[%s3545] sm:$0xf]
        %v3547 = vld [vmem:[%s3545 + $0x4] sm:$0x3]
        %v3550 = vunpack.c.l.b16 %v3546
        %v3551 = vunpack.c.l.b16 %v3547
        %v3552 = vpack.c.b16 %v3551, %v3550
        %v3554 = vsel %vm2131, %v3544, 0
        %v3557 = vsel %vm1833, %v3552, 0
        %3559 = vmatpush.bf16.msra.mxu0 0
        %3560 = vmatpush.bf16.msra.mxu0 0
        %3561 = vmatpush.bf16.msra.mxu0 0
        %3562 = vmatpush.bf16.msra.mxu0 0
        %3563 = vmatpush.bf16.msra.mxu0 0
        %3564 = vmatpush.bf16.msra.mxu0 0
        %3565 = vmatpush.bf16.msra.mxu0 0
        %3566 = vmatpush.bf16.msra.mxu0 %v3557
        %3567 = vmatmul.bf16.gmra.mxu0 %v3279
        %v3568 = vpop.f32.mrf.mxu0
        %v3569 = vadd.f32 0.0, %v3568
        %v3570 = vpop.f32.mrf.mxu0
        %v3571 = vadd.f32 0.0, %v3570
        %3572 = vmatmul.bf16.gmra.mxu0 %v3282
        %v3573 = vpop.f32.mrf.mxu0
        %v3574 = vadd.f32 0.0, %v3573
        %v3575 = vpop.f32.mrf.mxu0
        %v3576 = vadd.f32 0.0, %v3575
        %3577 = vmatmul.bf16.gmra.mxu0 %v3285
        %v3578 = vpop.f32.mrf.mxu0
        %v3579 = vadd.f32 0.0, %v3578
        %v3580 = vpop.f32.mrf.mxu0
        %v3581 = vadd.f32 0.0, %v3580
        %3582 = vmatmul.bf16.gmra.mxu0 %v3288
        %v3583 = vpop.f32.mrf.mxu0
        %v3584 = vadd.f32 0.0, %v3583
        %v3585 = vpop.f32.mrf.mxu0
        %v3586 = vadd.f32 0.0, %v3585
        %3587 = vmatmul.bf16.gmra.mxu0 %v3291
        %v3588 = vpop.f32.mrf.mxu0
        %v3589 = vadd.f32 0.0, %v3588
        %v3590 = vpop.f32.mrf.mxu0
        %v3591 = vadd.f32 0.0, %v3590
        %3592 = vmatmul.bf16.gmra.mxu0 %v3294
        %v3593 = vpop.f32.mrf.mxu0
        %v3594 = vadd.f32 0.0, %v3593
        %v3595 = vpop.f32.mrf.mxu0
        %v3596 = vadd.f32 0.0, %v3595
        %3597 = vmatmul.bf16.gmra.mxu0 %v3297
        %v3598 = vpop.f32.mrf.mxu0
        %v3599 = vadd.f32 0.0, %v3598
        %v3600 = vpop.f32.mrf.mxu0
        %v3601 = vadd.f32 0.0, %v3600
        %3602 = vmatmul.bf16.gmra.mxu0 %v3300
        %v3603 = vpop.f32.mrf.mxu0
        %v3604 = vadd.f32 0.0, %v3603
        %v3605 = vpop.f32.mrf.mxu0
        %v3606 = vadd.f32 0.0, %v3605
        %3607 = vmatmul.bf16.gmra.mxu0 %v3303
        %v3608 = vpop.f32.mrf.mxu0
        %v3609 = vadd.f32 0.0, %v3608
        %v3610 = vpop.f32.mrf.mxu0
        %v3611 = vadd.f32 0.0, %v3610
        %3612 = vmatmul.bf16.gmra.mxu0 %v3306
        %v3613 = vpop.f32.mrf.mxu0
        %v3614 = vadd.f32 0.0, %v3613
        %v3615 = vpop.f32.mrf.mxu0
        %v3616 = vadd.f32 0.0, %v3615
        %3617 = vmatmul.bf16.gmra.mxu0 %v3309
        %v3618 = vpop.f32.mrf.mxu0
        %v3619 = vadd.f32 0.0, %v3618
        %v3620 = vpop.f32.mrf.mxu0
        %v3621 = vadd.f32 0.0, %v3620
        %3622 = vmatmul.bf16.gmra.mxu0 %v3312
        %v3623 = vpop.f32.mrf.mxu0
        %v3624 = vadd.f32 0.0, %v3623
        %v3625 = vpop.f32.mrf.mxu0
        %v3626 = vadd.f32 0.0, %v3625
        %3627 = vmatmul.bf16.gmra.mxu0 %v3315
        %v3628 = vpop.f32.mrf.mxu0
        %v3629 = vadd.f32 0.0, %v3628
        %v3630 = vpop.f32.mrf.mxu0
        %v3631 = vadd.f32 0.0, %v3630
        %3632 = vmatmul.bf16.gmra.mxu0 %v3318
        %v3633 = vpop.f32.mrf.mxu0
        %v3634 = vadd.f32 0.0, %v3633
        %v3635 = vpop.f32.mrf.mxu0
        %v3636 = vadd.f32 0.0, %v3635
        %3637 = vmatmul.bf16.gmra.mxu0 %v3321
        %v3638 = vpop.f32.mrf.mxu0
        %v3639 = vadd.f32 0.0, %v3638
        %v3640 = vpop.f32.mrf.mxu0
        %v3641 = vadd.f32 0.0, %v3640
        %3642 = vmatmul.bf16.gmra.mxu0 %v3554
        %v3643 = vpop.f32.mrf.mxu0
        %v3644 = vadd.f32 0.0, %v3643
        %v3645 = vpop.f32.mrf.mxu0
        %v3646 = vadd.f32 0.0, %v3645
        %3647 = vdwg.mxu0
        %v3648 = vadd.f32 %v3436, %v3569
        %v3649 = vadd.f32 %v3438, %v3571
        %v3650 = vadd.f32 %v3441, %v3574
        %v3651 = vadd.f32 %v3443, %v3576
        %v3652 = vadd.f32 %v3446, %v3579
        %v3653 = vadd.f32 %v3448, %v3581
        %v3654 = vadd.f32 %v3451, %v3584
        %v3655 = vadd.f32 %v3453, %v3586
        %v3656 = vadd.f32 %v3456, %v3589
        %v3657 = vadd.f32 %v3458, %v3591
        %v3658 = vadd.f32 %v3461, %v3594
        %v3659 = vadd.f32 %v3463, %v3596
        %v3660 = vadd.f32 %v3466, %v3599
        %v3661 = vadd.f32 %v3468, %v3601
        %v3662 = vadd.f32 %v3471, %v3604
        %v3663 = vadd.f32 %v3473, %v3606
        %v3664 = vadd.f32 %v3476, %v3609
        %v3665 = vadd.f32 %v3478, %v3611
        %v3666 = vadd.f32 %v3481, %v3614
        %v3667 = vadd.f32 %v3483, %v3616
        %v3668 = vadd.f32 %v3486, %v3619
        %v3669 = vadd.f32 %v3488, %v3621
        %v3670 = vadd.f32 %v3491, %v3624
        %v3671 = vadd.f32 %v3493, %v3626
        %v3672 = vadd.f32 %v3496, %v3629
        %v3673 = vadd.f32 %v3498, %v3631
        %v3674 = vadd.f32 %v3501, %v3634
        %v3675 = vadd.f32 %v3503, %v3636
        %v3676 = vadd.f32 %v3506, %v3639
        %v3677 = vadd.f32 %v3508, %v3641
        %v3678 = vadd.f32 %v3511, %v3644
        %v3679 = vadd.f32 %v3513, %v3646
        %v3680 = vld [vmem:[%s4] sm:$0x1]
        %v3682 = vperm.slane %v3680, 0
        %v3684 = vadd.f32 %v3648, %v3682
        %v3685 = vadd.f32 %v3649, %v3682
        %v3686 = vadd.f32 %v3650, %v3682
        %v3687 = vadd.f32 %v3651, %v3682
        %v3688 = vadd.f32 %v3652, %v3682
        %v3689 = vadd.f32 %v3653, %v3682
        %v3690 = vadd.f32 %v3654, %v3682
        %v3691 = vadd.f32 %v3655, %v3682
        %v3692 = vadd.f32 %v3656, %v3682
        %v3693 = vadd.f32 %v3657, %v3682
        %v3694 = vadd.f32 %v3658, %v3682
        %v3695 = vadd.f32 %v3659, %v3682
        %v3696 = vadd.f32 %v3660, %v3682
        %v3697 = vadd.f32 %v3661, %v3682
        %v3698 = vadd.f32 %v3662, %v3682
        %v3699 = vadd.f32 %v3663, %v3682
        %v3700 = vadd.f32 %v3664, %v3682
        %v3701 = vadd.f32 %v3665, %v3682
        %v3702 = vadd.f32 %v3666, %v3682
        %v3703 = vadd.f32 %v3667, %v3682
        %v3704 = vadd.f32 %v3668, %v3682
        %v3705 = vadd.f32 %v3669, %v3682
        %v3706 = vadd.f32 %v3670, %v3682
        %v3707 = vadd.f32 %v3671, %v3682
        %v3708 = vadd.f32 %v3672, %v3682
        %v3709 = vadd.f32 %v3673, %v3682
        %v3710 = vadd.f32 %v3674, %v3682
        %v3711 = vadd.f32 %v3675, %v3682
        %v3712 = vadd.f32 %v3676, %v3682
        %v3713 = vadd.f32 %v3677, %v3682
        %v3714 = vadd.f32 %v3678, %v3682
        %v3715 = vadd.f32 %v3679, %v3682
        %vm3716 = vcmp.gt.f32.partialorder %v3684, 0.0
        %vm3717 = vcmp.gt.f32.partialorder %v3685, 0.0
        %vm3718 = vcmp.gt.f32.partialorder %v3686, 0.0
        %vm3719 = vcmp.gt.f32.partialorder %v3687, 0.0
        %vm3720 = vcmp.gt.f32.partialorder %v3688, 0.0
        %vm3721 = vcmp.gt.f32.partialorder %v3689, 0.0
        %vm3722 = vcmp.gt.f32.partialorder %v3690, 0.0
        %vm3723 = vcmp.gt.f32.partialorder %v3691, 0.0
        %vm3724 = vcmp.gt.f32.partialorder %v3692, 0.0
        %vm3725 = vcmp.gt.f32.partialorder %v3693, 0.0
        %vm3726 = vcmp.gt.f32.partialorder %v3694, 0.0
        %vm3727 = vcmp.gt.f32.partialorder %v3695, 0.0
        %vm3728 = vcmp.gt.f32.partialorder %v3696, 0.0
        %vm3729 = vcmp.gt.f32.partialorder %v3697, 0.0
        %vm3730 = vcmp.gt.f32.partialorder %v3698, 0.0
        %vm3731 = vcmp.gt.f32.partialorder %v3699, 0.0
        %vm3732 = vcmp.gt.f32.partialorder %v3700, 0.0
        %vm3733 = vcmp.gt.f32.partialorder %v3701, 0.0
        %vm3734 = vcmp.gt.f32.partialorder %v3702, 0.0
        %vm3735 = vcmp.gt.f32.partialorder %v3703, 0.0
        %vm3736 = vcmp.gt.f32.partialorder %v3704, 0.0
        %vm3737 = vcmp.gt.f32.partialorder %v3705, 0.0
        %vm3738 = vcmp.gt.f32.partialorder %v3706, 0.0
        %vm3739 = vcmp.gt.f32.partialorder %v3707, 0.0
        %vm3740 = vcmp.gt.f32.partialorder %v3708, 0.0
        %vm3741 = vcmp.gt.f32.partialorder %v3709, 0.0
        %vm3742 = vcmp.gt.f32.partialorder %v3710, 0.0
        %vm3743 = vcmp.gt.f32.partialorder %v3711, 0.0
        %vm3744 = vcmp.gt.f32.partialorder %v3712, 0.0
        %vm3745 = vcmp.gt.f32.partialorder %v3713, 0.0
        %vm3746 = vcmp.gt.f32.partialorder %v3714, 0.0
        %vm3747 = vcmp.gt.f32.partialorder %v3715, 0.0
        %v3748 = vmul.f32 %v3684, 0.2
        %v3749 = vmul.f32 %v3685, 0.2
        %v3750 = vmul.f32 %v3686, 0.2
        %v3751 = vmul.f32 %v3687, 0.2
        %v3752 = vmul.f32 %v3688, 0.2
        %v3753 = vmul.f32 %v3689, 0.2
        %v3754 = vmul.f32 %v3690, 0.2
        %v3755 = vmul.f32 %v3691, 0.2
        %v3756 = vmul.f32 %v3692, 0.2
        %v3757 = vmul.f32 %v3693, 0.2
        %v3758 = vmul.f32 %v3694, 0.2
        %v3759 = vmul.f32 %v3695, 0.2
        %v3760 = vmul.f32 %v3696, 0.2
        %v3761 = vmul.f32 %v3697, 0.2
        %v3762 = vmul.f32 %v3698, 0.2
        %v3763 = vmul.f32 %v3699, 0.2
        %v3764 = vmul.f32 %v3700, 0.2
        %v3765 = vmul.f32 %v3701, 0.2
        %v3766 = vmul.f32 %v3702, 0.2
        %v3767 = vmul.f32 %v3703, 0.2
        %v3768 = vmul.f32 %v3704, 0.2
        %v3769 = vmul.f32 %v3705, 0.2
        %v3770 = vmul.f32 %v3706, 0.2
        %v3771 = vmul.f32 %v3707, 0.2
        %v3772 = vmul.f32 %v3708, 0.2
        %v3773 = vmul.f32 %v3709, 0.2
        %v3774 = vmul.f32 %v3710, 0.2
        %v3775 = vmul.f32 %v3711, 0.2
        %v3776 = vmul.f32 %v3712, 0.2
        %v3777 = vmul.f32 %v3713, 0.2
        %v3778 = vmul.f32 %v3714, 0.2
        %v3779 = vmul.f32 %v3715, 0.2
        %v3780 = vsel %vm3716, %v3684, %v3748
        %v3781 = vsel %vm3717, %v3685, %v3749
        %v3782 = vsel %vm3718, %v3686, %v3750
        %v3783 = vsel %vm3719, %v3687, %v3751
        %v3784 = vsel %vm3720, %v3688, %v3752
        %v3785 = vsel %vm3721, %v3689, %v3753
        %v3786 = vsel %vm3722, %v3690, %v3754
        %v3787 = vsel %vm3723, %v3691, %v3755
        %v3788 = vsel %vm3724, %v3692, %v3756
        %v3789 = vsel %vm3725, %v3693, %v3757
        %v3790 = vsel %vm3726, %v3694, %v3758
        %v3791 = vsel %vm3727, %v3695, %v3759
        %v3792 = vsel %vm3728, %v3696, %v3760
        %v3793 = vsel %vm3729, %v3697, %v3761
        %v3794 = vsel %vm3730, %v3698, %v3762
        %v3795 = vsel %vm3731, %v3699, %v3763
        %v3796 = vsel %vm3732, %v3700, %v3764
        %v3797 = vsel %vm3733, %v3701, %v3765
        %v3798 = vsel %vm3734, %v3702, %v3766
        %v3799 = vsel %vm3735, %v3703, %v3767
        %v3800 = vsel %vm3736, %v3704, %v3768
        %v3801 = vsel %vm3737, %v3705, %v3769
        %v3802 = vsel %vm3738, %v3706, %v3770
        %v3803 = vsel %vm3739, %v3707, %v3771
        %v3804 = vsel %vm3740, %v3708, %v3772
        %v3805 = vsel %vm3741, %v3709, %v3773
        %v3806 = vsel %vm3742, %v3710, %v3774
        %v3807 = vsel %vm3743, %v3711, %v3775
        %v3808 = vsel %vm3744, %v3712, %v3776
        %v3809 = vsel %vm3745, %v3713, %v3777
        %v3810 = vsel %vm3746, %v3714, %v3778
        %v3811 = vsel %vm3747, %v3715, %v3779
        %v3844 = vrot.slane %v3780, 2
        %v3845 = vrot.slane %v3780, 4
        %v3846 = vrot.slane %v3780, 6
        %v3847 = vrot.slane %v3781, 2
        %v3848 = vrot.slane %v3781, 4
        %v3849 = vrot.slane %v3781, 6
        %v3850 = vrot.slane %v3782, 2
        %v3851 = vrot.slane %v3782, 4
        %v3852 = vrot.slane %v3782, 6
        %v3853 = vrot.slane %v3783, 2
        %v3854 = vrot.slane %v3783, 4
        %v3855 = vrot.slane %v3783, 6
        %v3856 = vrot.slane %v3784, 2
        %v3857 = vrot.slane %v3784, 4
        %v3858 = vrot.slane %v3784, 6
        %v3859 = vrot.slane %v3785, 2
        %v3860 = vrot.slane %v3785, 4
        %v3861 = vrot.slane %v3785, 6
        %v3862 = vrot.slane %v3786, 2
        %v3863 = vrot.slane %v3786, 4
        %v3864 = vrot.slane %v3786, 6
        %v3865 = vrot.slane %v3787, 2
        %v3866 = vrot.slane %v3787, 4
        %v3867 = vrot.slane %v3787, 6
        %v3868 = vrot.slane %v3788, 2
        %v3869 = vrot.slane %v3788, 4
        %v3870 = vrot.slane %v3788, 6
        %v3871 = vrot.slane %v3789, 2
        %v3872 = vrot.slane %v3789, 4
        %v3873 = vrot.slane %v3789, 6
        %v3874 = vrot.slane %v3790, 2
        %v3875 = vrot.slane %v3790, 4
        %v3876 = vrot.slane %v3790, 6
        %v3877 = vrot.slane %v3791, 2
        %v3878 = vrot.slane %v3791, 4
        %v3879 = vrot.slane %v3791, 6
        %v3880 = vrot.slane %v3792, 2
        %v3881 = vrot.slane %v3792, 4
        %v3882 = vrot.slane %v3792, 6
        %v3883 = vrot.slane %v3793, 2
        %v3884 = vrot.slane %v3793, 4
        %v3885 = vrot.slane %v3793, 6
        %v3886 = vrot.slane %v3794, 2
        %v3887 = vrot.slane %v3794, 4
        %v3888 = vrot.slane %v3794, 6
        %v3889 = vrot.slane %v3795, 2
        %v3890 = vrot.slane %v3795, 4
        %v3891 = vrot.slane %v3795, 6
        %v3892 = vrot.slane %v3796, 2
        %v3893 = vrot.slane %v3796, 4
        %v3894 = vrot.slane %v3796, 6
        %v3895 = vrot.slane %v3797, 2
        %v3896 = vrot.slane %v3797, 4
        %v3897 = vrot.slane %v3797, 6
        %v3898 = vrot.slane %v3798, 2
        %v3899 = vrot.slane %v3798, 4
        %v3900 = vrot.slane %v3798, 6
        %v3901 = vrot.slane %v3799, 2
        %v3902 = vrot.slane %v3799, 4
        %v3903 = vrot.slane %v3799, 6
        %v3904 = vrot.slane %v3800, 2
        %v3905 = vrot.slane %v3800, 4
        %v3906 = vrot.slane %v3800, 6
        %v3907 = vrot.slane %v3801, 2
        %v3908 = vrot.slane %v3801, 4
        %v3909 = vrot.slane %v3801, 6
        %v3910 = vrot.slane %v3802, 2
        %v3911 = vrot.slane %v3802, 4
        %v3912 = vrot.slane %v3802, 6
        %v3913 = vrot.slane %v3803, 2
        %v3914 = vrot.slane %v3803, 4
        %v3915 = vrot.slane %v3803, 6
        %v3916 = vrot.slane %v3804, 2
        %v3917 = vrot.slane %v3804, 4
        %v3918 = vrot.slane %v3804, 6
        %v3919 = vrot.slane %v3805, 2
        %v3920 = vrot.slane %v3805, 4
        %v3921 = vrot.slane %v3805, 6
        %v3922 = vrot.slane %v3806, 2
        %v3923 = vrot.slane %v3806, 4
        %v3924 = vrot.slane %v3806, 6
        %v3925 = vrot.slane %v3807, 2
        %v3926 = vrot.slane %v3807, 4
        %v3927 = vrot.slane %v3807, 6
        %v3928 = vrot.slane %v3808, 2
        %v3929 = vrot.slane %v3808, 4
        %v3930 = vrot.slane %v3808, 6
        %v3931 = vrot.slane %v3809, 2
        %v3932 = vrot.slane %v3809, 4
        %v3933 = vrot.slane %v3809, 6
        %v3934 = vrot.slane %v3810, 2
        %v3935 = vrot.slane %v3810, 4
        %v3936 = vrot.slane %v3810, 6
        %v3937 = vrot.slane %v3811, 2
        %v3938 = vrot.slane %v3811, 4
        %v3939 = vrot.slane %v3811, 6
        %v4036 = vrot.slane %v3780, 7
        %v4037 = vrot.slane %v4036, 2
        %v4038 = vrot.slane %v3844, 7
        %v4039 = vrot.slane %v4038, 2
        %v4040 = vrot.slane %v3845, 7
        %v4041 = vrot.slane %v4040, 2
        %v4042 = vrot.slane %v3846, 7
        %v4043 = vrot.slane %v4042, 2
        %v4044 = vrot.slane %v3781, 7
        %v4045 = vrot.slane %v4044, 2
        %v4046 = vrot.slane %v3847, 7
        %v4047 = vrot.slane %v4046, 2
        %v4048 = vrot.slane %v3848, 7
        %v4049 = vrot.slane %v4048, 2
        %v4050 = vrot.slane %v3849, 7
        %v4051 = vrot.slane %v4050, 2
        %v4052 = vrot.slane %v3782, 7
        %v4053 = vrot.slane %v4052, 2
        %v4054 = vrot.slane %v3850, 7
        %v4055 = vrot.slane %v4054, 2
        %v4056 = vrot.slane %v3851, 7
        %v4057 = vrot.slane %v4056, 2
        %v4058 = vrot.slane %v3852, 7
        %v4059 = vrot.slane %v4058, 2
        %v4060 = vrot.slane %v3783, 7
        %v4061 = vrot.slane %v4060, 2
        %v4062 = vrot.slane %v3853, 7
        %v4063 = vrot.slane %v4062, 2
        %v4064 = vrot.slane %v3854, 7
        %v4065 = vrot.slane %v4064, 2
        %v4066 = vrot.slane %v3855, 7
        %v4067 = vrot.slane %v4066, 2
        %v4068 = vrot.slane %v3784, 7
        %v4069 = vrot.slane %v4068, 2
        %v4070 = vrot.slane %v3856, 7
        %v4071 = vrot.slane %v4070, 2
        %v4072 = vrot.slane %v3857, 7
        %v4073 = vrot.slane %v4072, 2
        %v4074 = vrot.slane %v3858, 7
        %v4075 = vrot.slane %v4074, 2
        %v4076 = vrot.slane %v3785, 7
        %v4077 = vrot.slane %v4076, 2
        %v4078 = vrot.slane %v3859, 7
        %v4079 = vrot.slane %v4078, 2
        %v4080 = vrot.slane %v3860, 7
        %v4081 = vrot.slane %v4080, 2
        %v4082 = vrot.slane %v3861, 7
        %v4083 = vrot.slane %v4082, 2
        %v4084 = vrot.slane %v3786, 7
        %v4085 = vrot.slane %v4084, 2
        %v4086 = vrot.slane %v3862, 7
        %v4087 = vrot.slane %v4086, 2
        %v4088 = vrot.slane %v3863, 7
        %v4089 = vrot.slane %v4088, 2
        %v4090 = vrot.slane %v3864, 7
        %v4091 = vrot.slane %v4090, 2
        %v4092 = vrot.slane %v3787, 7
        %v4093 = vrot.slane %v4092, 2
        %v4094 = vrot.slane %v3865, 7
        %v4095 = vrot.slane %v4094, 2
        %v4096 = vrot.slane %v3866, 7
        %v4097 = vrot.slane %v4096, 2
        %v4098 = vrot.slane %v3867, 7
        %v4099 = vrot.slane %v4098, 2
        %v4100 = vrot.slane %v3788, 7
        %v4101 = vrot.slane %v4100, 2
        %v4102 = vrot.slane %v3868, 7
        %v4103 = vrot.slane %v4102, 2
        %v4104 = vrot.slane %v3869, 7
        %v4105 = vrot.slane %v4104, 2
        %v4106 = vrot.slane %v3870, 7
        %v4107 = vrot.slane %v4106, 2
        %v4108 = vrot.slane %v3789, 7
        %v4109 = vrot.slane %v4108, 2
        %v4110 = vrot.slane %v3871, 7
        %v4111 = vrot.slane %v4110, 2
        %v4112 = vrot.slane %v3872, 7
        %v4113 = vrot.slane %v4112, 2
        %v4114 = vrot.slane %v3873, 7
        %v4115 = vrot.slane %v4114, 2
        %v4116 = vrot.slane %v3790, 7
        %v4117 = vrot.slane %v4116, 2
        %v4118 = vrot.slane %v3874, 7
        %v4119 = vrot.slane %v4118, 2
        %v4120 = vrot.slane %v3875, 7
        %v4121 = vrot.slane %v4120, 2
        %v4122 = vrot.slane %v3876, 7
        %v4123 = vrot.slane %v4122, 2
        %v4124 = vrot.slane %v3791, 7
        %v4125 = vrot.slane %v4124, 2
        %v4126 = vrot.slane %v3877, 7
        %v4127 = vrot.slane %v4126, 2
        %v4128 = vrot.slane %v3878, 7
        %v4129 = vrot.slane %v4128, 2
        %v4130 = vrot.slane %v3879, 7
        %v4131 = vrot.slane %v4130, 2
        %v4132 = vrot.slane %v3792, 7
        %v4133 = vrot.slane %v4132, 2
        %v4134 = vrot.slane %v3880, 7
        %v4135 = vrot.slane %v4134, 2
        %v4136 = vrot.slane %v3881, 7
        %v4137 = vrot.slane %v4136, 2
        %v4138 = vrot.slane %v3882, 7
        %v4139 = vrot.slane %v4138, 2
        %v4140 = vrot.slane %v3793, 7
        %v4141 = vrot.slane %v4140, 2
        %v4142 = vrot.slane %v3883, 7
        %v4143 = vrot.slane %v4142, 2
        %v4144 = vrot.slane %v3884, 7
        %v4145 = vrot.slane %v4144, 2
        %v4146 = vrot.slane %v3885, 7
        %v4147 = vrot.slane %v4146, 2
        %v4148 = vrot.slane %v3794, 7
        %v4149 = vrot.slane %v4148, 2
        %v4150 = vrot.slane %v3886, 7
        %v4151 = vrot.slane %v4150, 2
        %v4152 = vrot.slane %v3887, 7
        %v4153 = vrot.slane %v4152, 2
        %v4154 = vrot.slane %v3888, 7
        %v4155 = vrot.slane %v4154, 2
        %v4156 = vrot.slane %v3795, 7
        %v4157 = vrot.slane %v4156, 2
        %v4158 = vrot.slane %v3889, 7
        %v4159 = vrot.slane %v4158, 2
        %v4160 = vrot.slane %v3890, 7
        %v4161 = vrot.slane %v4160, 2
        %v4162 = vrot.slane %v3891, 7
        %v4163 = vrot.slane %v4162, 2
        %v4164 = vrot.slane %v3796, 7
        %v4165 = vrot.slane %v4164, 2
        %v4166 = vrot.slane %v3892, 7
        %v4167 = vrot.slane %v4166, 2
        %v4168 = vrot.slane %v3893, 7
        %v4169 = vrot.slane %v4168, 2
        %v4170 = vrot.slane %v3894, 7
        %v4171 = vrot.slane %v4170, 2
        %v4172 = vrot.slane %v3797, 7
        %v4173 = vrot.slane %v4172, 2
        %v4174 = vrot.slane %v3895, 7
        %v4175 = vrot.slane %v4174, 2
        %v4176 = vrot.slane %v3896, 7
        %v4177 = vrot.slane %v4176, 2
        %v4178 = vrot.slane %v3897, 7
        %v4179 = vrot.slane %v4178, 2
        %v4180 = vrot.slane %v3798, 7
        %v4181 = vrot.slane %v4180, 2
        %v4182 = vrot.slane %v3898, 7
        %v4183 = vrot.slane %v4182, 2
        %v4184 = vrot.slane %v3899, 7
        %v4185 = vrot.slane %v4184, 2
        %v4186 = vrot.slane %v3900, 7
        %v4187 = vrot.slane %v4186, 2
        %v4188 = vrot.slane %v3799, 7
        %v4189 = vrot.slane %v4188, 2
        %v4190 = vrot.slane %v3901, 7
        %v4191 = vrot.slane %v4190, 2
        %v4192 = vrot.slane %v3902, 7
        %v4193 = vrot.slane %v4192, 2
        %v4194 = vrot.slane %v3903, 7
        %v4195 = vrot.slane %v4194, 2
        %v4196 = vrot.slane %v3800, 7
        %v4197 = vrot.slane %v4196, 2
        %v4198 = vrot.slane %v3904, 7
        %v4199 = vrot.slane %v4198, 2
        %v4200 = vrot.slane %v3905, 7
        %v4201 = vrot.slane %v4200, 2
        %v4202 = vrot.slane %v3906, 7
        %v4203 = vrot.slane %v4202, 2
        %v4204 = vrot.slane %v3801, 7
        %v4205 = vrot.slane %v4204, 2
        %v4206 = vrot.slane %v3907, 7
        %v4207 = vrot.slane %v4206, 2
        %v4208 = vrot.slane %v3908, 7
        %v4209 = vrot.slane %v4208, 2
        %v4210 = vrot.slane %v3909, 7
        %v4211 = vrot.slane %v4210, 2
        %v4212 = vrot.slane %v3802, 7
        %v4213 = vrot.slane %v4212, 2
        %v4214 = vrot.slane %v3910, 7
        %v4215 = vrot.slane %v4214, 2
        %v4216 = vrot.slane %v3911, 7
        %v4217 = vrot.slane %v4216, 2
        %v4218 = vrot.slane %v3912, 7
        %v4219 = vrot.slane %v4218, 2
        %v4220 = vrot.slane %v3803, 7
        %v4221 = vrot.slane %v4220, 2
        %v4222 = vrot.slane %v3913, 7
        %v4223 = vrot.slane %v4222, 2
        %v4224 = vrot.slane %v3914, 7
        %v4225 = vrot.slane %v4224, 2
        %v4226 = vrot.slane %v3915, 7
        %v4227 = vrot.slane %v4226, 2
        %v4228 = vrot.slane %v3804, 7
        %v4229 = vrot.slane %v4228, 2
        %v4230 = vrot.slane %v3916, 7
        %v4231 = vrot.slane %v4230, 2
        %v4232 = vrot.slane %v3917, 7
        %v4233 = vrot.slane %v4232, 2
        %v4234 = vrot.slane %v3918, 7
        %v4235 = vrot.slane %v4234, 2
        %v4236 = vrot.slane %v3805, 7
        %v4237 = vrot.slane %v4236, 2
        %v4238 = vrot.slane %v3919, 7
        %v4239 = vrot.slane %v4238, 2
        %v4240 = vrot.slane %v3920, 7
        %v4241 = vrot.slane %v4240, 2
        %v4242 = vrot.slane %v3921, 7
        %v4243 = vrot.slane %v4242, 2
        %v4244 = vrot.slane %v3806, 7
        %v4245 = vrot.slane %v4244, 2
        %v4246 = vrot.slane %v3922, 7
        %v4247 = vrot.slane %v4246, 2
        %v4248 = vrot.slane %v3923, 7
        %v4249 = vrot.slane %v4248, 2
        %v4250 = vrot.slane %v3924, 7
        %v4251 = vrot.slane %v4250, 2
        %v4252 = vrot.slane %v3807, 7
        %v4253 = vrot.slane %v4252, 2
        %v4254 = vrot.slane %v3925, 7
        %v4255 = vrot.slane %v4254, 2
        %v4256 = vrot.slane %v3926, 7
        %v4257 = vrot.slane %v4256, 2
        %v4258 = vrot.slane %v3927, 7
        %v4259 = vrot.slane %v4258, 2
        %v4260 = vrot.slane %v3808, 7
        %v4261 = vrot.slane %v4260, 2
        %v4262 = vrot.slane %v3928, 7
        %v4263 = vrot.slane %v4262, 2
        %v4264 = vrot.slane %v3929, 7
        %v4265 = vrot.slane %v4264, 2
        %v4266 = vrot.slane %v3930, 7
        %v4267 = vrot.slane %v4266, 2
        %v4268 = vrot.slane %v3809, 7
        %v4269 = vrot.slane %v4268, 2
        %v4270 = vrot.slane %v3931, 7
        %v4271 = vrot.slane %v4270, 2
        %v4272 = vrot.slane %v3932, 7
        %v4273 = vrot.slane %v4272, 2
        %v4274 = vrot.slane %v3933, 7
        %v4275 = vrot.slane %v4274, 2
        %v4276 = vrot.slane %v3810, 7
        %v4277 = vrot.slane %v4276, 2
        %v4278 = vrot.slane %v3934, 7
        %v4279 = vrot.slane %v4278, 2
        %v4280 = vrot.slane %v3935, 7
        %v4281 = vrot.slane %v4280, 2
        %v4282 = vrot.slane %v3936, 7
        %v4283 = vrot.slane %v4282, 2
        %v4284 = vrot.slane %v3811, 7
        %v4285 = vrot.slane %v4284, 2
        %v4286 = vrot.slane %v3937, 7
        %v4287 = vrot.slane %v4286, 2
        %v4288 = vrot.slane %v3938, 7
        %v4289 = vrot.slane %v4288, 2
        %v4290 = vrot.slane %v3939, 7
        %v4291 = vrot.slane %v4290, 2
        %v4420 = vadd.f32 %v3780, %v4037
        %v4421 = vadd.f32 %v3844, %v4039
        %v4422 = vadd.f32 %v3845, %v4041
        %v4423 = vadd.f32 %v3846, %v4043
        %v4424 = vadd.f32 %v3781, %v4045
        %v4425 = vadd.f32 %v3847, %v4047
        %v4426 = vadd.f32 %v3848, %v4049
        %v4427 = vadd.f32 %v3849, %v4051
        %v4428 = vadd.f32 %v3782, %v4053
        %v4429 = vadd.f32 %v3850, %v4055
        %v4430 = vadd.f32 %v3851, %v4057
        %v4431 = vadd.f32 %v3852, %v4059
        %v4432 = vadd.f32 %v3783, %v4061
        %v4433 = vadd.f32 %v3853, %v4063
        %v4434 = vadd.f32 %v3854, %v4065
        %v4435 = vadd.f32 %v3855, %v4067
        %v4436 = vadd.f32 %v3784, %v4069
        %v4437 = vadd.f32 %v3856, %v4071
        %v4438 = vadd.f32 %v3857, %v4073
        %v4439 = vadd.f32 %v3858, %v4075
        %v4440 = vadd.f32 %v3785, %v4077
        %v4441 = vadd.f32 %v3859, %v4079
        %v4442 = vadd.f32 %v3860, %v4081
        %v4443 = vadd.f32 %v3861, %v4083
        %v4444 = vadd.f32 %v3786, %v4085
        %v4445 = vadd.f32 %v3862, %v4087
        %v4446 = vadd.f32 %v3863, %v4089
        %v4447 = vadd.f32 %v3864, %v4091
        %v4448 = vadd.f32 %v3787, %v4093
        %v4449 = vadd.f32 %v3865, %v4095
        %v4450 = vadd.f32 %v3866, %v4097
        %v4451 = vadd.f32 %v3867, %v4099
        %v4452 = vadd.f32 %v3788, %v4101
        %v4453 = vadd.f32 %v3868, %v4103
        %v4454 = vadd.f32 %v3869, %v4105
        %v4455 = vadd.f32 %v3870, %v4107
        %v4456 = vadd.f32 %v3789, %v4109
        %v4457 = vadd.f32 %v3871, %v4111
        %v4458 = vadd.f32 %v3872, %v4113
        %v4459 = vadd.f32 %v3873, %v4115
        %v4460 = vadd.f32 %v3790, %v4117
        %v4461 = vadd.f32 %v3874, %v4119
        %v4462 = vadd.f32 %v3875, %v4121
        %v4463 = vadd.f32 %v3876, %v4123
        %v4464 = vadd.f32 %v3791, %v4125
        %v4465 = vadd.f32 %v3877, %v4127
        %v4466 = vadd.f32 %v3878, %v4129
        %v4467 = vadd.f32 %v3879, %v4131
        %v4468 = vadd.f32 %v3792, %v4133
        %v4469 = vadd.f32 %v3880, %v4135
        %v4470 = vadd.f32 %v3881, %v4137
        %v4471 = vadd.f32 %v3882, %v4139
        %v4472 = vadd.f32 %v3793, %v4141
        %v4473 = vadd.f32 %v3883, %v4143
        %v4474 = vadd.f32 %v3884, %v4145
        %v4475 = vadd.f32 %v3885, %v4147
        %v4476 = vadd.f32 %v3794, %v4149
        %v4477 = vadd.f32 %v3886, %v4151
        %v4478 = vadd.f32 %v3887, %v4153
        %v4479 = vadd.f32 %v3888, %v4155
        %v4480 = vadd.f32 %v3795, %v4157
        %v4481 = vadd.f32 %v3889, %v4159
        %v4482 = vadd.f32 %v3890, %v4161
        %v4483 = vadd.f32 %v3891, %v4163
        %v4484 = vadd.f32 %v3796, %v4165
        %v4485 = vadd.f32 %v3892, %v4167
        %v4486 = vadd.f32 %v3893, %v4169
        %v4487 = vadd.f32 %v3894, %v4171
        %v4488 = vadd.f32 %v3797, %v4173
        %v4489 = vadd.f32 %v3895, %v4175
        %v4490 = vadd.f32 %v3896, %v4177
        %v4491 = vadd.f32 %v3897, %v4179
        %v4492 = vadd.f32 %v3798, %v4181
        %v4493 = vadd.f32 %v3898, %v4183
        %v4494 = vadd.f32 %v3899, %v4185
        %v4495 = vadd.f32 %v3900, %v4187
        %v4496 = vadd.f32 %v3799, %v4189
        %v4497 = vadd.f32 %v3901, %v4191
        %v4498 = vadd.f32 %v3902, %v4193
        %v4499 = vadd.f32 %v3903, %v4195
        %v4500 = vadd.f32 %v3800, %v4197
        %v4501 = vadd.f32 %v3904, %v4199
        %v4502 = vadd.f32 %v3905, %v4201
        %v4503 = vadd.f32 %v3906, %v4203
        %v4504 = vadd.f32 %v3801, %v4205
        %v4505 = vadd.f32 %v3907, %v4207
        %v4506 = vadd.f32 %v3908, %v4209
        %v4507 = vadd.f32 %v3909, %v4211
        %v4508 = vadd.f32 %v3802, %v4213
        %v4509 = vadd.f32 %v3910, %v4215
        %v4510 = vadd.f32 %v3911, %v4217
        %v4511 = vadd.f32 %v3912, %v4219
        %v4512 = vadd.f32 %v3803, %v4221
        %v4513 = vadd.f32 %v3913, %v4223
        %v4514 = vadd.f32 %v3914, %v4225
        %v4515 = vadd.f32 %v3915, %v4227
        %v4516 = vadd.f32 %v3804, %v4229
        %v4517 = vadd.f32 %v3916, %v4231
        %v4518 = vadd.f32 %v3917, %v4233
        %v4519 = vadd.f32 %v3918, %v4235
        %v4520 = vadd.f32 %v3805, %v4237
        %v4521 = vadd.f32 %v3919, %v4239
        %v4522 = vadd.f32 %v3920, %v4241
        %v4523 = vadd.f32 %v3921, %v4243
        %v4524 = vadd.f32 %v3806, %v4245
        %v4525 = vadd.f32 %v3922, %v4247
        %v4526 = vadd.f32 %v3923, %v4249
        %v4527 = vadd.f32 %v3924, %v4251
        %v4528 = vadd.f32 %v3807, %v4253
        %v4529 = vadd.f32 %v3925, %v4255
        %v4530 = vadd.f32 %v3926, %v4257
        %v4531 = vadd.f32 %v3927, %v4259
        %v4532 = vadd.f32 %v3808, %v4261
        %v4533 = vadd.f32 %v3928, %v4263
        %v4534 = vadd.f32 %v3929, %v4265
        %v4535 = vadd.f32 %v3930, %v4267
        %v4536 = vadd.f32 %v3809, %v4269
        %v4537 = vadd.f32 %v3931, %v4271
        %v4538 = vadd.f32 %v3932, %v4273
        %v4539 = vadd.f32 %v3933, %v4275
        %v4540 = vadd.f32 %v3810, %v4277
        %v4541 = vadd.f32 %v3934, %v4279
        %v4542 = vadd.f32 %v3935, %v4281
        %v4543 = vadd.f32 %v3936, %v4283
        %v4544 = vadd.f32 %v3811, %v4285
        %v4545 = vadd.f32 %v3937, %v4287
        %v4546 = vadd.f32 %v3938, %v4289
        %v4547 = vadd.f32 %v3939, %v4291
        %v4548 = vadd.f32 %v4420, %v4428
        %v4549 = vadd.f32 %v4421, %v4429
        %v4550 = vadd.f32 %v4422, %v4430
        %v4551 = vadd.f32 %v4423, %v4431
        %v4552 = vadd.f32 %v4424, %v4432
        %v4553 = vadd.f32 %v4425, %v4433
        %v4554 = vadd.f32 %v4426, %v4434
        %v4555 = vadd.f32 %v4427, %v4435
        %v4556 = vadd.f32 %v4436, %v4444
        %v4557 = vadd.f32 %v4437, %v4445
        %v4558 = vadd.f32 %v4438, %v4446
        %v4559 = vadd.f32 %v4439, %v4447
        %v4560 = vadd.f32 %v4440, %v4448
        %v4561 = vadd.f32 %v4441, %v4449
        %v4562 = vadd.f32 %v4442, %v4450
        %v4563 = vadd.f32 %v4443, %v4451
        %v4564 = vadd.f32 %v4452, %v4460
        %v4565 = vadd.f32 %v4453, %v4461
        %v4566 = vadd.f32 %v4454, %v4462
        %v4567 = vadd.f32 %v4455, %v4463
        %v4568 = vadd.f32 %v4456, %v4464
        %v4569 = vadd.f32 %v4457, %v4465
        %v4570 = vadd.f32 %v4458, %v4466
        %v4571 = vadd.f32 %v4459, %v4467
        %v4572 = vadd.f32 %v4468, %v4476
        %v4573 = vadd.f32 %v4469, %v4477
        %v4574 = vadd.f32 %v4470, %v4478
        %v4575 = vadd.f32 %v4471, %v4479
        %v4576 = vadd.f32 %v4472, %v4480
        %v4577 = vadd.f32 %v4473, %v4481
        %v4578 = vadd.f32 %v4474, %v4482
        %v4579 = vadd.f32 %v4475, %v4483
        %v4580 = vadd.f32 %v4484, %v4492
        %v4581 = vadd.f32 %v4485, %v4493
        %v4582 = vadd.f32 %v4486, %v4494
        %v4583 = vadd.f32 %v4487, %v4495
        %v4584 = vadd.f32 %v4488, %v4496
        %v4585 = vadd.f32 %v4489, %v4497
        %v4586 = vadd.f32 %v4490, %v4498
        %v4587 = vadd.f32 %v4491, %v4499
        %v4588 = vadd.f32 %v4500, %v4508
        %v4589 = vadd.f32 %v4501, %v4509
        %v4590 = vadd.f32 %v4502, %v4510
        %v4591 = vadd.f32 %v4503, %v4511
        %v4592 = vadd.f32 %v4504, %v4512
        %v4593 = vadd.f32 %v4505, %v4513
        %v4594 = vadd.f32 %v4506, %v4514
        %v4595 = vadd.f32 %v4507, %v4515
        %v4596 = vadd.f32 %v4516, %v4524
        %v4597 = vadd.f32 %v4517, %v4525
        %v4598 = vadd.f32 %v4518, %v4526
        %v4599 = vadd.f32 %v4519, %v4527
        %v4600 = vadd.f32 %v4520, %v4528
        %v4601 = vadd.f32 %v4521, %v4529
        %v4602 = vadd.f32 %v4522, %v4530
        %v4603 = vadd.f32 %v4523, %v4531
        %v4604 = vadd.f32 %v4532, %v4540
        %v4605 = vadd.f32 %v4533, %v4541
        %v4606 = vadd.f32 %v4534, %v4542
        %v4607 = vadd.f32 %v4535, %v4543
        %v4608 = vadd.f32 %v4536, %v4544
        %v4609 = vadd.f32 %v4537, %v4545
        %v4610 = vadd.f32 %v4538, %v4546
        %v4611 = vadd.f32 %v4539, %v4547
        %v4620 = vrot.slane %v1457, 2
        %v4621 = vrot.slane %v1457, 4
        %v4622 = vrot.slane %v1457, 6
        %v4623 = vrot.slane %v1459, 2
        %v4624 = vrot.slane %v1459, 4
        %v4625 = vrot.slane %v1459, 6
        %v4626 = vrot.slane %v1462, 2
        %v4627 = vrot.slane %v1462, 4
        %v4628 = vrot.slane %v1462, 6
        %v4629 = vrot.slane %v1464, 2
        %v4630 = vrot.slane %v1464, 4
        %v4631 = vrot.slane %v1464, 6
        %v4632 = vrot.slane %v1467, 2
        %v4633 = vrot.slane %v1467, 4
        %v4634 = vrot.slane %v1467, 6
        %v4635 = vrot.slane %v1469, 2
        %v4636 = vrot.slane %v1469, 4
        %v4637 = vrot.slane %v1469, 6
        %v4638 = vrot.slane %v1472, 2
        %v4639 = vrot.slane %v1472, 4
        %v4640 = vrot.slane %v1472, 6
        %v4641 = vrot.slane %v1474, 2
        %v4642 = vrot.slane %v1474, 4
        %v4643 = vrot.slane %v1474, 6
        %v4644 = vrot.slane %v1457, 1
        %v4645 = vrot.slane %v4620, 1
        %v4646 = vrot.slane %v4621, 1
        %v4647 = vrot.slane %v4622, 1
        %v4648 = vrot.slane %v1459, 1
        %v4649 = vrot.slane %v4623, 1
        %v4650 = vrot.slane %v4624, 1
        %v4651 = vrot.slane %v4625, 1
        %v4652 = vrot.slane %v1462, 1
        %v4653 = vrot.slane %v4626, 1
        %v4654 = vrot.slane %v4627, 1
        %v4655 = vrot.slane %v4628, 1
        %v4656 = vrot.slane %v1464, 1
        %v4657 = vrot.slane %v4629, 1
        %v4658 = vrot.slane %v4630, 1
        %v4659 = vrot.slane %v4631, 1
        %v4660 = vrot.slane %v1467, 1
        %v4661 = vrot.slane %v4632, 1
        %v4662 = vrot.slane %v4633, 1
        %v4663 = vrot.slane %v4634, 1
        %v4664 = vrot.slane %v1469, 1
        %v4665 = vrot.slane %v4635, 1
        %v4666 = vrot.slane %v4636, 1
        %v4667 = vrot.slane %v4637, 1
        %v4668 = vrot.slane %v1472, 1
        %v4669 = vrot.slane %v4638, 1
        %v4670 = vrot.slane %v4639, 1
        %v4671 = vrot.slane %v4640, 1
        %v4672 = vrot.slane %v1474, 1
        %v4673 = vrot.slane %v4641, 1
        %v4674 = vrot.slane %v4642, 1
        %v4675 = vrot.slane %v4643, 1
        %v4740 = vadd.f32 %v4548, %v1457
        %v4741 = vadd.f32 %v4549, %v4644
        %v4742 = vadd.f32 %v4550, %v4620
        %v4743 = vadd.f32 %v4551, %v4645
        %v4744 = vadd.f32 %v4552, %v4621
        %v4745 = vadd.f32 %v4553, %v4646
        %v4746 = vadd.f32 %v4554, %v4622
        %v4747 = vadd.f32 %v4555, %v4647
        %v4748 = vadd.f32 %v4556, %v1459
        %v4749 = vadd.f32 %v4557, %v4648
        %v4750 = vadd.f32 %v4558, %v4623
        %v4751 = vadd.f32 %v4559, %v4649
        %v4752 = vadd.f32 %v4560, %v4624
        %v4753 = vadd.f32 %v4561, %v4650
        %v4754 = vadd.f32 %v4562, %v4625
        %v4755 = vadd.f32 %v4563, %v4651
        %v4756 = vadd.f32 %v4564, %v1462
        %v4757 = vadd.f32 %v4565, %v4652
        %v4758 = vadd.f32 %v4566, %v4626
        %v4759 = vadd.f32 %v4567, %v4653
        %v4760 = vadd.f32 %v4568, %v4627
        %v4761 = vadd.f32 %v4569, %v4654
        %v4762 = vadd.f32 %v4570, %v4628
        %v4763 = vadd.f32 %v4571, %v4655
        %v4764 = vadd.f32 %v4572, %v1464
        %v4765 = vadd.f32 %v4573, %v4656
        %v4766 = vadd.f32 %v4574, %v4629
        %v4767 = vadd.f32 %v4575, %v4657
        %v4768 = vadd.f32 %v4576, %v4630
        %v4769 = vadd.f32 %v4577, %v4658
        %v4770 = vadd.f32 %v4578, %v4631
        %v4771 = vadd.f32 %v4579, %v4659
        %v4772 = vadd.f32 %v4580, %v1467
        %v4773 = vadd.f32 %v4581, %v4660
        %v4774 = vadd.f32 %v4582, %v4632
        %v4775 = vadd.f32 %v4583, %v4661
        %v4776 = vadd.f32 %v4584, %v4633
        %v4777 = vadd.f32 %v4585, %v4662
        %v4778 = vadd.f32 %v4586, %v4634
        %v4779 = vadd.f32 %v4587, %v4663
        %v4780 = vadd.f32 %v4588, %v1469
        %v4781 = vadd.f32 %v4589, %v4664
        %v4782 = vadd.f32 %v4590, %v4635
        %v4783 = vadd.f32 %v4591, %v4665
        %v4784 = vadd.f32 %v4592, %v4636
        %v4785 = vadd.f32 %v4593, %v4666
        %v4786 = vadd.f32 %v4594, %v4637
        %v4787 = vadd.f32 %v4595, %v4667
        %v4788 = vadd.f32 %v4596, %v1472
        %v4789 = vadd.f32 %v4597, %v4668
        %v4790 = vadd.f32 %v4598, %v4638
        %v4791 = vadd.f32 %v4599, %v4669
        %v4792 = vadd.f32 %v4600, %v4639
        %v4793 = vadd.f32 %v4601, %v4670
        %v4794 = vadd.f32 %v4602, %v4640
        %v4795 = vadd.f32 %v4603, %v4671
        %v4796 = vadd.f32 %v4604, %v1474
        %v4797 = vadd.f32 %v4605, %v4672
        %v4798 = vadd.f32 %v4606, %v4641
        %v4799 = vadd.f32 %v4607, %v4673
        %v4800 = vadd.f32 %v4608, %v4642
        %v4801 = vadd.f32 %v4609, %v4674
        %v4802 = vadd.f32 %v4610, %v4643
        %v4803 = vadd.f32 %v4611, %v4675
        %v4868 = vperm.slane %v4740, 0
        %v4869 = vperm.slane %v4741, 0
        %v4870 = vperm.slane %v4742, 0
        %v4871 = vperm.slane %v4743, 0
        %v4872 = vperm.slane %v4744, 0
        %v4873 = vperm.slane %v4745, 0
        %v4874 = vperm.slane %v4746, 0
        %v4875 = vperm.slane %v4747, 0
        %v4876 = vperm.slane %v4748, 0
        %v4877 = vperm.slane %v4749, 0
        %v4878 = vperm.slane %v4750, 0
        %v4879 = vperm.slane %v4751, 0
        %v4880 = vperm.slane %v4752, 0
        %v4881 = vperm.slane %v4753, 0
        %v4882 = vperm.slane %v4754, 0
        %v4883 = vperm.slane %v4755, 0
        %v4884 = vperm.slane %v4756, 0
        %v4885 = vperm.slane %v4757, 0
        %v4886 = vperm.slane %v4758, 0
        %v4887 = vperm.slane %v4759, 0
        %v4888 = vperm.slane %v4760, 0
        %v4889 = vperm.slane %v4761, 0
        %v4890 = vperm.slane %v4762, 0
        %v4891 = vperm.slane %v4763, 0
        %v4892 = vperm.slane %v4764, 0
        %v4893 = vperm.slane %v4765, 0
        %v4894 = vperm.slane %v4766, 0
        %v4895 = vperm.slane %v4767, 0
        %v4896 = vperm.slane %v4768, 0
        %v4897 = vperm.slane %v4769, 0
        %v4898 = vperm.slane %v4770, 0
        %v4899 = vperm.slane %v4771, 0
        %v4900 = vperm.slane %v4772, 0
        %v4901 = vperm.slane %v4773, 0
        %v4902 = vperm.slane %v4774, 0
        %v4903 = vperm.slane %v4775, 0
        %v4904 = vperm.slane %v4776, 0
        %v4905 = vperm.slane %v4777, 0
        %v4906 = vperm.slane %v4778, 0
        %v4907 = vperm.slane %v4779, 0
        %v4908 = vperm.slane %v4780, 0
        %v4909 = vperm.slane %v4781, 0
        %v4910 = vperm.slane %v4782, 0
        %v4911 = vperm.slane %v4783, 0
        %v4912 = vperm.slane %v4784, 0
        %v4913 = vperm.slane %v4785, 0
        %v4914 = vperm.slane %v4786, 0
        %v4915 = vperm.slane %v4787, 0
        %v4916 = vperm.slane %v4788, 0
        %v4917 = vperm.slane %v4789, 0
        %v4918 = vperm.slane %v4790, 0
        %v4919 = vperm.slane %v4791, 0
        %v4920 = vperm.slane %v4792, 0
        %v4921 = vperm.slane %v4793, 0
        %v4922 = vperm.slane %v4794, 0
        %v4923 = vperm.slane %v4795, 0
        %v4924 = vperm.slane %v4796, 0
        %v4925 = vperm.slane %v4797, 0
        %v4926 = vperm.slane %v4798, 0
        %v4927 = vperm.slane %v4799, 0
        %v4928 = vperm.slane %v4800, 0
        %v4929 = vperm.slane %v4801, 0
        %v4930 = vperm.slane %v4802, 0
        %v4931 = vperm.slane %v4803, 0
        %v4932 = vsel %vm1308, %v4869, %v4868
        %v4933 = vsel %vm1311, %v4870, %v4932
        %v4934 = vsel %vm1314, %v4871, %v4933
        %v4935 = vsel %vm1317, %v4872, %v4934
        %v4936 = vsel %vm1320, %v4873, %v4935
        %v4937 = vsel %vm1323, %v4874, %v4936
        %v4938 = vsel %vm1326, %v4875, %v4937
        %v4939 = vsel %vm1308, %v4877, %v4876
        %v4940 = vsel %vm1311, %v4878, %v4939
        %v4941 = vsel %vm1314, %v4879, %v4940
        %v4942 = vsel %vm1317, %v4880, %v4941
        %v4943 = vsel %vm1320, %v4881, %v4942
        %v4944 = vsel %vm1323, %v4882, %v4943
        %v4945 = vsel %vm1326, %v4883, %v4944
        %v4946 = vsel %vm1308, %v4885, %v4884
        %v4947 = vsel %vm1311, %v4886, %v4946
        %v4948 = vsel %vm1314, %v4887, %v4947
        %v4949 = vsel %vm1317, %v4888, %v4948
        %v4950 = vsel %vm1320, %v4889, %v4949
        %v4951 = vsel %vm1323, %v4890, %v4950
        %v4952 = vsel %vm1326, %v4891, %v4951
        %v4953 = vsel %vm1308, %v4893, %v4892
        %v4954 = vsel %vm1311, %v4894, %v4953
        %v4955 = vsel %vm1314, %v4895, %v4954
        %v4956 = vsel %vm1317, %v4896, %v4955
        %v4957 = vsel %vm1320, %v4897, %v4956
        %v4958 = vsel %vm1323, %v4898, %v4957
        %v4959 = vsel %vm1326, %v4899, %v4958
        %v4960 = vsel %vm1308, %v4901, %v4900
        %v4961 = vsel %vm1311, %v4902, %v4960
        %v4962 = vsel %vm1314, %v4903, %v4961
        %v4963 = vsel %vm1317, %v4904, %v4962
        %v4964 = vsel %vm1320, %v4905, %v4963
        %v4965 = vsel %vm1323, %v4906, %v4964
        %v4966 = vsel %vm1326, %v4907, %v4965
        %v4967 = vsel %vm1308, %v4909, %v4908
        %v4968 = vsel %vm1311, %v4910, %v4967
        %v4969 = vsel %vm1314, %v4911, %v4968
        %v4970 = vsel %vm1317, %v4912, %v4969
        %v4971 = vsel %vm1320, %v4913, %v4970
        %v4972 = vsel %vm1323, %v4914, %v4971
        %v4973 = vsel %vm1326, %v4915, %v4972
        %v4974 = vsel %vm1308, %v4917, %v4916
        %v4975 = vsel %vm1311, %v4918, %v4974
        %v4976 = vsel %vm1314, %v4919, %v4975
        %v4977 = vsel %vm1317, %v4920, %v4976
        %v4978 = vsel %vm1320, %v4921, %v4977
        %v4979 = vsel %vm1323, %v4922, %v4978
        %v4980 = vsel %vm1326, %v4923, %v4979
        %v4981 = vsel %vm1308, %v4925, %v4924
        %v4982 = vsel %vm1311, %v4926, %v4981
        %v4983 = vsel %vm1314, %v4927, %v4982
        %v4984 = vsel %vm1317, %v4928, %v4983
        %v4985 = vsel %vm1320, %v4929, %v4984
        %v4986 = vsel %vm1323, %v4930, %v4985
        %v4987 = vsel %vm1326, %v4931, %v4986
        %4996 = vst.msk [vmem:[%s271] sm:$0xff] %vm2042, %v4938
        %4997 = vst.msk [vmem:[%s271 + $0x8] sm:$0xff] %vm2042, %v4945
        %4998 = vst.msk [vmem:[%s271 + $0x10] sm:$0xff] %vm2042, %v4952
        %4999 = vst.msk [vmem:[%s271 + $0x18] sm:$0xff] %vm2042, %v4959
        %5000 = vst.msk [vmem:[%s271 + $0x20] sm:$0xff] %vm2042, %v4966
        %5001 = vst.msk [vmem:[%s271 + $0x28] sm:$0xff] %vm2042, %v4973
        %5002 = vst.msk [vmem:[%s271 + $0x30] sm:$0xff] %vm2042, %v4980
        %5003 = vst.msk [vmem:[%s271 + $0x38] sm:$0xff] %vm2042, %v4987
        %s5004 = sand.u32 %s181, 1
        %s5005 = scalar_lea.sflag [#allocation4], %s5004
        %s5006 = sand.u32 %s181, 1
        %s5007 = smul.addr %s5006, 64
        %s5008 = scalar_lea.vmem [#allocation3], %s5007
        // Predicated region
        $region49: #{tpu_custom_call.1} parent=47 // pred_check
          %p5009 = pneg %p191
        $region50: #{tpu_custom_call.1} parent=47 // pred_check_branch
          %5011 = sbr.rel (%p5009) target = $region52
        $region51: #{tpu_custom_call.1} parent=47 // pred_region
          %5013 = vsyncadd %s5005, 0
          %s5014 = smul.addr %s21, 8
          %s5015 = smul.addr %s5014, 8
          %s5016 = scalar_lea.hbm %s7, %s5015
          %s5017 = sshll.u32 %s5008, 4
          %s5018 = int_to_ptr.vmem [resolvable:$true] %s5017
          %s5019 = sshll.u32 %s5016, 4
          %s5020 = int_to_ptr.hbm [resolvable:$true] %s5019
          %5025 = dma.vmem_to_hbm [thread:$0]  %s5018, 1024, %s5020, %s5005, 128, 128, 8
        $region52: #{tpu_custom_call.1} parent=47 // pred_fallthru
          _
      $region48: #{tpu_custom_call.1} parent=5 // pred_fallthru
        _
      %p5026 = scmp.le.s32.totalorder 2, %s16
      // Predicated region
      $region53: #{tpu_custom_call.1} parent=5 // pred_check
        %p5027 = pneg %p5026
      $region54: #{tpu_custom_call.1} parent=5 // pred_check_branch
        %5029 = sbr.rel (%p5027) target = $region56
      $region55: #{tpu_custom_call.1} parent=5 // pred_region
        %s5030 = ssub.s32 %s16, 2
        // Predicated region
        $region57: #{tpu_custom_call.1} parent=55 // pred_check
          %p5031 = pneg %p197
        $region58: #{tpu_custom_call.1} parent=55 // pred_check_branch
          %5033 = sbr.rel (%p5031) target = $region60
        $region59: #{tpu_custom_call.1} parent=55 // pred_region
          %s5034 = sand.u32 %s182, 1
          %s5035 = scalar_lea.sflag [#allocation4], %s5034
          %s5036 = sand.u32 %s182, 1
          %s5037 = smul.addr %s5036, 64
          %s5038 = scalar_lea.vmem [#allocation3], %s5037
          %5040 = dma.done %s5035, 1024
        $region60: #{tpu_custom_call.1} parent=55 // pred_fallthru
          _
      $region56: #{tpu_custom_call.1} parent=5 // pred_fallthru
        _
    $region6: #{tpu_custom_call.1} parent=1 // loop_footer
      %s20 = sadd.s32 1, %s16
    $region7: #{tpu_custom_call.1} parent=1 // loop_footer_branch
      %15 = sbr.rel target = $region3
    $region8: #{tpu_custom_call.1} parent=1 // loop_exit
      _
    %5041 = vsyncpa [#allocation4], 1
    %s5042 = scalar_lea.sflag [#allocation4], 1
    %5043 = vsyncpa %s5042, 1

</llo_original>
